<compile_context>
chip_gen: v5e
topology: v5e:2x2
jax: 0.10.0
libtpu: 0.0.40
codegen_flags: <defaults>
</compile_context>

<pallas_src>
import jax
import jax.numpy as jnp
from jax.experimental import pallas as pl
from jax.experimental.pallas import tpu as pltpu


def _leaky_relu(x, slope=0.2):
    return jnp.where(x >= 0, x, slope * x)


def _reflect_pad_hw(x):
    """ReflectionPad2d(1) on (bb, H, W, C): pad rows then cols (corners fall out)."""
    H, W = x.shape[1], x.shape[2]
    x = jnp.concatenate([x[:, 1:2], x, x[:, H - 2:H - 1]], axis=1)
    x = jnp.concatenate([x[:, :, 1:2], x, x[:, :, W - 2:W - 1]], axis=2)
    return x


def _conv3x3_reflect(x, w, b):
    """Reflect-pad-1 3x3 conv as a single im2col matmul.

    x: (bb, H, W, C) f32
    w: (9*C, C) bf16, rows ordered (dy, dx, cin) to match the patch layout below
    b: (1, C) f32
    returns (bb, H, W, C) f32
    """
    bb, H, W, C = x.shape
    xp = _reflect_pad_hw(x)                                  # (bb, H+2, W+2, C)
    taps = [xp[:, dy:dy + H, dx:dx + W, :]
            for dy in range(3) for dx in range(3)]
    patches = jnp.concatenate(taps, axis=-1)                 # (bb, H, W, 9C)
    patches = patches.reshape(bb * H * W, 9 * C).astype(jnp.bfloat16)
    h = jnp.dot(patches, w, preferred_element_type=jnp.float32)
    return h.reshape(bb, H, W, C) + b.reshape(1, 1, 1, C)


def rbse_kernel(x_ref, w1_ref, b1_ref, w2_ref, b2_ref,
                fc1w_ref, fc1b_ref, fc2w_ref, fc2b_ref,
                out_ref, act_ref):
    l = pl.program_id(1)
    n_layer = pl.num_programs(1)

    # Load the input into the resident VMEM activation on the first layer only.
    @pl.when(l == 0)
    def _():
        act_ref[...] = x_ref[...]

    x = act_ref[...]                                         # (bb, H, W, C) f32
    bb, H, W, C = x.shape

    # convB: reflect conv -> LeakyReLU(0.2) -> reflect conv
    h = _leaky_relu(_conv3x3_reflect(x, w1_ref[0], b1_ref[0]))
    h = _conv3x3_reflect(h, w2_ref[0], b2_ref[0])

    # SE: global avg pool -> Linear -> LeakyReLU(0.2) -> Linear -> Sigmoid -> scale
    y = jnp.sum(h, axis=(1, 2)) * (1.0 / (H * W))            # (bb, C)
    y = _leaky_relu(
        jnp.dot(y, fc1w_ref[0], preferred_element_type=jnp.float32) + fc1b_ref[0])
    y = jax.nn.sigmoid(
        jnp.dot(y, fc2w_ref[0], preferred_element_type=jnp.float32) + fc2b_ref[0])

    # SE scale + residual add + output activation
    out = _leaky_relu(h * y.reshape(bb, 1, 1, C) + x)
    act_ref[...] = out                                       # carry to next layer

    @pl.when(l == n_layer - 1)
    def _():
        out_ref[...] = out.astype(out_ref.dtype)


def rbse_layer(x_nchw, params, *, batch_block=1):
    """RBSELayer.forward. Input/output are NCHW (PyTorch convention)."""
    x = jnp.transpose(x_nchw, (0, 2, 3, 1))        # NCHW -> NHWC once for the stack
    B, H, W, C = x.shape
    L = params["w1"].shape[0]
    mid = params["fc1w"].shape[-1]
    bb = batch_block
    assert B % bb == 0

    def layer_spec(*shape):                        # stacked-per-layer params
        return pl.BlockSpec((1,) + shape, lambda b, l: (l,) + (0,) * len(shape))

    act_spec = pl.BlockSpec((bb, H, W, C), lambda b, l: (b, 0, 0, 0))

    out = pl.pallas_call(
        rbse_kernel,
        out_shape=jax.ShapeDtypeStruct((B, H, W, C), x.dtype),
        grid_spec=pltpu.PrefetchScalarGridSpec(
            num_scalar_prefetch=0,
            grid=(B // bb, L),                     # (batch blocks, layers)
            in_specs=[
                act_spec,                          # x
                layer_spec(9 * C, C),              # w1 (bf16, im2col layout)
                layer_spec(1, C),                  # b1
                layer_spec(9 * C, C),              # w2 (bf16, im2col layout)
                layer_spec(1, C),                  # b2
                layer_spec(C, mid),                # fc1 weight (in, out)
                layer_spec(1, mid),                # fc1 bias
                layer_spec(mid, C),                # fc2 weight (in, out)
                layer_spec(1, C),                  # fc2 bias
            ],
            out_specs=act_spec,
            scratch_shapes=[pltpu.VMEM((bb, H, W, C), jnp.float32)],
        ),
        compiler_params=pltpu.CompilerParams(
            dimension_semantics=("parallel", "arbitrary"),
            vmem_limit_bytes=64 * 1024 * 1024,
        ),
        input_output_aliases={0: 0},               # reuse x's HBM buffer for the output
    )(x, params["w1"], params["b1"], params["w2"], params["b2"],
      params["fc1w"], params["fc1b"], params["fc2w"], params["fc2b"])

    return jnp.transpose(out, (0, 3, 1, 2))        # NHWC -> NCHW


def init_params(key, C, n_layer, reduction=4):
    """Deterministic synthetic parameters, stacked along a leading layer axis.
    Conv weights generated as (L,3,3,Cin,Cout) then reshaped to im2col (L,9C,C)
    and stored bf16 (torch (Cout,Cin,3,3) would need .permute(2,3,1,0) first).
    Linear weights stored pre-transposed as (in, out)."""
    mid = int(C / reduction)

    def draw(k, shape):
        return 0.1 * jax.random.normal(k, shape, jnp.float32)

    keys = jax.random.split(key, 8)
    w1 = draw(keys[0], (n_layer, 3, 3, C, C)).reshape(n_layer, 9 * C, C)
    w2 = draw(keys[1], (n_layer, 3, 3, C, C)).reshape(n_layer, 9 * C, C)
    return dict(
        w1=w1.astype(jnp.bfloat16),
        b1=draw(keys[2], (n_layer, 1, C)),
        w2=w2.astype(jnp.bfloat16),
        b2=draw(keys[3], (n_layer, 1, C)),
        fc1w=draw(keys[4], (n_layer, C, mid)),
        fc1b=draw(keys[5], (n_layer, 1, mid)),
        fc2w=draw(keys[6], (n_layer, mid, C)),
        fc2b=draw(keys[7], (n_layer, 1, C)),
    )


if __name__ == "__main__":
    key = jax.random.PRNGKey(0)
    # inp_dim = 128 (lane-dense channels, SE mid = 32), 16x16 spatial, 2 layers.
    B, C, H, W = 2, 128, 16, 16
    n_layer = 2

    key, xkey, pkey = jax.random.split(key, 3)
    x = jax.random.normal(xkey, (B, C, H, W), jnp.float32)
    params = init_params(pkey, C, n_layer)

    fwd = jax.jit(rbse_layer)
    out = fwd(x, params)
    jax.block_until_ready(out)

    assert out.shape == (B, C, H, W)
    assert out.dtype == jnp.float32
    assert bool(jnp.isfinite(out).all())
    print("KERNEL_OK")
</pallas_src>

<mosaic_0001>
module attributes {stable_mosaic.version = 11 : i64} {
  func.func @rbse_kernel(%arg0: i32, %arg1: i32, %arg2: memref<1x16x16x128xf32, #tpu.memory_space<vmem>>, %arg3: memref<1x1152x128xbf16, #tpu.memory_space<vmem>>, %arg4: memref<1x1x128xf32, #tpu.memory_space<vmem>>, %arg5: memref<1x1152x128xbf16, #tpu.memory_space<vmem>>, %arg6: memref<1x1x128xf32, #tpu.memory_space<vmem>>, %arg7: memref<1x128x32xf32, #tpu.memory_space<vmem>>, %arg8: memref<1x1x32xf32, #tpu.memory_space<vmem>>, %arg9: memref<1x32x128xf32, #tpu.memory_space<vmem>>, %arg10: memref<1x1x128xf32, #tpu.memory_space<vmem>>, %arg11: memref<1x16x16x128xf32, #tpu.memory_space<vmem>>, %arg12: memref<1x16x16x128xf32, #tpu.memory_space<vmem>>) attributes {dimension_semantics = [#tpu.dimension_semantics<parallel>, #tpu.dimension_semantics<arbitrary>], iteration_bounds = array<i64: 2, 2>, scalar_prefetch = 0 : i64, scratch_operands = 1 : i64, tpu.core_type = #tpu.core_type<tc>, window_params = [{transform_indices = @transform_0, window_bounds = array<i64: 1, 16, 16, 128>}, {transform_indices = @transform_1, window_bounds = array<i64: 1, 1152, 128>}, {transform_indices = @transform_2, window_bounds = array<i64: 1, 1, 128>}, {transform_indices = @transform_3, window_bounds = array<i64: 1, 1152, 128>}, {transform_indices = @transform_4, window_bounds = array<i64: 1, 1, 128>}, {transform_indices = @transform_5, window_bounds = array<i64: 1, 128, 32>}, {transform_indices = @transform_6, window_bounds = array<i64: 1, 1, 32>}, {transform_indices = @transform_7, window_bounds = array<i64: 1, 32, 128>}, {transform_indices = @transform_8, window_bounds = array<i64: 1, 1, 128>}, {transform_indices = @transform_9, window_bounds = array<i64: 1, 16, 16, 128>}]} {
    %c0_i32 = arith.constant 0 : i32
    %0 = arith.cmpi eq, %arg1, %c0_i32 : i32
    %1 = arith.extui %0 : i1 to i32
    %c0_i32_0 = arith.constant 0 : i32
    %2 = arith.cmpi ne, %1, %c0_i32_0 : i32
    scf.if %2 {
      %c0_45 = arith.constant 0 : index
      %c0_46 = arith.constant 0 : index
      %c0_47 = arith.constant 0 : index
      %c0_48 = arith.constant 0 : index
      %101 = vector.load %arg2[%c0_45, %c0_46, %c0_47, %c0_48] : memref<1x16x16x128xf32, #tpu.memory_space<vmem>>, vector<1x16x16x128xf32>
      %c0_49 = arith.constant 0 : index
      %c0_50 = arith.constant 0 : index
      %c0_51 = arith.constant 0 : index
      %c0_52 = arith.constant 0 : index
      %102 = vector.load %arg12[%c0_49, %c0_50, %c0_51, %c0_52] : memref<1x16x16x128xf32, #tpu.memory_space<vmem>>, vector<1x16x16x128xf32>
      tpu.vector_store %arg12[%c0_49, %c0_50, %c0_51, %c0_52], %101 {strides = array<i32>} : memref<1x16x16x128xf32, #tpu.memory_space<vmem>>, vector<1x16x16x128xf32>,
    } else {
    }
    %c0 = arith.constant 0 : index
    %c0_1 = arith.constant 0 : index
    %c0_2 = arith.constant 0 : index
    %c0_3 = arith.constant 0 : index
    %3 = vector.load %arg12[%c0, %c0_1, %c0_2, %c0_3] : memref<1x16x16x128xf32, #tpu.memory_space<vmem>>, vector<1x16x16x128xf32>
    %c0_4 = arith.constant 0 : index
    %c0_5 = arith.constant 0 : index
    %c0_6 = arith.constant 0 : index
    %4 = vector.load %arg3[%c0_4, %c0_5, %c0_6] : memref<1x1152x128xbf16, #tpu.memory_space<vmem>>, vector<1x1152x128xbf16>
    %5 = vector.shape_cast %4 : vector<1x1152x128xbf16> to vector<1152x128xbf16>
    %c0_7 = arith.constant 0 : index
    %c0_8 = arith.constant 0 : index
    %c0_9 = arith.constant 0 : index
    %6 = vector.load %arg4[%c0_7, %c0_8, %c0_9] : memref<1x1x128xf32, #tpu.memory_space<vmem>>, vector<1x1x128xf32>
    %7 = vector.shape_cast %6 : vector<1x1x128xf32> to vector<1x128xf32>
    %8 = vector.extract_strided_slice %3 {offsets = [0, 1, 0, 0], sizes = [1, 1, 16, 128], strides = [1, 1, 1, 1]} : vector<1x16x16x128xf32> to vector<1x1x16x128xf32>
    %9 = vector.extract_strided_slice %3 {offsets = [0, 14, 0, 0], sizes = [1, 1, 16, 128], strides = [1, 1, 1, 1]} : vector<1x16x16x128xf32> to vector<1x1x16x128xf32>
    %10 = tpu.concatenate %8, %3, %9 in 1 : vector<1x1x16x128xf32>, vector<1x16x16x128xf32>, vector<1x1x16x128xf32> -> vector<1x18x16x128xf32>
    %11 = vector.extract_strided_slice %10 {offsets = [0, 0, 1, 0], sizes = [1, 18, 1, 128], strides = [1, 1, 1, 1]} : vector<1x18x16x128xf32> to vector<1x18x1x128xf32>
    %12 = vector.extract_strided_slice %10 {offsets = [0, 0, 14, 0], sizes = [1, 18, 1, 128], strides = [1, 1, 1, 1]} : vector<1x18x16x128xf32> to vector<1x18x1x128xf32>
    %13 = tpu.concatenate %11, %10, %12 in 2 : vector<1x18x1x128xf32>, vector<1x18x16x128xf32>, vector<1x18x1x128xf32> -> vector<1x18x18x128xf32>
    %14 = vector.extract_strided_slice %13 {offsets = [0, 0, 0, 0], sizes = [1, 16, 16, 128], strides = [1, 1, 1, 1]} : vector<1x18x18x128xf32> to vector<1x16x16x128xf32>
    %15 = vector.extract_strided_slice %13 {offsets = [0, 0, 1, 0], sizes = [1, 16, 16, 128], strides = [1, 1, 1, 1]} : vector<1x18x18x128xf32> to vector<1x16x16x128xf32>
    %16 = vector.extract_strided_slice %13 {offsets = [0, 0, 2, 0], sizes = [1, 16, 16, 128], strides = [1, 1, 1, 1]} : vector<1x18x18x128xf32> to vector<1x16x16x128xf32>
    %17 = vector.extract_strided_slice %13 {offsets = [0, 1, 0, 0], sizes = [1, 16, 16, 128], strides = [1, 1, 1, 1]} : vector<1x18x18x128xf32> to vector<1x16x16x128xf32>
    %18 = vector.extract_strided_slice %13 {offsets = [0, 1, 1, 0], sizes = [1, 16, 16, 128], strides = [1, 1, 1, 1]} : vector<1x18x18x128xf32> to vector<1x16x16x128xf32>
    %19 = vector.extract_strided_slice %13 {offsets = [0, 1, 2, 0], sizes = [1, 16, 16, 128], strides = [1, 1, 1, 1]} : vector<1x18x18x128xf32> to vector<1x16x16x128xf32>
    %20 = vector.extract_strided_slice %13 {offsets = [0, 2, 0, 0], sizes = [1, 16, 16, 128], strides = [1, 1, 1, 1]} : vector<1x18x18x128xf32> to vector<1x16x16x128xf32>
    %21 = vector.extract_strided_slice %13 {offsets = [0, 2, 1, 0], sizes = [1, 16, 16, 128], strides = [1, 1, 1, 1]} : vector<1x18x18x128xf32> to vector<1x16x16x128xf32>
    %22 = vector.extract_strided_slice %13 {offsets = [0, 2, 2, 0], sizes = [1, 16, 16, 128], strides = [1, 1, 1, 1]} : vector<1x18x18x128xf32> to vector<1x16x16x128xf32>
    %23 = tpu.concatenate %14, %15, %16, %17, %18, %19, %20, %21, %22 in 3 : vector<1x16x16x128xf32>, vector<1x16x16x128xf32>, vector<1x16x16x128xf32>, vector<1x16x16x128xf32>, vector<1x16x16x128xf32>, vector<1x16x16x128xf32>, vector<1x16x16x128xf32>, vector<1x16x16x128xf32>, vector<1x16x16x128xf32> -> vector<1x16x16x1152xf32>
    %24 = vector.shape_cast %23 : vector<1x16x16x1152xf32> to vector<256x1152xf32>
    %25 = arith.truncf %24 : vector<256x1152xf32> to vector<256x1152xbf16>
    %cst = arith.constant dense<0.000000e+00> : vector<256x128xf32>
    %26 = tpu.matmul %25, %5, %cst {dimension_numbers = #tpu.dot_dimension_numbers<[1], [0], [0], [1], [0, 0, 1, 1], [], []>} : vector<256x1152xbf16>, vector<1152x128xbf16>, vector<256x128xf32> -> vector<256x128xf32>
    %27 = vector.shape_cast %26 : vector<256x128xf32> to vector<1x16x16x128xf32>
    %28 = vector.shape_cast %7 : vector<1x128xf32> to vector<1x1x1x128xf32>
    %29 = vector.broadcast %28 : vector<1x1x1x128xf32> to vector<1x16x16x128xf32>
    %30 = arith.addf %27, %29 : vector<1x16x16x128xf32>
    %cst_10 = arith.constant 0.000000e+00 : f32
    %31 = vector.broadcast %cst_10 : f32 to vector<1x16x16x128xf32>
    %32 = arith.cmpf oge, %30, %31 : vector<1x16x16x128xf32>
    %cst_11 = arith.constant 2.000000e-01 : f32
    %33 = vector.broadcast %cst_11 : f32 to vector<1x16x16x128xf32>
    %34 = arith.mulf %33, %30 : vector<1x16x16x128xf32>
    %35 = arith.select %32, %30, %34 : vector<1x16x16x128xi1>, vector<1x16x16x128xf32>
    %c0_12 = arith.constant 0 : index
    %c0_13 = arith.constant 0 : index
    %c0_14 = arith.constant 0 : index
    %36 = vector.load %arg5[%c0_12, %c0_13, %c0_14] : memref<1x1152x128xbf16, #tpu.memory_space<vmem>>, vector<1x1152x128xbf16>
    %37 = vector.shape_cast %36 : vector<1x1152x128xbf16> to vector<1152x128xbf16>
    %c0_15 = arith.constant 0 : index
    %c0_16 = arith.constant 0 : index
    %c0_17 = arith.constant 0 : index
    %38 = vector.load %arg6[%c0_15, %c0_16, %c0_17] : memref<1x1x128xf32, #tpu.memory_space<vmem>>, vector<1x1x128xf32>
    %39 = vector.shape_cast %38 : vector<1x1x128xf32> to vector<1x128xf32>
    %40 = vector.extract_strided_slice %35 {offsets = [0, 1, 0, 0], sizes = [1, 1, 16, 128], strides = [1, 1, 1, 1]} : vector<1x16x16x128xf32> to vector<1x1x16x128xf32>
    %41 = vector.extract_strided_slice %35 {offsets = [0, 14, 0, 0], sizes = [1, 1, 16, 128], strides = [1, 1, 1, 1]} : vector<1x16x16x128xf32> to vector<1x1x16x128xf32>
    %42 = tpu.concatenate %40, %35, %41 in 1 : vector<1x1x16x128xf32>, vector<1x16x16x128xf32>, vector<1x1x16x128xf32> -> vector<1x18x16x128xf32>
    %43 = vector.extract_strided_slice %42 {offsets = [0, 0, 1, 0], sizes = [1, 18, 1, 128], strides = [1, 1, 1, 1]} : vector<1x18x16x128xf32> to vector<1x18x1x128xf32>
    %44 = vector.extract_strided_slice %42 {offsets = [0, 0, 14, 0], sizes = [1, 18, 1, 128], strides = [1, 1, 1, 1]} : vector<1x18x16x128xf32> to vector<1x18x1x128xf32>
    %45 = tpu.concatenate %43, %42, %44 in 2 : vector<1x18x1x128xf32>, vector<1x18x16x128xf32>, vector<1x18x1x128xf32> -> vector<1x18x18x128xf32>
    %46 = vector.extract_strided_slice %45 {offsets = [0, 0, 0, 0], sizes = [1, 16, 16, 128], strides = [1, 1, 1, 1]} : vector<1x18x18x128xf32> to vector<1x16x16x128xf32>
    %47 = vector.extract_strided_slice %45 {offsets = [0, 0, 1, 0], sizes = [1, 16, 16, 128], strides = [1, 1, 1, 1]} : vector<1x18x18x128xf32> to vector<1x16x16x128xf32>
    %48 = vector.extract_strided_slice %45 {offsets = [0, 0, 2, 0], sizes = [1, 16, 16, 128], strides = [1, 1, 1, 1]} : vector<1x18x18x128xf32> to vector<1x16x16x128xf32>
    %49 = vector.extract_strided_slice %45 {offsets = [0, 1, 0, 0], sizes = [1, 16, 16, 128], strides = [1, 1, 1, 1]} : vector<1x18x18x128xf32> to vector<1x16x16x128xf32>
    %50 = vector.extract_strided_slice %45 {offsets = [0, 1, 1, 0], sizes = [1, 16, 16, 128], strides = [1, 1, 1, 1]} : vector<1x18x18x128xf32> to vector<1x16x16x128xf32>
    %51 = vector.extract_strided_slice %45 {offsets = [0, 1, 2, 0], sizes = [1, 16, 16, 128], strides = [1, 1, 1, 1]} : vector<1x18x18x128xf32> to vector<1x16x16x128xf32>
    %52 = vector.extract_strided_slice %45 {offsets = [0, 2, 0, 0], sizes = [1, 16, 16, 128], strides = [1, 1, 1, 1]} : vector<1x18x18x128xf32> to vector<1x16x16x128xf32>
    %53 = vector.extract_strided_slice %45 {offsets = [0, 2, 1, 0], sizes = [1, 16, 16, 128], strides = [1, 1, 1, 1]} : vector<1x18x18x128xf32> to vector<1x16x16x128xf32>
    %54 = vector.extract_strided_slice %45 {offsets = [0, 2, 2, 0], sizes = [1, 16, 16, 128], strides = [1, 1, 1, 1]} : vector<1x18x18x128xf32> to vector<1x16x16x128xf32>
    %55 = tpu.concatenate %46, %47, %48, %49, %50, %51, %52, %53, %54 in 3 : vector<1x16x16x128xf32>, vector<1x16x16x128xf32>, vector<1x16x16x128xf32>, vector<1x16x16x128xf32>, vector<1x16x16x128xf32>, vector<1x16x16x128xf32>, vector<1x16x16x128xf32>, vector<1x16x16x128xf32>, vector<1x16x16x128xf32> -> vector<1x16x16x1152xf32>
    %56 = vector.shape_cast %55 : vector<1x16x16x1152xf32> to vector<256x1152xf32>
    %57 = arith.truncf %56 : vector<256x1152xf32> to vector<256x1152xbf16>
    %cst_18 = arith.constant dense<0.000000e+00> : vector<256x128xf32>
    %58 = tpu.matmul %57, %37, %cst_18 {dimension_numbers = #tpu.dot_dimension_numbers<[1], [0], [0], [1], [0, 0, 1, 1], [], []>} : vector<256x1152xbf16>, vector<1152x128xbf16>, vector<256x128xf32> -> vector<256x128xf32>
    %59 = vector.shape_cast %58 : vector<256x128xf32> to vector<1x16x16x128xf32>
    %60 = vector.shape_cast %39 : vector<1x128xf32> to vector<1x1x1x128xf32>
    %61 = vector.broadcast %60 : vector<1x1x1x128xf32> to vector<1x16x16x128xf32>
    %62 = arith.addf %59, %61 : vector<1x16x16x128xf32>
    %cst_19 = arith.constant dense<0.000000e+00> : vector<1x128xf32>
    %63 = vector.multi_reduction <add>, %62, %cst_19 [1, 2] : vector<1x16x16x128xf32> to vector<1x128xf32>
    %cst_20 = arith.constant 3.906250e-03 : f32
    %64 = vector.broadcast %cst_20 : f32 to vector<1x128xf32>
    %65 = arith.mulf %63, %64 : vector<1x128xf32>
    %c0_21 = arith.constant 0 : index
    %c0_22 = arith.constant 0 : index
    %c0_23 = arith.constant 0 : index
    %66 = vector.load %arg7[%c0_21, %c0_22, %c0_23] : memref<1x128x32xf32, #tpu.memory_space<vmem>>, vector<1x128x32xf32>
    %67 = vector.shape_cast %66 : vector<1x128x32xf32> to vector<128x32xf32>
    %cst_24 = arith.constant dense<0.000000e+00> : vector<1x32xf32>
    %68 = tpu.matmul %65, %67, %cst_24 {dimension_numbers = #tpu.dot_dimension_numbers<[1], [0], [0], [1], [0, 0, 1, 1], [], []>} : vector<1x128xf32>, vector<128x32xf32>, vector<1x32xf32> -> vector<1x32xf32>
    %c0_25 = arith.constant 0 : index
    %c0_26 = arith.constant 0 : index
    %c0_27 = arith.constant 0 : index
    %69 = vector.load %arg8[%c0_25, %c0_26, %c0_27] : memref<1x1x32xf32, #tpu.memory_space<vmem>>, vector<1x1x32xf32>
    %70 = vector.shape_cast %69 : vector<1x1x32xf32> to vector<1x32xf32>
    %71 = arith.addf %68, %70 : vector<1x32xf32>
    %cst_28 = arith.constant 0.000000e+00 : f32
    %72 = vector.broadcast %cst_28 : f32 to vector<1x32xf32>
    %73 = arith.cmpf oge, %71, %72 : vector<1x32xf32>
    %cst_29 = arith.constant 2.000000e-01 : f32
    %74 = vector.broadcast %cst_29 : f32 to vector<1x32xf32>
    %75 = arith.mulf %74, %71 : vector<1x32xf32>
    %76 = arith.select %73, %71, %75 : vector<1x32xi1>, vector<1x32xf32>
    %c0_30 = arith.constant 0 : index
    %c0_31 = arith.constant 0 : index
    %c0_32 = arith.constant 0 : index
    %77 = vector.load %arg9[%c0_30, %c0_31, %c0_32] : memref<1x32x128xf32, #tpu.memory_space<vmem>>, vector<1x32x128xf32>
    %78 = vector.shape_cast %77 : vector<1x32x128xf32> to vector<32x128xf32>
    %cst_33 = arith.constant dense<0.000000e+00> : vector<1x128xf32>
    %79 = tpu.matmul %76, %78, %cst_33 {dimension_numbers = #tpu.dot_dimension_numbers<[1], [0], [0], [1], [0, 0, 1, 1], [], []>} : vector<1x32xf32>, vector<32x128xf32>, vector<1x128xf32> -> vector<1x128xf32>
    %c0_34 = arith.constant 0 : index
    %c0_35 = arith.constant 0 : index
    %c0_36 = arith.constant 0 : index
    %80 = vector.load %arg10[%c0_34, %c0_35, %c0_36] : memref<1x1x128xf32, #tpu.memory_space<vmem>>, vector<1x1x128xf32>
    %81 = vector.shape_cast %80 : vector<1x1x128xf32> to vector<1x128xf32>
    %82 = arith.addf %79, %81 : vector<1x128xf32>
    %83 = arith.negf %82 : vector<1x128xf32>
    %84 = math.exp %83 : vector<1x128xf32>
    %cst_37 = arith.constant 1.000000e+00 : f32
    %85 = vector.broadcast %cst_37 : f32 to vector<1x128xf32>
    %86 = arith.addf %85, %84 : vector<1x128xf32>
    %87 = arith.divf %85, %86 : vector<1x128xf32>
    %88 = vector.shape_cast %87 : vector<1x128xf32> to vector<1x1x1x128xf32>
    %89 = vector.broadcast %88 : vector<1x1x1x128xf32> to vector<1x16x16x128xf32>
    %90 = arith.mulf %62, %89 : vector<1x16x16x128xf32>
    %91 = arith.addf %90, %3 : vector<1x16x16x128xf32>
    %cst_38 = arith.constant 0.000000e+00 : f32
    %92 = vector.broadcast %cst_38 : f32 to vector<1x16x16x128xf32>
    %93 = arith.cmpf oge, %91, %92 : vector<1x16x16x128xf32>
    %cst_39 = arith.constant 2.000000e-01 : f32
    %94 = vector.broadcast %cst_39 : f32 to vector<1x16x16x128xf32>
    %95 = arith.mulf %94, %91 : vector<1x16x16x128xf32>
    %96 = arith.select %93, %91, %95 : vector<1x16x16x128xi1>, vector<1x16x16x128xf32>
    %c0_40 = arith.constant 0 : index
    %c0_41 = arith.constant 0 : index
    %c0_42 = arith.constant 0 : index
    %c0_43 = arith.constant 0 : index
    %97 = vector.load %arg12[%c0_40, %c0_41, %c0_42, %c0_43] : memref<1x16x16x128xf32, #tpu.memory_space<vmem>>, vector<1x16x16x128xf32>
    tpu.vector_store %arg12[%c0_40, %c0_41, %c0_42, %c0_43], %96 {strides = array<i32>} : memref<1x16x16x128xf32, #tpu.memory_space<vmem>>, vector<1x16x16x128xf32>,
    %c1_i32 = arith.constant 1 : i32
    %98 = arith.cmpi eq, %arg1, %c1_i32 : i32
    %99 = arith.extui %98 : i1 to i32
    %c0_i32_44 = arith.constant 0 : i32
    %100 = arith.cmpi ne, %99, %c0_i32_44 : i32
    scf.if %100 {
      %c0_45 = arith.constant 0 : index
      %c0_46 = arith.constant 0 : index
      %c0_47 = arith.constant 0 : index
      %c0_48 = arith.constant 0 : index
      %101 = vector.load %arg11[%c0_45, %c0_46, %c0_47, %c0_48] : memref<1x16x16x128xf32, #tpu.memory_space<vmem>>, vector<1x16x16x128xf32>
      tpu.vector_store %arg11[%c0_45, %c0_46, %c0_47, %c0_48], %96 {strides = array<i32>} : memref<1x16x16x128xf32, #tpu.memory_space<vmem>>, vector<1x16x16x128xf32>,
    } else {
    }
    return
  }
  func.func @transform_0(%arg0: i32, %arg1: i32) -> (i32, i32, i32, i32) {
    %c0_i32 = arith.constant 0 : i32
    %c0_i32_0 = arith.constant 0 : i32
    %c0_i32_1 = arith.constant 0 : i32
    %c0_i32_2 = arith.constant 0 : i32
    return %arg0, %c0_i32, %c0_i32_0, %c0_i32_1 : i32, i32, i32, i32
  }
  func.func @transform_1(%arg0: i32, %arg1: i32) -> (i32, i32, i32) {
    %c0_i32 = arith.constant 0 : i32
    %c0_i32_0 = arith.constant 0 : i32
    %c0_i32_1 = arith.constant 0 : i32
    return %arg1, %c0_i32, %c0_i32_0 : i32, i32, i32
  }
  func.func @transform_2(%arg0: i32, %arg1: i32) -> (i32, i32, i32) {
    %c0_i32 = arith.constant 0 : i32
    %c0_i32_0 = arith.constant 0 : i32
    %c0_i32_1 = arith.constant 0 : i32
    return %arg1, %c0_i32, %c0_i32_0 : i32, i32, i32
  }
  func.func @transform_3(%arg0: i32, %arg1: i32) -> (i32, i32, i32) {
    %c0_i32 = arith.constant 0 : i32
    %c0_i32_0 = arith.constant 0 : i32
    %c0_i32_1 = arith.constant 0 : i32
    return %arg1, %c0_i32, %c0_i32_0 : i32, i32, i32
  }
  func.func @transform_4(%arg0: i32, %arg1: i32) -> (i32, i32, i32) {
    %c0_i32 = arith.constant 0 : i32
    %c0_i32_0 = arith.constant 0 : i32
    %c0_i32_1 = arith.constant 0 : i32
    return %arg1, %c0_i32, %c0_i32_0 : i32, i32, i32
  }
  func.func @transform_5(%arg0: i32, %arg1: i32) -> (i32, i32, i32) {
    %c0_i32 = arith.constant 0 : i32
    %c0_i32_0 = arith.constant 0 : i32
    %c0_i32_1 = arith.constant 0 : i32
    return %arg1, %c0_i32, %c0_i32_0 : i32, i32, i32
  }
  func.func @transform_6(%arg0: i32, %arg1: i32) -> (i32, i32, i32) {
    %c0_i32 = arith.constant 0 : i32
    %c0_i32_0 = arith.constant 0 : i32
    %c0_i32_1 = arith.constant 0 : i32
    return %arg1, %c0_i32, %c0_i32_0 : i32, i32, i32
  }
  func.func @transform_7(%arg0: i32, %arg1: i32) -> (i32, i32, i32) {
    %c0_i32 = arith.constant 0 : i32
    %c0_i32_0 = arith.constant 0 : i32
    %c0_i32_1 = arith.constant 0 : i32
    return %arg1, %c0_i32, %c0_i32_0 : i32, i32, i32
  }
  func.func @transform_8(%arg0: i32, %arg1: i32) -> (i32, i32, i32) {
    %c0_i32 = arith.constant 0 : i32
    %c0_i32_0 = arith.constant 0 : i32
    %c0_i32_1 = arith.constant 0 : i32
    return %arg1, %c0_i32, %c0_i32_0 : i32, i32, i32
  }
  func.func @transform_9(%arg0: i32, %arg1: i32) -> (i32, i32, i32, i32) {
    %c0_i32 = arith.constant 0 : i32
    %c0_i32_0 = arith.constant 0 : i32
    %c0_i32_1 = arith.constant 0 : i32
    %c0_i32_2 = arith.constant 0 : i32
    return %arg0, %c0_i32, %c0_i32_0, %c0_i32_1 : i32, i32, i32, i32
  }
}

</mosaic_0001>

<llo_original>
// kernel: rbse_layer.1
$region0: #{rbse_layer.1}
  #allocation0 [shape = 'u32[]', space=smem, size = 0x4, offset = 0x4, fixed_abs, tag = 'smem constant byte address 0x4 - core index']
  #allocation1 [shape = 'u32[72,128]{1,0:T(1,128)}', space=vmem, size = 0x9000, scoped, tag = 'internal scratch']
  #allocation2 [shape = 'f32[1,16,16,128]{3,2,1,0:T(8,128)}', space=vmem, size = 0x20000, scoped, tag = 'scratch operand']
  %s0 = inlined_call_operand.vmem [shape: f32[2,16,16,128], index: 0, kind: input, shape index: {}, may-alias: {0,9}]
  %s1 = inlined_call_operand.hbm [shape: bf16[2,1152,128], index: 1, kind: input, shape index: {}]
  %s2 = inlined_call_operand.vmem [shape: f32[2,1,128], index: 2, kind: input, shape index: {}]
  %s3 = inlined_call_operand.hbm [shape: bf16[2,1152,128], index: 3, kind: input, shape index: {}]
  %s4 = inlined_call_operand.vmem [shape: f32[2,1,128], index: 4, kind: input, shape index: {}]
  %s5 = inlined_call_operand.vmem [shape: f32[2,128,32], index: 5, kind: input, shape index: {}]
  %s6 = inlined_call_operand.vmem [shape: f32[2,1,32], index: 6, kind: input, shape index: {}]
  %s7 = inlined_call_operand.vmem [shape: f32[2,32,128], index: 7, kind: input, shape index: {}]
  %s8 = inlined_call_operand.vmem [shape: f32[2,1,128], index: 8, kind: input, shape index: {}]
  %s9 = inlined_call_operand.vmem [shape: f32[2,16,16,128], index: 9, kind: output, shape index: {}, may-alias: {0,9}]
  %s10 = sld [smem:[#allocation0]]
  $region85: #{rbse_layer.1} parent=0
    _
  %s12 = ssub.s32 1, %s10
  %s13 = scalar_select 0, %s12, %s10
  $region1: #{rbse_layer.1} parent=0
    #allocation3 [shape = 'u8[589824]{0}', space=vmem, size = 0x90000, scoped, tag = 'input window, operand 1']
    #allocation4 [shape = 's32[2]{0}', space=sflag, size = 0x8, scoped, tag = 'scoped memory for rbse_layer.1']
    #allocation5 [shape = 'u8[589824]{0}', space=vmem, size = 0x90000, scoped, tag = 'input window, operand 3']
    #allocation6 [shape = 's32[2]{0}', space=sflag, size = 0x8, scoped, tag = 'scoped memory for rbse_layer.1']
    %14 = vsyncpa [#allocation4], 0
    %s15 = scalar_lea.sflag [#allocation4], 1
    %16 = vsyncpa %s15, 0
    %17 = vsyncpa [#allocation6], 0
    %s18 = scalar_lea.sflag [#allocation6], 1
    %19 = vsyncpa %s18, 0
    loop: start=0, step=1, limit=6
    $region2: #{rbse_layer.1} parent=1 // loop_pre_header
      _
    $region3: #{rbse_layer.1} parent=1 // loop_header
      %s21 = sphi 0, %s25
      %p22 = scmp.ge.s32.totalorder %s21, 6
      %s28 = sphi 0, %s40
      %s29 = sphi 0, %s36
      %s30 = sphi 0, %s28
      %s31 = sphi 0, %s29
      %s32 = sphi 0, %s30
      %s33 = sphi 0, %s31
      %s43 = sphi 0, %s45
      %s46 = sphi 0, %s43
      %s47 = sphi 0, %s46
      %s63 = sphi 0, %s47
      %s69 = sphi 0, %s71
      %s72 = sphi 0, %s69
      %s73 = sphi 0, %s72
      %s89 = sphi 0, %s73
      %s95 = sphi 0, %s97
      %s98 = sphi 0, %s95
      %s99 = sphi 0, %s98
      %s115 = sphi 0, %s99
      %s121 = sphi 0, %s123
      %s124 = sphi 0, %s121
      %s125 = sphi 0, %s124
      %s141 = sphi 0, %s125
      %s147 = sphi 0, %s149
      %s150 = sphi 0, %s147
      %s151 = sphi 0, %s150
      %s167 = sphi 0, %s151
      %s173 = sphi 0, %s175
      %s176 = sphi 0, %s173
      %s177 = sphi 0, %s176
      %s193 = sphi 0, %s177
      %s199 = sphi 0, %s201
      %s202 = sphi 0, %s199
      %s203 = sphi 0, %s202
      %s219 = sphi 0, %s203
      %s225 = sphi 0, %s227
      %s228 = sphi 0, %s225
      %s229 = sphi 0, %s228
      %s245 = sphi 0, %s229
      %s251 = sphi 0, %s253
      %s254 = sphi 0, %s251
      %s255 = sphi 0, %s254
      %s271 = sphi 0, %s255
      %s277 = sphi 0, %s279
      %s280 = sphi 0, %s277
      %s281 = sphi 0, %s280
      %s297 = sphi 0, %s281
    $region4: #{rbse_layer.1} parent=1 // loop_header_branch
      %24 = sbr.rel (%p22) target = $region8
    $region5: #{rbse_layer.1} parent=1 // loop_body
      %s26 = ssub.s32 %s21, 1
      %s27 = ssub.s32 %s21, 2
      %s34 = sadd.s32 1, %s29
      %p35 = scmp.ge.s32.totalorder %s34, 2
      %s36 = scalar_select %p35, 0, %s34
      %s37 = sadd.s32 1, %s28
      %s38 = scalar_select %p35, %s37, %s28
      %p39 = scmp.ge.s32.totalorder %s38, 2
      %s40 = scalar_select %p39, 0, %s38
      %s41 = ssub.s32 %s28, %s40
      %p42 = scmp.eq.s32.totalorder %s41, 0
      %s44 = sadd.s32 %s43, 1
      %s45 = scalar_select %p42, %s43, %s44
      %p48 = pneg %p42
      %p49 = scmp.eq.s32.totalorder %s21, 3
      %p50 = por %p48, %p49
      %p51 = scmp.ne.s32.totalorder %s43, %s46
      %p52 = scmp.eq.s32.totalorder %s21, 0
      %p53 = por %p51, %p52
      %p54 = scmp.ne.s32.totalorder %s43, %s46
      %p55 = scmp.eq.s32.totalorder %s26, 3
      %p56 = por %p54, %p55
      %p57 = scmp.ne.s32.totalorder %s46, %s47
      %p58 = scmp.eq.s32.totalorder %s26, 0
      %p59 = por %p57, %p58
      %p60 = scmp.ne.s32.totalorder %s46, %s47
      %p61 = scmp.eq.s32.totalorder %s27, 3
      %p62 = por %p60, %p61
      %p64 = scmp.ne.s32.totalorder %s47, %s63
      %p65 = scmp.eq.s32.totalorder %s27, 0
      %p66 = por %p64, %p65
      %s67 = ssub.s32 %s29, %s36
      %p68 = scmp.eq.s32.totalorder %s67, 0
      %s70 = sadd.s32 %s69, 1
      %s71 = scalar_select %p68, %s69, %s70
      %p74 = pneg %p68
      %p75 = scmp.eq.s32.totalorder %s21, 3
      %p76 = por %p74, %p75
      %p77 = scmp.ne.s32.totalorder %s69, %s72
      %p78 = scmp.eq.s32.totalorder %s21, 0
      %p79 = por %p77, %p78
      %p80 = scmp.ne.s32.totalorder %s69, %s72
      %p81 = scmp.eq.s32.totalorder %s26, 3
      %p82 = por %p80, %p81
      %p83 = scmp.ne.s32.totalorder %s72, %s73
      %p84 = scmp.eq.s32.totalorder %s26, 0
      %p85 = por %p83, %p84
      %p86 = scmp.ne.s32.totalorder %s72, %s73
      %p87 = scmp.eq.s32.totalorder %s27, 3
      %p88 = por %p86, %p87
      %p90 = scmp.ne.s32.totalorder %s73, %s89
      %p91 = scmp.eq.s32.totalorder %s27, 0
      %p92 = por %p90, %p91
      %s93 = ssub.s32 %s29, %s36
      %p94 = scmp.eq.s32.totalorder %s93, 0
      %s96 = sadd.s32 %s95, 1
      %s97 = scalar_select %p94, %s95, %s96
      %p100 = pneg %p94
      %p101 = scmp.eq.s32.totalorder %s21, 3
      %p102 = por %p100, %p101
      %p103 = scmp.ne.s32.totalorder %s95, %s98
      %p104 = scmp.eq.s32.totalorder %s21, 0
      %p105 = por %p103, %p104
      %p106 = scmp.ne.s32.totalorder %s95, %s98
      %p107 = scmp.eq.s32.totalorder %s26, 3
      %p108 = por %p106, %p107
      %p109 = scmp.ne.s32.totalorder %s98, %s99
      %p110 = scmp.eq.s32.totalorder %s26, 0
      %p111 = por %p109, %p110
      %p112 = scmp.ne.s32.totalorder %s98, %s99
      %p113 = scmp.eq.s32.totalorder %s27, 3
      %p114 = por %p112, %p113
      %p116 = scmp.ne.s32.totalorder %s99, %s115
      %p117 = scmp.eq.s32.totalorder %s27, 0
      %p118 = por %p116, %p117
      %s119 = ssub.s32 %s29, %s36
      %p120 = scmp.eq.s32.totalorder %s119, 0
      %s122 = sadd.s32 %s121, 1
      %s123 = scalar_select %p120, %s121, %s122
      %p126 = pneg %p120
      %p127 = scmp.eq.s32.totalorder %s21, 3
      %p128 = por %p126, %p127
      %p129 = scmp.ne.s32.totalorder %s121, %s124
      %p130 = scmp.eq.s32.totalorder %s21, 0
      %p131 = por %p129, %p130
      %p132 = scmp.ne.s32.totalorder %s121, %s124
      %p133 = scmp.eq.s32.totalorder %s26, 3
      %p134 = por %p132, %p133
      %p135 = scmp.ne.s32.totalorder %s124, %s125
      %p136 = scmp.eq.s32.totalorder %s26, 0
      %p137 = por %p135, %p136
      %p138 = scmp.ne.s32.totalorder %s124, %s125
      %p139 = scmp.eq.s32.totalorder %s27, 3
      %p140 = por %p138, %p139
      %p142 = scmp.ne.s32.totalorder %s125, %s141
      %p143 = scmp.eq.s32.totalorder %s27, 0
      %p144 = por %p142, %p143
      %s145 = ssub.s32 %s29, %s36
      %p146 = scmp.eq.s32.totalorder %s145, 0
      %s148 = sadd.s32 %s147, 1
      %s149 = scalar_select %p146, %s147, %s148
      %p152 = pneg %p146
      %p153 = scmp.eq.s32.totalorder %s21, 3
      %p154 = por %p152, %p153
      %p155 = scmp.ne.s32.totalorder %s147, %s150
      %p156 = scmp.eq.s32.totalorder %s21, 0
      %p157 = por %p155, %p156
      %p158 = scmp.ne.s32.totalorder %s147, %s150
      %p159 = scmp.eq.s32.totalorder %s26, 3
      %p160 = por %p158, %p159
      %p161 = scmp.ne.s32.totalorder %s150, %s151
      %p162 = scmp.eq.s32.totalorder %s26, 0
      %p163 = por %p161, %p162
      %p164 = scmp.ne.s32.totalorder %s150, %s151
      %p165 = scmp.eq.s32.totalorder %s27, 3
      %p166 = por %p164, %p165
      %p168 = scmp.ne.s32.totalorder %s151, %s167
      %p169 = scmp.eq.s32.totalorder %s27, 0
      %p170 = por %p168, %p169
      %s171 = ssub.s32 %s29, %s36
      %p172 = scmp.eq.s32.totalorder %s171, 0
      %s174 = sadd.s32 %s173, 1
      %s175 = scalar_select %p172, %s173, %s174
      %p178 = pneg %p172
      %p179 = scmp.eq.s32.totalorder %s21, 3
      %p180 = por %p178, %p179
      %p181 = scmp.ne.s32.totalorder %s173, %s176
      %p182 = scmp.eq.s32.totalorder %s21, 0
      %p183 = por %p181, %p182
      %p184 = scmp.ne.s32.totalorder %s173, %s176
      %p185 = scmp.eq.s32.totalorder %s26, 3
      %p186 = por %p184, %p185
      %p187 = scmp.ne.s32.totalorder %s176, %s177
      %p188 = scmp.eq.s32.totalorder %s26, 0
      %p189 = por %p187, %p188
      %p190 = scmp.ne.s32.totalorder %s176, %s177
      %p191 = scmp.eq.s32.totalorder %s27, 3
      %p192 = por %p190, %p191
      %p194 = scmp.ne.s32.totalorder %s177, %s193
      %p195 = scmp.eq.s32.totalorder %s27, 0
      %p196 = por %p194, %p195
      %s197 = ssub.s32 %s29, %s36
      %p198 = scmp.eq.s32.totalorder %s197, 0
      %s200 = sadd.s32 %s199, 1
      %s201 = scalar_select %p198, %s199, %s200
      %p204 = pneg %p198
      %p205 = scmp.eq.s32.totalorder %s21, 3
      %p206 = por %p204, %p205
      %p207 = scmp.ne.s32.totalorder %s199, %s202
      %p208 = scmp.eq.s32.totalorder %s21, 0
      %p209 = por %p207, %p208
      %p210 = scmp.ne.s32.totalorder %s199, %s202
      %p211 = scmp.eq.s32.totalorder %s26, 3
      %p212 = por %p210, %p211
      %p213 = scmp.ne.s32.totalorder %s202, %s203
      %p214 = scmp.eq.s32.totalorder %s26, 0
      %p215 = por %p213, %p214
      %p216 = scmp.ne.s32.totalorder %s202, %s203
      %p217 = scmp.eq.s32.totalorder %s27, 3
      %p218 = por %p216, %p217
      %p220 = scmp.ne.s32.totalorder %s203, %s219
      %p221 = scmp.eq.s32.totalorder %s27, 0
      %p222 = por %p220, %p221
      %s223 = ssub.s32 %s29, %s36
      %p224 = scmp.eq.s32.totalorder %s223, 0
      %s226 = sadd.s32 %s225, 1
      %s227 = scalar_select %p224, %s225, %s226
      %p230 = pneg %p224
      %p231 = scmp.eq.s32.totalorder %s21, 3
      %p232 = por %p230, %p231
      %p233 = scmp.ne.s32.totalorder %s225, %s228
      %p234 = scmp.eq.s32.totalorder %s21, 0
      %p235 = por %p233, %p234
      %p236 = scmp.ne.s32.totalorder %s225, %s228
      %p237 = scmp.eq.s32.totalorder %s26, 3
      %p238 = por %p236, %p237
      %p239 = scmp.ne.s32.totalorder %s228, %s229
      %p240 = scmp.eq.s32.totalorder %s26, 0
      %p241 = por %p239, %p240
      %p242 = scmp.ne.s32.totalorder %s228, %s229
      %p243 = scmp.eq.s32.totalorder %s27, 3
      %p244 = por %p242, %p243
      %p246 = scmp.ne.s32.totalorder %s229, %s245
      %p247 = scmp.eq.s32.totalorder %s27, 0
      %p248 = por %p246, %p247
      %s249 = ssub.s32 %s29, %s36
      %p250 = scmp.eq.s32.totalorder %s249, 0
      %s252 = sadd.s32 %s251, 1
      %s253 = scalar_select %p250, %s251, %s252
      %p256 = pneg %p250
      %p257 = scmp.eq.s32.totalorder %s21, 3
      %p258 = por %p256, %p257
      %p259 = scmp.ne.s32.totalorder %s251, %s254
      %p260 = scmp.eq.s32.totalorder %s21, 0
      %p261 = por %p259, %p260
      %p262 = scmp.ne.s32.totalorder %s251, %s254
      %p263 = scmp.eq.s32.totalorder %s26, 3
      %p264 = por %p262, %p263
      %p265 = scmp.ne.s32.totalorder %s254, %s255
      %p266 = scmp.eq.s32.totalorder %s26, 0
      %p267 = por %p265, %p266
      %p268 = scmp.ne.s32.totalorder %s254, %s255
      %p269 = scmp.eq.s32.totalorder %s27, 3
      %p270 = por %p268, %p269
      %p272 = scmp.ne.s32.totalorder %s255, %s271
      %p273 = scmp.eq.s32.totalorder %s27, 0
      %p274 = por %p272, %p273
      %s275 = ssub.s32 %s28, %s40
      %p276 = scmp.eq.s32.totalorder %s275, 0
      %s278 = sadd.s32 %s277, 1
      %s279 = scalar_select %p276, %s277, %s278
      %p282 = pneg %p276
      %p283 = scmp.eq.s32.totalorder %s21, 3
      %p284 = por %p282, %p283
      %p285 = scmp.ne.s32.totalorder %s277, %s280
      %p286 = scmp.eq.s32.totalorder %s21, 0
      %p287 = por %p285, %p286
      %p288 = scmp.ne.s32.totalorder %s277, %s280
      %p289 = scmp.eq.s32.totalorder %s26, 3
      %p290 = por %p288, %p289
      %p291 = scmp.ne.s32.totalorder %s280, %s281
      %p292 = scmp.eq.s32.totalorder %s26, 0
      %p293 = por %p291, %p292
      %p294 = scmp.ne.s32.totalorder %s280, %s281
      %p295 = scmp.eq.s32.totalorder %s27, 3
      %p296 = por %p294, %p295
      %p298 = scmp.ne.s32.totalorder %s281, %s297
      %p299 = scmp.eq.s32.totalorder %s27, 0
      %p300 = por %p298, %p299
      %p301 = scmp.le.s32.totalorder 1, %s21
      %p302 = scmp.lt.s32.totalorder %s21, 5
      %p303 = pnand %p301, %p302
      %p304 = pneg %p303
      // Predicated region
      $region9: #{rbse_layer.1} parent=5 // pred_check
        _
      $region10: #{rbse_layer.1} parent=5 // pred_check_branch
        %306 = sbr.rel (%p303) target = $region12
      $region11: #{rbse_layer.1} parent=5 // pred_region
        %s307 = ssub.s32 %s21, 1
      $region12: #{rbse_layer.1} parent=5 // pred_fallthru
        _
      %p308 = scmp.lt.s32.totalorder %s21, 4
      // Predicated region
      $region13: #{rbse_layer.1} parent=5 // pred_check
        %p309 = pneg %p308
      $region14: #{rbse_layer.1} parent=5 // pred_check_branch
        %311 = sbr.rel (%p309) target = $region16
      $region15: #{rbse_layer.1} parent=5 // pred_region
        // Predicated region
        $region17: #{rbse_layer.1} parent=15 // pred_check
          %p312 = pneg %p53
        $region18: #{rbse_layer.1} parent=15 // pred_check_branch
          %314 = sbr.rel (%p312) target = $region20
        $region19: #{rbse_layer.1} parent=15 // pred_region
          %p315 = scmp.lt.s32.totalorder %s28, 1
          %s316 = scalar_select %p315, %s28, 1
          %s317 = smul.addr %s316, 32
          %s318 = smul.addr %s317, 8
          %s319 = scalar_lea.vmem %s0, %s318
        $region20: #{rbse_layer.1} parent=15 // pred_fallthru
          _
        // Predicated region
        $region21: #{rbse_layer.1} parent=15 // pred_check
          %p320 = pneg %p79
        $region22: #{rbse_layer.1} parent=15 // pred_check_branch
          %322 = sbr.rel (%p320) target = $region24
        $region23: #{rbse_layer.1} parent=15 // pred_region
          %s323 = sand.u32 %s69, 1
          %s324 = scalar_lea.sflag [#allocation4], %s323
          %s325 = sand.u32 %s69, 1
          %s326 = smul.addr %s325, 576
          %s327 = scalar_lea.vmem [#allocation3], %s326
          %329 = vsyncadd %s324, 0
          %s330 = smul.addr %s29, 144
          %s331 = smul.addr %s330, 4
          %s332 = scalar_lea.hbm %s1, %s331
          %s333 = sshll.u32 %s332, 4
          %s334 = int_to_ptr.hbm [resolvable:$true] %s333
          %s335 = sshll.u32 %s327, 4
          %s336 = int_to_ptr.vmem [resolvable:$true] %s335
          %341 = dma.hbm_to_vmem [thread:$0]  %s334, 9216, %s336, %s324, 64, 64, 4
        $region24: #{rbse_layer.1} parent=15 // pred_fallthru
          _
        // Predicated region
        $region25: #{rbse_layer.1} parent=15 // pred_check
          %p342 = pneg %p105
        $region26: #{rbse_layer.1} parent=15 // pred_check_branch
          %344 = sbr.rel (%p342) target = $region28
        $region27: #{rbse_layer.1} parent=15 // pred_region
          %p345 = scmp.lt.s32.totalorder %s29, 1
          %s346 = scalar_select %p345, %s29, 1
          %s347 = scalar_lea.vmem %s2, %s346
        $region28: #{rbse_layer.1} parent=15 // pred_fallthru
          _
        // Predicated region
        $region29: #{rbse_layer.1} parent=15 // pred_check
          %p348 = pneg %p131
        $region30: #{rbse_layer.1} parent=15 // pred_check_branch
          %350 = sbr.rel (%p348) target = $region32
        $region31: #{rbse_layer.1} parent=15 // pred_region
          %s351 = sand.u32 %s121, 1
          %s352 = scalar_lea.sflag [#allocation6], %s351
          %s353 = sand.u32 %s121, 1
          %s354 = smul.addr %s353, 576
          %s355 = scalar_lea.vmem [#allocation5], %s354
          %357 = vsyncadd %s352, 0
          %s358 = smul.addr %s29, 144
          %s359 = smul.addr %s358, 4
          %s360 = scalar_lea.hbm %s3, %s359
          %s361 = sshll.u32 %s360, 4
          %s362 = int_to_ptr.hbm [resolvable:$true] %s361
          %s363 = sshll.u32 %s355, 4
          %s364 = int_to_ptr.vmem [resolvable:$true] %s363
          %369 = dma.hbm_to_vmem [thread:$0]  %s362, 9216, %s364, %s352, 64, 64, 4
        $region32: #{rbse_layer.1} parent=15 // pred_fallthru
          _
        // Predicated region
        $region33: #{rbse_layer.1} parent=15 // pred_check
          %p370 = pneg %p157
        $region34: #{rbse_layer.1} parent=15 // pred_check_branch
          %372 = sbr.rel (%p370) target = $region36
        $region35: #{rbse_layer.1} parent=15 // pred_region
          %p373 = scmp.lt.s32.totalorder %s29, 1
          %s374 = scalar_select %p373, %s29, 1
          %s375 = scalar_lea.vmem %s4, %s374
        $region36: #{rbse_layer.1} parent=15 // pred_fallthru
          _
        // Predicated region
        $region37: #{rbse_layer.1} parent=15 // pred_check
          %p376 = pneg %p183
        $region38: #{rbse_layer.1} parent=15 // pred_check_branch
          %378 = sbr.rel (%p376) target = $region40
        $region39: #{rbse_layer.1} parent=15 // pred_region
          %p379 = scmp.lt.s32.totalorder %s29, 1
          %s380 = scalar_select %p379, %s29, 1
          %s381 = smul.addr %s380, 16
          %s382 = smul.addr %s381, 8
          %s383 = scalar_lea.vmem %s5, %s382
        $region40: #{rbse_layer.1} parent=15 // pred_fallthru
          _
        // Predicated region
        $region41: #{rbse_layer.1} parent=15 // pred_check
          %p384 = pneg %p209
        $region42: #{rbse_layer.1} parent=15 // pred_check_branch
          %386 = sbr.rel (%p384) target = $region44
        $region43: #{rbse_layer.1} parent=15 // pred_region
          %p387 = scmp.lt.s32.totalorder %s29, 1
          %s388 = scalar_select %p387, %s29, 1
          %s389 = scalar_lea.vmem %s6, %s388
        $region44: #{rbse_layer.1} parent=15 // pred_fallthru
          _
        // Predicated region
        $region45: #{rbse_layer.1} parent=15 // pred_check
          %p390 = pneg %p235
        $region46: #{rbse_layer.1} parent=15 // pred_check_branch
          %392 = sbr.rel (%p390) target = $region48
        $region47: #{rbse_layer.1} parent=15 // pred_region
          %p393 = scmp.lt.s32.totalorder %s29, 1
          %s394 = scalar_select %p393, %s29, 1
          %s395 = smul.addr %s394, 4
          %s396 = smul.addr %s395, 8
          %s397 = scalar_lea.vmem %s7, %s396
        $region48: #{rbse_layer.1} parent=15 // pred_fallthru
          _
        // Predicated region
        $region49: #{rbse_layer.1} parent=15 // pred_check
          %p398 = pneg %p261
        $region50: #{rbse_layer.1} parent=15 // pred_check_branch
          %400 = sbr.rel (%p398) target = $region52
        $region51: #{rbse_layer.1} parent=15 // pred_region
          %p401 = scmp.lt.s32.totalorder %s29, 1
          %s402 = scalar_select %p401, %s29, 1
          %s403 = scalar_lea.vmem %s8, %s402
        $region52: #{rbse_layer.1} parent=15 // pred_fallthru
          _
      $region16: #{rbse_layer.1} parent=5 // pred_fallthru
        _
      %p404 = scmp.le.s32.totalorder 1, %s21
      %p405 = scmp.lt.s32.totalorder %s21, 5
      %p406 = pnand %p404, %p405
      %p407 = pneg %p406
      // Predicated region
      $region53: #{rbse_layer.1} parent=5 // pred_check
        _
      $region54: #{rbse_layer.1} parent=5 // pred_check_branch
        %409 = sbr.rel (%p406) target = $region56
      $region55: #{rbse_layer.1} parent=5 // pred_region
        %s410 = ssub.s32 %s21, 1
        %s411 = sand.u32 %s72, 1
        %s412 = scalar_lea.sflag [#allocation4], %s411
        %s413 = sand.u32 %s72, 1
        %s414 = smul.addr %s413, 576
        %s415 = scalar_lea.vmem [#allocation3], %s414
        // Predicated region
        $region57: #{rbse_layer.1} parent=55 // pred_check
          %p416 = pneg %p85
        $region58: #{rbse_layer.1} parent=55 // pred_check_branch
          %418 = sbr.rel (%p416) target = $region60
        $region59: #{rbse_layer.1} parent=55 // pred_region
          %420 = dma.done %s412, 9216
        $region60: #{rbse_layer.1} parent=55 // pred_fallthru
          _
        %s421 = sand.u32 %s124, 1
        %s422 = scalar_lea.sflag [#allocation6], %s421
        %s423 = sand.u32 %s124, 1
        %s424 = smul.addr %s423, 576
        %s425 = scalar_lea.vmem [#allocation5], %s424
        // Predicated region
        $region61: #{rbse_layer.1} parent=55 // pred_check
          %p426 = pneg %p137
        $region62: #{rbse_layer.1} parent=55 // pred_check_branch
          %428 = sbr.rel (%p426) target = $region64
        $region63: #{rbse_layer.1} parent=55 // pred_region
          %430 = dma.done %s422, 9216
        $region64: #{rbse_layer.1} parent=55 // pred_fallthru
          _
        %p431 = scmp.lt.s32.totalorder %s30, 1
        %s432 = scalar_select %p431, %s30, 1
        %s433 = smul.addr %s432, 32
        %s434 = smul.addr %s433, 8
        %s435 = scalar_lea.vmem %s0, %s434
        %p436 = pneg %p59
        %p437 = pneg %p56
        %s438 = sand.u32 %s72, 1
        %s439 = scalar_lea.sflag [#allocation4], %s438
        %s440 = sand.u32 %s72, 1
        %s441 = smul.addr %s440, 576
        %s442 = scalar_lea.vmem [#allocation3], %s441
        %p443 = pneg %p85
        %p444 = pneg %p82
        %p445 = scmp.lt.s32.totalorder %s31, 1
        %s446 = scalar_select %p445, %s31, 1
        %s447 = scalar_lea.vmem %s2, %s446
        %p448 = pneg %p111
        %p449 = pneg %p108
        %s450 = sand.u32 %s124, 1
        %s451 = scalar_lea.sflag [#allocation6], %s450
        %s452 = sand.u32 %s124, 1
        %s453 = smul.addr %s452, 576
        %s454 = scalar_lea.vmem [#allocation5], %s453
        %p455 = pneg %p137
        %p456 = pneg %p134
        %p457 = scmp.lt.s32.totalorder %s31, 1
        %s458 = scalar_select %p457, %s31, 1
        %s459 = scalar_lea.vmem %s4, %s458
        %p460 = pneg %p163
        %p461 = pneg %p160
        %p462 = scmp.lt.s32.totalorder %s31, 1
        %s463 = scalar_select %p462, %s31, 1
        %s464 = smul.addr %s463, 16
        %s465 = smul.addr %s464, 8
        %s466 = scalar_lea.vmem %s5, %s465
        %p467 = pneg %p189
        %p468 = pneg %p186
        %p469 = scmp.lt.s32.totalorder %s31, 1
        %s470 = scalar_select %p469, %s31, 1
        %s471 = scalar_lea.vmem %s6, %s470
        %p472 = pneg %p215
        %p473 = pneg %p212
        %p474 = scmp.lt.s32.totalorder %s31, 1
        %s475 = scalar_select %p474, %s31, 1
        %s476 = smul.addr %s475, 4
        %s477 = smul.addr %s476, 8
        %s478 = scalar_lea.vmem %s7, %s477
        %p479 = pneg %p241
        %p480 = pneg %p238
        %p481 = scmp.lt.s32.totalorder %s31, 1
        %s482 = scalar_select %p481, %s31, 1
        %s483 = scalar_lea.vmem %s8, %s482
        %p484 = pneg %p267
        %p485 = pneg %p264
        %p486 = pneg %p293
        %p487 = pneg %p290
        %p488 = scmp.lt.s32.totalorder %s30, 1
        %s489 = scalar_select %p488, %s30, 1
        %s490 = smul.addr %s489, 32
        %s491 = smul.addr %s490, 8
        %s492 = scalar_lea.vmem %s9, %s491
        %p493 = scmp.lt.s32.totalorder %s30, 1
        %s494 = scalar_select %p493, %s30, 1
        %s495 = smul.addr %s494, 32
        %s496 = smul.addr %s495, 8
        %s497 = scalar_lea.vmem %s0, %s496
        %p498 = scmp.lt.s32.totalorder %s31, 1
        %s499 = scalar_select %p498, %s31, 1
        %s500 = scalar_lea.vmem %s2, %s499
        %p501 = scmp.lt.s32.totalorder %s31, 1
        %s502 = scalar_select %p501, %s31, 1
        %s503 = scalar_lea.vmem %s4, %s502
        %p504 = scmp.lt.s32.totalorder %s31, 1
        %s505 = scalar_select %p504, %s31, 1
        %s506 = smul.addr %s505, 16
        %s507 = smul.addr %s506, 8
        %s508 = scalar_lea.vmem %s5, %s507
        %p509 = scmp.lt.s32.totalorder %s31, 1
        %s510 = scalar_select %p509, %s31, 1
        %s511 = scalar_lea.vmem %s6, %s510
        %p512 = scmp.lt.s32.totalorder %s31, 1
        %s513 = scalar_select %p512, %s31, 1
        %s514 = smul.addr %s513, 4
        %s515 = smul.addr %s514, 8
        %s516 = scalar_lea.vmem %s7, %s515
        %p517 = scmp.lt.s32.totalorder %s31, 1
        %s518 = scalar_select %p517, %s31, 1
        %s519 = scalar_lea.vmem %s8, %s518
        %p520 = scmp.lt.s32.totalorder %s30, 1
        %s521 = scalar_select %p520, %s30, 1
        %s522 = smul.addr %s521, 32
        %s523 = smul.addr %s522, 8
        %s524 = scalar_lea.vmem %s9, %s523
        %p525 = scmp.eq.s32.totalorder %s31, 0
        // Predicated region
        $region65: #{rbse_layer.1} parent=55 // pred_check
          %p526 = pneg %p525
        $region66: #{rbse_layer.1} parent=55 // pred_check_branch
          %528 = sbr.rel (%p526) target = $region68
        $region67: #{rbse_layer.1} parent=55 // pred_region
          %v529 = vld [vmem:[%s497] sm:$0xff]
          %v530 = vld [vmem:[%s497 + $0x8] sm:$0xff]
          %v531 = vld [vmem:[%s497 + $0x10] sm:$0xff]
          %v532 = vld [vmem:[%s497 + $0x18] sm:$0xff]
          %v533 = vld [vmem:[%s497 + $0x20] sm:$0xff]
          %v534 = vld [vmem:[%s497 + $0x28] sm:$0xff]
          %v535 = vld [vmem:[%s497 + $0x30] sm:$0xff]
          %v536 = vld [vmem:[%s497 + $0x38] sm:$0xff]
          %v537 = vld [vmem:[%s497 + $0x40] sm:$0xff]
          %v538 = vld [vmem:[%s497 + $0x48] sm:$0xff]
          %v539 = vld [vmem:[%s497 + $0x50] sm:$0xff]
          %v540 = vld [vmem:[%s497 + $0x58] sm:$0xff]
          %v541 = vld [vmem:[%s497 + $0x60] sm:$0xff]
          %v542 = vld [vmem:[%s497 + $0x68] sm:$0xff]
          %v543 = vld [vmem:[%s497 + $0x70] sm:$0xff]
          %v544 = vld [vmem:[%s497 + $0x78] sm:$0xff]
          %v545 = vld [vmem:[%s497 + $0x80] sm:$0xff]
          %v546 = vld [vmem:[%s497 + $0x88] sm:$0xff]
          %v547 = vld [vmem:[%s497 + $0x90] sm:$0xff]
          %v548 = vld [vmem:[%s497 + $0x98] sm:$0xff]
          %v549 = vld [vmem:[%s497 + $0xa0] sm:$0xff]
          %v550 = vld [vmem:[%s497 + $0xa8] sm:$0xff]
          %v551 = vld [vmem:[%s497 + $0xb0] sm:$0xff]
          %v552 = vld [vmem:[%s497 + $0xb8] sm:$0xff]
          %v553 = vld [vmem:[%s497 + $0xc0] sm:$0xff]
          %v554 = vld [vmem:[%s497 + $0xc8] sm:$0xff]
          %v555 = vld [vmem:[%s497 + $0xd0] sm:$0xff]
          %v556 = vld [vmem:[%s497 + $0xd8] sm:$0xff]
          %v557 = vld [vmem:[%s497 + $0xe0] sm:$0xff]
          %v558 = vld [vmem:[%s497 + $0xe8] sm:$0xff]
          %v559 = vld [vmem:[%s497 + $0xf0] sm:$0xff]
          %v560 = vld [vmem:[%s497 + $0xf8] sm:$0xff]
          %561 = vst [vmem:[#allocation2] sm:$0xff] %v529
          %562 = vst [vmem:[#allocation2 + $0x8] sm:$0xff] %v530
          %563 = vst [vmem:[#allocation2 + $0x10] sm:$0xff] %v531
          %564 = vst [vmem:[#allocation2 + $0x18] sm:$0xff] %v532
          %565 = vst [vmem:[#allocation2 + $0x20] sm:$0xff] %v533
          %566 = vst [vmem:[#allocation2 + $0x28] sm:$0xff] %v534
          %567 = vst [vmem:[#allocation2 + $0x30] sm:$0xff] %v535
          %568 = vst [vmem:[#allocation2 + $0x38] sm:$0xff] %v536
          %569 = vst [vmem:[#allocation2 + $0x40] sm:$0xff] %v537
          %570 = vst [vmem:[#allocation2 + $0x48] sm:$0xff] %v538
          %571 = vst [vmem:[#allocation2 + $0x50] sm:$0xff] %v539
          %572 = vst [vmem:[#allocation2 + $0x58] sm:$0xff] %v540
          %573 = vst [vmem:[#allocation2 + $0x60] sm:$0xff] %v541
          %574 = vst [vmem:[#allocation2 + $0x68] sm:$0xff] %v542
          %575 = vst [vmem:[#allocation2 + $0x70] sm:$0xff] %v543
          %576 = vst [vmem:[#allocation2 + $0x78] sm:$0xff] %v544
          %577 = vst [vmem:[#allocation2 + $0x80] sm:$0xff] %v545
          %578 = vst [vmem:[#allocation2 + $0x88] sm:$0xff] %v546
          %579 = vst [vmem:[#allocation2 + $0x90] sm:$0xff] %v547
          %580 = vst [vmem:[#allocation2 + $0x98] sm:$0xff] %v548
          %581 = vst [vmem:[#allocation2 + $0xa0] sm:$0xff] %v549
          %582 = vst [vmem:[#allocation2 + $0xa8] sm:$0xff] %v550
          %583 = vst [vmem:[#allocation2 + $0xb0] sm:$0xff] %v551
          %584 = vst [vmem:[#allocation2 + $0xb8] sm:$0xff] %v552
          %585 = vst [vmem:[#allocation2 + $0xc0] sm:$0xff] %v553
          %586 = vst [vmem:[#allocation2 + $0xc8] sm:$0xff] %v554
          %587 = vst [vmem:[#allocation2 + $0xd0] sm:$0xff] %v555
          %588 = vst [vmem:[#allocation2 + $0xd8] sm:$0xff] %v556
          %589 = vst [vmem:[#allocation2 + $0xe0] sm:$0xff] %v557
          %590 = vst [vmem:[#allocation2 + $0xe8] sm:$0xff] %v558
          %591 = vst [vmem:[#allocation2 + $0xf0] sm:$0xff] %v559
          %592 = vst [vmem:[#allocation2 + $0xf8] sm:$0xff] %v560
        $region68: #{rbse_layer.1} parent=55 // pred_fallthru
          _
        %v593 = vld [vmem:[#allocation2] sm:$0xff]
        %v594 = vld [vmem:[#allocation2 + $0x8] sm:$0xff]
        %v595 = vld [vmem:[#allocation2 + $0x10] sm:$0xff]
        %v596 = vld [vmem:[#allocation2 + $0x18] sm:$0xff]
        %v597 = vld [vmem:[#allocation2 + $0x20] sm:$0xff]
        %v598 = vld [vmem:[#allocation2 + $0x28] sm:$0xff]
        %v599 = vld [vmem:[#allocation2 + $0x30] sm:$0xff]
        %v600 = vld [vmem:[#allocation2 + $0x38] sm:$0xff]
        %v601 = vld [vmem:[#allocation2 + $0x40] sm:$0xff]
        %v602 = vld [vmem:[#allocation2 + $0x48] sm:$0xff]
        %v603 = vld [vmem:[#allocation2 + $0x50] sm:$0xff]
        %v604 = vld [vmem:[#allocation2 + $0x58] sm:$0xff]
        %v605 = vld [vmem:[#allocation2 + $0x60] sm:$0xff]
        %v606 = vld [vmem:[#allocation2 + $0x68] sm:$0xff]
        %v607 = vld [vmem:[#allocation2 + $0x70] sm:$0xff]
        %v608 = vld [vmem:[#allocation2 + $0x78] sm:$0xff]
        %v609 = vld [vmem:[#allocation2 + $0x80] sm:$0xff]
        %v610 = vld [vmem:[#allocation2 + $0x88] sm:$0xff]
        %v611 = vld [vmem:[#allocation2 + $0x90] sm:$0xff]
        %v612 = vld [vmem:[#allocation2 + $0x98] sm:$0xff]
        %v613 = vld [vmem:[#allocation2 + $0xa0] sm:$0xff]
        %v614 = vld [vmem:[#allocation2 + $0xa8] sm:$0xff]
        %v615 = vld [vmem:[#allocation2 + $0xb0] sm:$0xff]
        %v616 = vld [vmem:[#allocation2 + $0xb8] sm:$0xff]
        %v617 = vld [vmem:[#allocation2 + $0xc0] sm:$0xff]
        %v618 = vld [vmem:[#allocation2 + $0xc8] sm:$0xff]
        %v619 = vld [vmem:[#allocation2 + $0xd0] sm:$0xff]
        %v620 = vld [vmem:[#allocation2 + $0xd8] sm:$0xff]
        %v621 = vld [vmem:[#allocation2 + $0xe0] sm:$0xff]
        %v622 = vld [vmem:[#allocation2 + $0xe8] sm:$0xff]
        %v623 = vld [vmem:[#allocation2 + $0xf0] sm:$0xff]
        %v624 = vld [vmem:[#allocation2 + $0xf8] sm:$0xff]
        %v625 = vld [vmem:[%s415] sm:$0xf]
        %v626 = vld [vmem:[%s415 + $0x4] sm:$0xf]
        %v627 = vld [vmem:[%s415 + $0x8] sm:$0xf]
        %v628 = vld [vmem:[%s415 + $0xc] sm:$0xf]
        %v629 = vld [vmem:[%s415 + $0x10] sm:$0xf]
        %v630 = vld [vmem:[%s415 + $0x14] sm:$0xf]
        %v631 = vld [vmem:[%s415 + $0x18] sm:$0xf]
        %v632 = vld [vmem:[%s415 + $0x1c] sm:$0xf]
        %v633 = vld [vmem:[%s415 + $0x20] sm:$0xf]
        %v634 = vld [vmem:[%s415 + $0x24] sm:$0xf]
        %v635 = vld [vmem:[%s415 + $0x28] sm:$0xf]
        %v636 = vld [vmem:[%s415 + $0x2c] sm:$0xf]
        %v637 = vld [vmem:[%s415 + $0x30] sm:$0xf]
        %v638 = vld [vmem:[%s415 + $0x34] sm:$0xf]
        %v639 = vld [vmem:[%s415 + $0x38] sm:$0xf]
        %v640 = vld [vmem:[%s415 + $0x3c] sm:$0xf]
        %v641 = vld [vmem:[%s415 + $0x40] sm:$0xf]
        %v642 = vld [vmem:[%s415 + $0x44] sm:$0xf]
        %v643 = vld [vmem:[%s415 + $0x48] sm:$0xf]
        %v644 = vld [vmem:[%s415 + $0x4c] sm:$0xf]
        %v645 = vld [vmem:[%s415 + $0x50] sm:$0xf]
        %v646 = vld [vmem:[%s415 + $0x54] sm:$0xf]
        %v647 = vld [vmem:[%s415 + $0x58] sm:$0xf]
        %v648 = vld [vmem:[%s415 + $0x5c] sm:$0xf]
        %v649 = vld [vmem:[%s415 + $0x60] sm:$0xf]
        %v650 = vld [vmem:[%s415 + $0x64] sm:$0xf]
        %v651 = vld [vmem:[%s415 + $0x68] sm:$0xf]
        %v652 = vld [vmem:[%s415 + $0x6c] sm:$0xf]
        %v653 = vld [vmem:[%s415 + $0x70] sm:$0xf]
        %v654 = vld [vmem:[%s415 + $0x74] sm:$0xf]
        %v655 = vld [vmem:[%s415 + $0x78] sm:$0xf]
        %v656 = vld [vmem:[%s415 + $0x7c] sm:$0xf]
        %v657 = vld [vmem:[%s415 + $0x80] sm:$0xf]
        %v658 = vld [vmem:[%s415 + $0x84] sm:$0xf]
        %v659 = vld [vmem:[%s415 + $0x88] sm:$0xf]
        %v660 = vld [vmem:[%s415 + $0x8c] sm:$0xf]
        %v661 = vld [vmem:[%s415 + $0x90] sm:$0xf]
        %v662 = vld [vmem:[%s415 + $0x94] sm:$0xf]
        %v663 = vld [vmem:[%s415 + $0x98] sm:$0xf]
        %v664 = vld [vmem:[%s415 + $0x9c] sm:$0xf]
        %v665 = vld [vmem:[%s415 + $0xa0] sm:$0xf]
        %v666 = vld [vmem:[%s415 + $0xa4] sm:$0xf]
        %v667 = vld [vmem:[%s415 + $0xa8] sm:$0xf]
        %v668 = vld [vmem:[%s415 + $0xac] sm:$0xf]
        %v669 = vld [vmem:[%s415 + $0xb0] sm:$0xf]
        %v670 = vld [vmem:[%s415 + $0xb4] sm:$0xf]
        %v671 = vld [vmem:[%s415 + $0xb8] sm:$0xf]
        %v672 = vld [vmem:[%s415 + $0xbc] sm:$0xf]
        %v673 = vld [vmem:[%s415 + $0xc0] sm:$0xf]
        %v674 = vld [vmem:[%s415 + $0xc4] sm:$0xf]
        %v675 = vld [vmem:[%s415 + $0xc8] sm:$0xf]
        %v676 = vld [vmem:[%s415 + $0xcc] sm:$0xf]
        %v677 = vld [vmem:[%s415 + $0xd0] sm:$0xf]
        %v678 = vld [vmem:[%s415 + $0xd4] sm:$0xf]
        %v679 = vld [vmem:[%s415 + $0xd8] sm:$0xf]
        %v680 = vld [vmem:[%s415 + $0xdc] sm:$0xf]
        %v681 = vld [vmem:[%s415 + $0xe0] sm:$0xf]
        %v682 = vld [vmem:[%s415 + $0xe4] sm:$0xf]
        %v683 = vld [vmem:[%s415 + $0xe8] sm:$0xf]
        %v684 = vld [vmem:[%s415 + $0xec] sm:$0xf]
        %v685 = vld [vmem:[%s415 + $0xf0] sm:$0xf]
        %v686 = vld [vmem:[%s415 + $0xf4] sm:$0xf]
        %v687 = vld [vmem:[%s415 + $0xf8] sm:$0xf]
        %v688 = vld [vmem:[%s415 + $0xfc] sm:$0xf]
        %v689 = vld [vmem:[%s415 + $0x100] sm:$0xf]
        %v690 = vld [vmem:[%s415 + $0x104] sm:$0xf]
        %v691 = vld [vmem:[%s415 + $0x108] sm:$0xf]
        %v692 = vld [vmem:[%s415 + $0x10c] sm:$0xf]
        %v693 = vld [vmem:[%s415 + $0x110] sm:$0xf]
        %v694 = vld [vmem:[%s415 + $0x114] sm:$0xf]
        %v695 = vld [vmem:[%s415 + $0x118] sm:$0xf]
        %v696 = vld [vmem:[%s415 + $0x11c] sm:$0xf]
        %v697 = vld [vmem:[%s415 + $0x120] sm:$0xf]
        %v698 = vld [vmem:[%s415 + $0x124] sm:$0xf]
        %v699 = vld [vmem:[%s415 + $0x128] sm:$0xf]
        %v700 = vld [vmem:[%s415 + $0x12c] sm:$0xf]
        %v701 = vld [vmem:[%s415 + $0x130] sm:$0xf]
        %v702 = vld [vmem:[%s415 + $0x134] sm:$0xf]
        %v703 = vld [vmem:[%s415 + $0x138] sm:$0xf]
        %v704 = vld [vmem:[%s415 + $0x13c] sm:$0xf]
        %v705 = vld [vmem:[%s415 + $0x140] sm:$0xf]
        %v706 = vld [vmem:[%s415 + $0x144] sm:$0xf]
        %v707 = vld [vmem:[%s415 + $0x148] sm:$0xf]
        %v708 = vld [vmem:[%s415 + $0x14c] sm:$0xf]
        %v709 = vld [vmem:[%s415 + $0x150] sm:$0xf]
        %v710 = vld [vmem:[%s415 + $0x154] sm:$0xf]
        %v711 = vld [vmem:[%s415 + $0x158] sm:$0xf]
        %v712 = vld [vmem:[%s415 + $0x15c] sm:$0xf]
        %v713 = vld [vmem:[%s415 + $0x160] sm:$0xf]
        %v714 = vld [vmem:[%s415 + $0x164] sm:$0xf]
        %v715 = vld [vmem:[%s415 + $0x168] sm:$0xf]
        %v716 = vld [vmem:[%s415 + $0x16c] sm:$0xf]
        %v717 = vld [vmem:[%s415 + $0x170] sm:$0xf]
        %v718 = vld [vmem:[%s415 + $0x174] sm:$0xf]
        %v719 = vld [vmem:[%s415 + $0x178] sm:$0xf]
        %v720 = vld [vmem:[%s415 + $0x17c] sm:$0xf]
        %v721 = vld [vmem:[%s415 + $0x180] sm:$0xf]
        %v722 = vld [vmem:[%s415 + $0x184] sm:$0xf]
        %v723 = vld [vmem:[%s415 + $0x188] sm:$0xf]
        %v724 = vld [vmem:[%s415 + $0x18c] sm:$0xf]
        %v725 = vld [vmem:[%s415 + $0x190] sm:$0xf]
        %v726 = vld [vmem:[%s415 + $0x194] sm:$0xf]
        %v727 = vld [vmem:[%s415 + $0x198] sm:$0xf]
        %v728 = vld [vmem:[%s415 + $0x19c] sm:$0xf]
        %v729 = vld [vmem:[%s415 + $0x1a0] sm:$0xf]
        %v730 = vld [vmem:[%s415 + $0x1a4] sm:$0xf]
        %v731 = vld [vmem:[%s415 + $0x1a8] sm:$0xf]
        %v732 = vld [vmem:[%s415 + $0x1ac] sm:$0xf]
        %v733 = vld [vmem:[%s415 + $0x1b0] sm:$0xf]
        %v734 = vld [vmem:[%s415 + $0x1b4] sm:$0xf]
        %v735 = vld [vmem:[%s415 + $0x1b8] sm:$0xf]
        %v736 = vld [vmem:[%s415 + $0x1bc] sm:$0xf]
        %v737 = vld [vmem:[%s415 + $0x1c0] sm:$0xf]
        %v738 = vld [vmem:[%s415 + $0x1c4] sm:$0xf]
        %v739 = vld [vmem:[%s415 + $0x1c8] sm:$0xf]
        %v740 = vld [vmem:[%s415 + $0x1cc] sm:$0xf]
        %v741 = vld [vmem:[%s415 + $0x1d0] sm:$0xf]
        %v742 = vld [vmem:[%s415 + $0x1d4] sm:$0xf]
        %v743 = vld [vmem:[%s415 + $0x1d8] sm:$0xf]
        %v744 = vld [vmem:[%s415 + $0x1dc] sm:$0xf]
        %v745 = vld [vmem:[%s415 + $0x1e0] sm:$0xf]
        %v746 = vld [vmem:[%s415 + $0x1e4] sm:$0xf]
        %v747 = vld [vmem:[%s415 + $0x1e8] sm:$0xf]
        %v748 = vld [vmem:[%s415 + $0x1ec] sm:$0xf]
        %v749 = vld [vmem:[%s415 + $0x1f0] sm:$0xf]
        %v750 = vld [vmem:[%s415 + $0x1f4] sm:$0xf]
        %v751 = vld [vmem:[%s415 + $0x1f8] sm:$0xf]
        %v752 = vld [vmem:[%s415 + $0x1fc] sm:$0xf]
        %v753 = vld [vmem:[%s415 + $0x200] sm:$0xf]
        %v754 = vld [vmem:[%s415 + $0x204] sm:$0xf]
        %v755 = vld [vmem:[%s415 + $0x208] sm:$0xf]
        %v756 = vld [vmem:[%s415 + $0x20c] sm:$0xf]
        %v757 = vld [vmem:[%s415 + $0x210] sm:$0xf]
        %v758 = vld [vmem:[%s415 + $0x214] sm:$0xf]
        %v759 = vld [vmem:[%s415 + $0x218] sm:$0xf]
        %v760 = vld [vmem:[%s415 + $0x21c] sm:$0xf]
        %v761 = vld [vmem:[%s415 + $0x220] sm:$0xf]
        %v762 = vld [vmem:[%s415 + $0x224] sm:$0xf]
        %v763 = vld [vmem:[%s415 + $0x228] sm:$0xf]
        %v764 = vld [vmem:[%s415 + $0x22c] sm:$0xf]
        %v765 = vld [vmem:[%s415 + $0x230] sm:$0xf]
        %v766 = vld [vmem:[%s415 + $0x234] sm:$0xf]
        %v767 = vld [vmem:[%s415 + $0x238] sm:$0xf]
        %v768 = vld [vmem:[%s415 + $0x23c] sm:$0xf]
        %v769 = vld [vmem:[%s500] sm:$0x1]
        %v786 = vrot.slane %v595, 1
        %v787 = vrot.slane %v593, 1
        %v788 = vrot.slane %v597, 1
        %v789 = vrot.slane %v599, 1
        %v790 = vrot.slane %v601, 1
        %v791 = vrot.slane %v603, 1
        %v792 = vrot.slane %v605, 1
        %v793 = vrot.slane %v607, 1
        %v794 = vrot.slane %v609, 1
        %v795 = vrot.slane %v611, 1
        %v796 = vrot.slane %v613, 1
        %v797 = vrot.slane %v615, 1
        %v798 = vrot.slane %v617, 1
        %v799 = vrot.slane %v619, 1
        %v800 = vrot.slane %v621, 1
        %v801 = vrot.slane %v623, 1
        %vm834 = vcmask 1040384
        %v835 = vrot.slane %v595, 7
        %v836 = vrot.slane %v596, 7
        %v837 = vsel %vm834, %v835, %v836
        %v838 = vrot.slane %v593, 7
        %v839 = vrot.slane %v594, 7
        %v840 = vsel %vm834, %v838, %v839
        %v841 = vrot.slane %v597, 7
        %v842 = vrot.slane %v598, 7
        %v843 = vsel %vm834, %v841, %v842
        %v844 = vrot.slane %v599, 7
        %v845 = vrot.slane %v600, 7
        %v846 = vsel %vm834, %v844, %v845
        %v847 = vrot.slane %v601, 7
        %v848 = vrot.slane %v602, 7
        %v849 = vsel %vm834, %v847, %v848
        %v850 = vrot.slane %v603, 7
        %v851 = vrot.slane %v604, 7
        %v852 = vsel %vm834, %v850, %v851
        %v853 = vrot.slane %v605, 7
        %v854 = vrot.slane %v606, 7
        %v855 = vsel %vm834, %v853, %v854
        %v856 = vrot.slane %v607, 7
        %v857 = vrot.slane %v608, 7
        %v858 = vsel %vm834, %v856, %v857
        %v859 = vrot.slane %v609, 7
        %v860 = vrot.slane %v610, 7
        %v861 = vsel %vm834, %v859, %v860
        %v862 = vrot.slane %v611, 7
        %v863 = vrot.slane %v612, 7
        %v864 = vsel %vm834, %v862, %v863
        %v865 = vrot.slane %v613, 7
        %v866 = vrot.slane %v614, 7
        %v867 = vsel %vm834, %v865, %v866
        %v868 = vrot.slane %v615, 7
        %v869 = vrot.slane %v616, 7
        %v870 = vsel %vm834, %v868, %v869
        %v871 = vrot.slane %v617, 7
        %v872 = vrot.slane %v618, 7
        %v873 = vsel %vm834, %v871, %v872
        %v874 = vrot.slane %v619, 7
        %v875 = vrot.slane %v620, 7
        %v876 = vsel %vm834, %v874, %v875
        %v877 = vrot.slane %v621, 7
        %v878 = vrot.slane %v622, 7
        %v879 = vsel %vm834, %v877, %v878
        %v880 = vrot.slane %v623, 7
        %v881 = vrot.slane %v624, 7
        %v882 = vsel %vm834, %v880, %v881
        %v931 = vrot.slane %v596, 5
        %v932 = vrot.slane %v594, 5
        %v933 = vrot.slane %v598, 5
        %v934 = vrot.slane %v600, 5
        %v935 = vrot.slane %v602, 5
        %v936 = vrot.slane %v604, 5
        %v937 = vrot.slane %v606, 5
        %v938 = vrot.slane %v608, 5
        %v939 = vrot.slane %v610, 5
        %v940 = vrot.slane %v612, 5
        %v941 = vrot.slane %v614, 5
        %v942 = vrot.slane %v616, 5
        %v943 = vrot.slane %v618, 5
        %v944 = vrot.slane %v620, 5
        %v945 = vrot.slane %v622, 5
        %v946 = vrot.slane %v624, 5
        %v963 = vsel %vm834, %v786, %v835
        %v964 = vsel %vm834, %v787, %v838
        %v965 = vsel %vm834, %v788, %v841
        %v966 = vsel %vm834, %v789, %v844
        %v967 = vsel %vm834, %v790, %v847
        %v968 = vsel %vm834, %v791, %v850
        %v969 = vsel %vm834, %v792, %v853
        %v970 = vsel %vm834, %v793, %v856
        %v971 = vsel %vm834, %v794, %v859
        %v972 = vsel %vm834, %v795, %v862
        %v973 = vsel %vm834, %v796, %v865
        %v974 = vsel %vm834, %v797, %v868
        %v975 = vsel %vm834, %v798, %v871
        %v976 = vsel %vm834, %v799, %v874
        %v977 = vsel %vm834, %v800, %v877
        %v978 = vsel %vm834, %v801, %v880
        %v979 = vsel %vm834, %v836, %v931
        %v980 = vsel %vm834, %v839, %v932
        %v981 = vsel %vm834, %v842, %v933
        %v982 = vsel %vm834, %v845, %v934
        %v983 = vsel %vm834, %v848, %v935
        %v984 = vsel %vm834, %v851, %v936
        %v985 = vsel %vm834, %v854, %v937
        %v986 = vsel %vm834, %v857, %v938
        %v987 = vsel %vm834, %v860, %v939
        %v988 = vsel %vm834, %v863, %v940
        %v989 = vsel %vm834, %v866, %v941
        %v990 = vsel %vm834, %v869, %v942
        %v991 = vsel %vm834, %v872, %v943
        %v992 = vsel %vm834, %v875, %v944
        %v993 = vsel %vm834, %v878, %v945
        %v994 = vsel %vm834, %v881, %v946
        %vm1025 = vcmask 1046528
        %v1026 = vrot.slane %v963, 1
        %v1027 = vrot.slane %v837, 1
        %v1028 = vsel %vm1025, %v1026, %v1027
        %v1029 = vrot.slane %v979, 1
        %v1030 = vsel %vm1025, %v1027, %v1029
        %v1031 = vrot.slane %v964, 1
        %v1032 = vrot.slane %v840, 1
        %v1033 = vsel %vm1025, %v1031, %v1032
        %v1034 = vrot.slane %v980, 1
        %v1035 = vsel %vm1025, %v1032, %v1034
        %v1036 = vrot.slane %v965, 1
        %v1037 = vrot.slane %v843, 1
        %v1038 = vsel %vm1025, %v1036, %v1037
        %v1039 = vrot.slane %v981, 1
        %v1040 = vsel %vm1025, %v1037, %v1039
        %v1041 = vrot.slane %v966, 1
        %v1042 = vrot.slane %v846, 1
        %v1043 = vsel %vm1025, %v1041, %v1042
        %v1044 = vrot.slane %v982, 1
        %v1045 = vsel %vm1025, %v1042, %v1044
        %v1046 = vrot.slane %v967, 1
        %v1047 = vrot.slane %v849, 1
        %v1048 = vsel %vm1025, %v1046, %v1047
        %v1049 = vrot.slane %v983, 1
        %v1050 = vsel %vm1025, %v1047, %v1049
        %v1051 = vrot.slane %v968, 1
        %v1052 = vrot.slane %v852, 1
        %v1053 = vsel %vm1025, %v1051, %v1052
        %v1054 = vrot.slane %v984, 1
        %v1055 = vsel %vm1025, %v1052, %v1054
        %v1056 = vrot.slane %v969, 1
        %v1057 = vrot.slane %v855, 1
        %v1058 = vsel %vm1025, %v1056, %v1057
        %v1059 = vrot.slane %v985, 1
        %v1060 = vsel %vm1025, %v1057, %v1059
        %v1061 = vrot.slane %v970, 1
        %v1062 = vrot.slane %v858, 1
        %v1063 = vsel %vm1025, %v1061, %v1062
        %v1064 = vrot.slane %v986, 1
        %v1065 = vsel %vm1025, %v1062, %v1064
        %v1066 = vrot.slane %v971, 1
        %v1067 = vrot.slane %v861, 1
        %v1068 = vsel %vm1025, %v1066, %v1067
        %v1069 = vrot.slane %v987, 1
        %v1070 = vsel %vm1025, %v1067, %v1069
        %v1071 = vrot.slane %v972, 1
        %v1072 = vrot.slane %v864, 1
        %v1073 = vsel %vm1025, %v1071, %v1072
        %v1074 = vrot.slane %v988, 1
        %v1075 = vsel %vm1025, %v1072, %v1074
        %v1076 = vrot.slane %v973, 1
        %v1077 = vrot.slane %v867, 1
        %v1078 = vsel %vm1025, %v1076, %v1077
        %v1079 = vrot.slane %v989, 1
        %v1080 = vsel %vm1025, %v1077, %v1079
        %v1081 = vrot.slane %v974, 1
        %v1082 = vrot.slane %v870, 1
        %v1083 = vsel %vm1025, %v1081, %v1082
        %v1084 = vrot.slane %v990, 1
        %v1085 = vsel %vm1025, %v1082, %v1084
        %v1086 = vrot.slane %v975, 1
        %v1087 = vrot.slane %v873, 1
        %v1088 = vsel %vm1025, %v1086, %v1087
        %v1089 = vrot.slane %v991, 1
        %v1090 = vsel %vm1025, %v1087, %v1089
        %v1091 = vrot.slane %v976, 1
        %v1092 = vrot.slane %v876, 1
        %v1093 = vsel %vm1025, %v1091, %v1092
        %v1094 = vrot.slane %v992, 1
        %v1095 = vsel %vm1025, %v1092, %v1094
        %v1096 = vrot.slane %v977, 1
        %v1097 = vrot.slane %v879, 1
        %v1098 = vsel %vm1025, %v1096, %v1097
        %v1099 = vrot.slane %v993, 1
        %v1100 = vsel %vm1025, %v1097, %v1099
        %vm1131 = vcmask 1045504
        %v1132 = vrot.slane %v963, 2
        %v1133 = vrot.slane %v837, 2
        %v1134 = vsel %vm1131, %v1132, %v1133
        %v1135 = vrot.slane %v979, 2
        %v1136 = vsel %vm1131, %v1133, %v1135
        %v1137 = vrot.slane %v964, 2
        %v1138 = vrot.slane %v840, 2
        %v1139 = vsel %vm1131, %v1137, %v1138
        %v1140 = vrot.slane %v980, 2
        %v1141 = vsel %vm1131, %v1138, %v1140
        %v1142 = vrot.slane %v965, 2
        %v1143 = vrot.slane %v843, 2
        %v1144 = vsel %vm1131, %v1142, %v1143
        %v1145 = vrot.slane %v981, 2
        %v1146 = vsel %vm1131, %v1143, %v1145
        %v1147 = vrot.slane %v966, 2
        %v1148 = vrot.slane %v846, 2
        %v1149 = vsel %vm1131, %v1147, %v1148
        %v1150 = vrot.slane %v982, 2
        %v1151 = vsel %vm1131, %v1148, %v1150
        %v1152 = vrot.slane %v967, 2
        %v1153 = vrot.slane %v849, 2
        %v1154 = vsel %vm1131, %v1152, %v1153
        %v1155 = vrot.slane %v983, 2
        %v1156 = vsel %vm1131, %v1153, %v1155
        %v1157 = vrot.slane %v968, 2
        %v1158 = vrot.slane %v852, 2
        %v1159 = vsel %vm1131, %v1157, %v1158
        %v1160 = vrot.slane %v984, 2
        %v1161 = vsel %vm1131, %v1158, %v1160
        %v1162 = vrot.slane %v969, 2
        %v1163 = vrot.slane %v855, 2
        %v1164 = vsel %vm1131, %v1162, %v1163
        %v1165 = vrot.slane %v985, 2
        %v1166 = vsel %vm1131, %v1163, %v1165
        %v1167 = vrot.slane %v970, 2
        %v1168 = vrot.slane %v858, 2
        %v1169 = vsel %vm1131, %v1167, %v1168
        %v1170 = vrot.slane %v986, 2
        %v1171 = vsel %vm1131, %v1168, %v1170
        %v1172 = vrot.slane %v971, 2
        %v1173 = vrot.slane %v861, 2
        %v1174 = vsel %vm1131, %v1172, %v1173
        %v1175 = vrot.slane %v987, 2
        %v1176 = vsel %vm1131, %v1173, %v1175
        %v1177 = vrot.slane %v972, 2
        %v1178 = vrot.slane %v864, 2
        %v1179 = vsel %vm1131, %v1177, %v1178
        %v1180 = vrot.slane %v988, 2
        %v1181 = vsel %vm1131, %v1178, %v1180
        %v1182 = vrot.slane %v973, 2
        %v1183 = vrot.slane %v867, 2
        %v1184 = vsel %vm1131, %v1182, %v1183
        %v1185 = vrot.slane %v989, 2
        %v1186 = vsel %vm1131, %v1183, %v1185
        %v1187 = vrot.slane %v974, 2
        %v1188 = vrot.slane %v870, 2
        %v1189 = vsel %vm1131, %v1187, %v1188
        %v1190 = vrot.slane %v990, 2
        %v1191 = vsel %vm1131, %v1188, %v1190
        %v1192 = vrot.slane %v975, 2
        %v1193 = vrot.slane %v873, 2
        %v1194 = vsel %vm1131, %v1192, %v1193
        %v1195 = vrot.slane %v991, 2
        %v1196 = vsel %vm1131, %v1193, %v1195
        %v1197 = vrot.slane %v976, 2
        %v1198 = vrot.slane %v876, 2
        %v1199 = vsel %vm1131, %v1197, %v1198
        %v1200 = vrot.slane %v992, 2
        %v1201 = vsel %vm1131, %v1198, %v1200
        %v1202 = vrot.slane %v977, 2
        %v1203 = vrot.slane %v879, 2
        %v1204 = vsel %vm1131, %v1202, %v1203
        %v1205 = vrot.slane %v993, 2
        %v1206 = vsel %vm1131, %v1203, %v1205
        %v1239 = vrot.slane %v978, 1
        %v1240 = vrot.slane %v882, 1
        %v1241 = vsel %vm1025, %v1239, %v1240
        %v1242 = vrot.slane %v994, 1
        %v1243 = vsel %vm1025, %v1240, %v1242
        %v1246 = vrot.slane %v978, 2
        %v1247 = vrot.slane %v882, 2
        %v1248 = vsel %vm1131, %v1246, %v1247
        %v1249 = vrot.slane %v994, 2
        %v1250 = vsel %vm1131, %v1247, %v1249
        %v1253 = vpack.c.bf16 %v837, %v963
        %v1254 = vpack.c.bf16 %v1030, %v1028
        %v1255 = vpack.c.bf16 %v1136, %v1134
        %v1256 = vpack.c.bf16 %v840, %v964
        %v1257 = vpack.c.bf16 %v1035, %v1033
        %v1258 = vpack.c.bf16 %v1141, %v1139
        %v1259 = vpack.c.bf16 %v843, %v965
        %v1260 = vpack.c.bf16 %v1040, %v1038
        %v1261 = vpack.c.bf16 %v1146, %v1144
        %v1262 = vpack.c.bf16 %v846, %v966
        %v1263 = vpack.c.bf16 %v1045, %v1043
        %v1264 = vpack.c.bf16 %v1151, %v1149
        %v1265 = vpack.c.bf16 %v849, %v967
        %v1266 = vpack.c.bf16 %v1050, %v1048
        %v1267 = vpack.c.bf16 %v1156, %v1154
        %v1268 = vpack.c.bf16 %v852, %v968
        %v1269 = vpack.c.bf16 %v1055, %v1053
        %v1270 = vpack.c.bf16 %v1161, %v1159
        %v1271 = vpack.c.bf16 %v855, %v969
        %v1272 = vpack.c.bf16 %v1060, %v1058
        %v1273 = vpack.c.bf16 %v1166, %v1164
        %v1274 = vpack.c.bf16 %v858, %v970
        %v1275 = vpack.c.bf16 %v1065, %v1063
        %v1276 = vpack.c.bf16 %v1171, %v1169
        %v1277 = vpack.c.bf16 %v861, %v971
        %v1278 = vpack.c.bf16 %v1070, %v1068
        %v1279 = vpack.c.bf16 %v1176, %v1174
        %v1280 = vpack.c.bf16 %v864, %v972
        %v1281 = vpack.c.bf16 %v1075, %v1073
        %v1282 = vpack.c.bf16 %v1181, %v1179
        %v1283 = vpack.c.bf16 %v867, %v973
        %v1284 = vpack.c.bf16 %v1080, %v1078
        %v1285 = vpack.c.bf16 %v1186, %v1184
        %v1286 = vpack.c.bf16 %v870, %v974
        %v1287 = vpack.c.bf16 %v1085, %v1083
        %v1288 = vpack.c.bf16 %v1191, %v1189
        %v1289 = vpack.c.bf16 %v873, %v975
        %v1290 = vpack.c.bf16 %v1090, %v1088
        %v1291 = vpack.c.bf16 %v1196, %v1194
        %v1292 = vpack.c.bf16 %v876, %v976
        %v1293 = vpack.c.bf16 %v1095, %v1093
        %v1294 = vpack.c.bf16 %v1201, %v1199
        %v1295 = vpack.c.bf16 %v879, %v977
        %v1296 = vpack.c.bf16 %v1100, %v1098
        %v1297 = vpack.c.bf16 %v1206, %v1204
        %v1298 = vpack.c.bf16 %v882, %v978
        %v1299 = vpack.c.bf16 %v1243, %v1241
        %v1300 = vpack.c.bf16 %v1250, %v1248
        %v1445 = vunpack.c.l.b16 %v625
        %v1446 = vunpack.c.l.b16 %v626
        %v1447 = vunpack.c.l.b16 %v627
        %v1448 = vunpack.c.l.b16 %v628
        %v1449 = vunpack.c.l.b16 %v629
        %v1450 = vunpack.c.l.b16 %v630
        %v1451 = vunpack.c.l.b16 %v631
        %v1452 = vunpack.c.l.b16 %v632
        %v1453 = vunpack.c.l.b16 %v633
        %v1454 = vunpack.c.l.b16 %v634
        %v1455 = vunpack.c.l.b16 %v635
        %v1456 = vunpack.c.l.b16 %v636
        %v1457 = vunpack.c.l.b16 %v637
        %v1458 = vunpack.c.l.b16 %v638
        %v1459 = vunpack.c.l.b16 %v639
        %v1460 = vunpack.c.l.b16 %v640
        %v1461 = vunpack.c.l.b16 %v641
        %v1462 = vunpack.c.l.b16 %v642
        %v1463 = vunpack.c.l.b16 %v643
        %v1464 = vunpack.c.l.b16 %v644
        %v1465 = vunpack.c.l.b16 %v645
        %v1466 = vunpack.c.l.b16 %v646
        %v1467 = vunpack.c.l.b16 %v647
        %v1468 = vunpack.c.l.b16 %v648
        %v1469 = vunpack.c.l.b16 %v649
        %v1470 = vunpack.c.l.b16 %v650
        %v1471 = vunpack.c.l.b16 %v651
        %v1472 = vunpack.c.l.b16 %v652
        %v1473 = vunpack.c.l.b16 %v653
        %v1474 = vunpack.c.l.b16 %v654
        %v1475 = vunpack.c.l.b16 %v655
        %v1476 = vunpack.c.l.b16 %v656
        %v1477 = vunpack.c.l.b16 %v657
        %v1478 = vunpack.c.l.b16 %v658
        %v1479 = vunpack.c.l.b16 %v659
        %v1480 = vunpack.c.l.b16 %v660
        %v1481 = vunpack.c.l.b16 %v661
        %v1482 = vunpack.c.l.b16 %v662
        %v1483 = vunpack.c.l.b16 %v663
        %v1484 = vunpack.c.l.b16 %v664
        %v1485 = vunpack.c.l.b16 %v665
        %v1486 = vunpack.c.l.b16 %v666
        %v1487 = vunpack.c.l.b16 %v667
        %v1488 = vunpack.c.l.b16 %v668
        %v1489 = vunpack.c.l.b16 %v669
        %v1490 = vunpack.c.l.b16 %v670
        %v1491 = vunpack.c.l.b16 %v671
        %v1492 = vunpack.c.l.b16 %v672
        %v1493 = vunpack.c.l.b16 %v673
        %v1494 = vunpack.c.l.b16 %v674
        %v1495 = vunpack.c.l.b16 %v675
        %v1496 = vunpack.c.l.b16 %v676
        %v1497 = vunpack.c.l.b16 %v677
        %v1498 = vunpack.c.l.b16 %v678
        %v1499 = vunpack.c.l.b16 %v679
        %v1500 = vunpack.c.l.b16 %v680
        %v1501 = vunpack.c.l.b16 %v681
        %v1502 = vunpack.c.l.b16 %v682
        %v1503 = vunpack.c.l.b16 %v683
        %v1504 = vunpack.c.l.b16 %v684
        %v1505 = vunpack.c.l.b16 %v685
        %v1506 = vunpack.c.l.b16 %v686
        %v1507 = vunpack.c.l.b16 %v687
        %v1508 = vunpack.c.l.b16 %v688
        %v1509 = vunpack.c.l.b16 %v689
        %v1510 = vunpack.c.l.b16 %v690
        %v1511 = vunpack.c.l.b16 %v691
        %v1512 = vunpack.c.l.b16 %v692
        %v1513 = vunpack.c.l.b16 %v693
        %v1514 = vunpack.c.l.b16 %v694
        %v1515 = vunpack.c.l.b16 %v695
        %v1516 = vunpack.c.l.b16 %v696
        %v1517 = vunpack.c.l.b16 %v697
        %v1518 = vunpack.c.l.b16 %v698
        %v1519 = vunpack.c.l.b16 %v699
        %v1520 = vunpack.c.l.b16 %v700
        %v1521 = vunpack.c.l.b16 %v701
        %v1522 = vunpack.c.l.b16 %v702
        %v1523 = vunpack.c.l.b16 %v703
        %v1524 = vunpack.c.l.b16 %v704
        %v1525 = vunpack.c.l.b16 %v705
        %v1526 = vunpack.c.l.b16 %v706
        %v1527 = vunpack.c.l.b16 %v707
        %v1528 = vunpack.c.l.b16 %v708
        %v1529 = vunpack.c.l.b16 %v709
        %v1530 = vunpack.c.l.b16 %v710
        %v1531 = vunpack.c.l.b16 %v711
        %v1532 = vunpack.c.l.b16 %v712
        %v1533 = vunpack.c.l.b16 %v713
        %v1534 = vunpack.c.l.b16 %v714
        %v1535 = vunpack.c.l.b16 %v715
        %v1536 = vunpack.c.l.b16 %v716
        %v1537 = vunpack.c.l.b16 %v717
        %v1538 = vunpack.c.l.b16 %v718
        %v1539 = vunpack.c.l.b16 %v719
        %v1540 = vunpack.c.l.b16 %v720
        %v1541 = vunpack.c.l.b16 %v721
        %v1542 = vunpack.c.l.b16 %v722
        %v1543 = vunpack.c.l.b16 %v723
        %v1544 = vunpack.c.l.b16 %v724
        %v1545 = vunpack.c.l.b16 %v725
        %v1546 = vunpack.c.l.b16 %v726
        %v1547 = vunpack.c.l.b16 %v727
        %v1548 = vunpack.c.l.b16 %v728
        %v1549 = vunpack.c.l.b16 %v729
        %v1550 = vunpack.c.l.b16 %v730
        %v1551 = vunpack.c.l.b16 %v731
        %v1552 = vunpack.c.l.b16 %v732
        %v1553 = vunpack.c.l.b16 %v733
        %v1554 = vunpack.c.l.b16 %v734
        %v1555 = vunpack.c.l.b16 %v735
        %v1556 = vunpack.c.l.b16 %v736
        %v1557 = vunpack.c.l.b16 %v737
        %v1558 = vunpack.c.l.b16 %v738
        %v1559 = vunpack.c.l.b16 %v739
        %v1560 = vunpack.c.l.b16 %v740
        %v1561 = vunpack.c.l.b16 %v741
        %v1562 = vunpack.c.l.b16 %v742
        %v1563 = vunpack.c.l.b16 %v743
        %v1564 = vunpack.c.l.b16 %v744
        %v1565 = vunpack.c.l.b16 %v745
        %v1566 = vunpack.c.l.b16 %v746
        %v1567 = vunpack.c.l.b16 %v747
        %v1568 = vunpack.c.l.b16 %v748
        %v1569 = vunpack.c.l.b16 %v749
        %v1570 = vunpack.c.l.b16 %v750
        %v1571 = vunpack.c.l.b16 %v751
        %v1572 = vunpack.c.l.b16 %v752
        %v1573 = vunpack.c.l.b16 %v753
        %v1574 = vunpack.c.l.b16 %v754
        %v1575 = vunpack.c.l.b16 %v755
        %v1576 = vunpack.c.l.b16 %v756
        %v1577 = vunpack.c.l.b16 %v757
        %v1578 = vunpack.c.l.b16 %v758
        %v1579 = vunpack.c.l.b16 %v759
        %v1580 = vunpack.c.l.b16 %v760
        %v1581 = vunpack.c.l.b16 %v761
        %v1582 = vunpack.c.l.b16 %v762
        %v1583 = vunpack.c.l.b16 %v763
        %v1584 = vunpack.c.l.b16 %v764
        %v1585 = vunpack.c.l.b16 %v765
        %v1586 = vunpack.c.l.b16 %v766
        %v1587 = vunpack.c.l.b16 %v767
        %v1588 = vunpack.c.l.b16 %v768
        %v1589 = vpack.c.b16 %v1446, %v1445
        %v1590 = vpack.c.b16 %v1448, %v1447
        %v1591 = vpack.c.b16 %v1450, %v1449
        %v1592 = vpack.c.b16 %v1452, %v1451
        %v1593 = vpack.c.b16 %v1454, %v1453
        %v1594 = vpack.c.b16 %v1456, %v1455
        %v1595 = vpack.c.b16 %v1458, %v1457
        %v1596 = vpack.c.b16 %v1460, %v1459
        %v1597 = vpack.c.b16 %v1462, %v1461
        %v1598 = vpack.c.b16 %v1464, %v1463
        %v1599 = vpack.c.b16 %v1466, %v1465
        %v1600 = vpack.c.b16 %v1468, %v1467
        %v1601 = vpack.c.b16 %v1470, %v1469
        %v1602 = vpack.c.b16 %v1472, %v1471
        %v1603 = vpack.c.b16 %v1474, %v1473
        %v1604 = vpack.c.b16 %v1476, %v1475
        %v1605 = vpack.c.b16 %v1478, %v1477
        %v1606 = vpack.c.b16 %v1480, %v1479
        %v1607 = vpack.c.b16 %v1482, %v1481
        %v1608 = vpack.c.b16 %v1484, %v1483
        %v1609 = vpack.c.b16 %v1486, %v1485
        %v1610 = vpack.c.b16 %v1488, %v1487
        %v1611 = vpack.c.b16 %v1490, %v1489
        %v1612 = vpack.c.b16 %v1492, %v1491
        %v1613 = vpack.c.b16 %v1494, %v1493
        %v1614 = vpack.c.b16 %v1496, %v1495
        %v1615 = vpack.c.b16 %v1498, %v1497
        %v1616 = vpack.c.b16 %v1500, %v1499
        %v1617 = vpack.c.b16 %v1502, %v1501
        %v1618 = vpack.c.b16 %v1504, %v1503
        %v1619 = vpack.c.b16 %v1506, %v1505
        %v1620 = vpack.c.b16 %v1508, %v1507
        %v1621 = vpack.c.b16 %v1510, %v1509
        %v1622 = vpack.c.b16 %v1512, %v1511
        %v1623 = vpack.c.b16 %v1514, %v1513
        %v1624 = vpack.c.b16 %v1516, %v1515
        %v1625 = vpack.c.b16 %v1518, %v1517
        %v1626 = vpack.c.b16 %v1520, %v1519
        %v1627 = vpack.c.b16 %v1522, %v1521
        %v1628 = vpack.c.b16 %v1524, %v1523
        %v1629 = vpack.c.b16 %v1526, %v1525
        %v1630 = vpack.c.b16 %v1528, %v1527
        %v1631 = vpack.c.b16 %v1530, %v1529
        %v1632 = vpack.c.b16 %v1532, %v1531
        %v1633 = vpack.c.b16 %v1534, %v1533
        %v1634 = vpack.c.b16 %v1536, %v1535
        %v1635 = vpack.c.b16 %v1538, %v1537
        %v1636 = vpack.c.b16 %v1540, %v1539
        %v1637 = vpack.c.b16 %v1542, %v1541
        %v1638 = vpack.c.b16 %v1544, %v1543
        %v1639 = vpack.c.b16 %v1546, %v1545
        %v1640 = vpack.c.b16 %v1548, %v1547
        %v1641 = vpack.c.b16 %v1550, %v1549
        %v1642 = vpack.c.b16 %v1552, %v1551
        %v1643 = vpack.c.b16 %v1554, %v1553
        %v1644 = vpack.c.b16 %v1556, %v1555
        %v1645 = vpack.c.b16 %v1558, %v1557
        %v1646 = vpack.c.b16 %v1560, %v1559
        %v1647 = vpack.c.b16 %v1562, %v1561
        %v1648 = vpack.c.b16 %v1564, %v1563
        %v1649 = vpack.c.b16 %v1566, %v1565
        %v1650 = vpack.c.b16 %v1568, %v1567
        %v1651 = vpack.c.b16 %v1570, %v1569
        %v1652 = vpack.c.b16 %v1572, %v1571
        %v1653 = vpack.c.b16 %v1574, %v1573
        %v1654 = vpack.c.b16 %v1576, %v1575
        %v1655 = vpack.c.b16 %v1578, %v1577
        %v1656 = vpack.c.b16 %v1580, %v1579
        %v1657 = vpack.c.b16 %v1582, %v1581
        %v1658 = vpack.c.b16 %v1584, %v1583
        %v1659 = vpack.c.b16 %v1586, %v1585
        %v1660 = vpack.c.b16 %v1588, %v1587
        %1733 = vmatpush.bf16.msra.mxu0 %v1596
        %1734 = vmatpush.bf16.msra.mxu0 %v1595
        %1735 = vmatpush.bf16.msra.mxu0 %v1594
        %1736 = vmatpush.bf16.msra.mxu0 %v1593
        %1737 = vmatpush.bf16.msra.mxu0 %v1592
        %1738 = vmatpush.bf16.msra.mxu0 %v1591
        %1739 = vmatpush.bf16.msra.mxu0 %v1590
        %1740 = vmatpush.bf16.msra.mxu0 %v1589
        %1741 = vmatmul.bf16.gmra.mxu0 %v1253
        %v1742 = vpop.f32.mrf.mxu0
        %v1743 = vadd.f32 0.0, %v1742
        %v1744 = vpop.f32.mrf.mxu0
        %v1745 = vadd.f32 0.0, %v1744
        %1746 = vmatmul.bf16.gmra.mxu0 %v1256
        %v1747 = vpop.f32.mrf.mxu0
        %v1748 = vadd.f32 0.0, %v1747
        %v1749 = vpop.f32.mrf.mxu0
        %v1750 = vadd.f32 0.0, %v1749
        %1751 = vmatmul.bf16.gmra.mxu0 %v1253
        %v1752 = vpop.f32.mrf.mxu0
        %v1753 = vadd.f32 0.0, %v1752
        %v1754 = vpop.f32.mrf.mxu0
        %v1755 = vadd.f32 0.0, %v1754
        %1756 = vmatmul.bf16.gmra.mxu0 %v1259
        %v1757 = vpop.f32.mrf.mxu0
        %v1758 = vadd.f32 0.0, %v1757
        %v1759 = vpop.f32.mrf.mxu0
        %v1760 = vadd.f32 0.0, %v1759
        %1761 = vmatmul.bf16.gmra.mxu0 %v1262
        %v1762 = vpop.f32.mrf.mxu0
        %v1763 = vadd.f32 0.0, %v1762
        %v1764 = vpop.f32.mrf.mxu0
        %v1765 = vadd.f32 0.0, %v1764
        %1766 = vmatmul.bf16.gmra.mxu0 %v1265
        %v1767 = vpop.f32.mrf.mxu0
        %v1768 = vadd.f32 0.0, %v1767
        %v1769 = vpop.f32.mrf.mxu0
        %v1770 = vadd.f32 0.0, %v1769
        %1771 = vmatmul.bf16.gmra.mxu0 %v1268
        %v1772 = vpop.f32.mrf.mxu0
        %v1773 = vadd.f32 0.0, %v1772
        %v1774 = vpop.f32.mrf.mxu0
        %v1775 = vadd.f32 0.0, %v1774
        %1776 = vmatmul.bf16.gmra.mxu0 %v1271
        %v1777 = vpop.f32.mrf.mxu0
        %v1778 = vadd.f32 0.0, %v1777
        %v1779 = vpop.f32.mrf.mxu0
        %v1780 = vadd.f32 0.0, %v1779
        %1781 = vmatmul.bf16.gmra.mxu0 %v1274
        %v1782 = vpop.f32.mrf.mxu0
        %v1783 = vadd.f32 0.0, %v1782
        %v1784 = vpop.f32.mrf.mxu0
        %v1785 = vadd.f32 0.0, %v1784
        %1786 = vmatmul.bf16.gmra.mxu0 %v1277
        %v1787 = vpop.f32.mrf.mxu0
        %v1788 = vadd.f32 0.0, %v1787
        %v1789 = vpop.f32.mrf.mxu0
        %v1790 = vadd.f32 0.0, %v1789
        %1791 = vmatmul.bf16.gmra.mxu0 %v1280
        %v1792 = vpop.f32.mrf.mxu0
        %v1793 = vadd.f32 0.0, %v1792
        %v1794 = vpop.f32.mrf.mxu0
        %v1795 = vadd.f32 0.0, %v1794
        %1796 = vmatmul.bf16.gmra.mxu0 %v1283
        %v1797 = vpop.f32.mrf.mxu0
        %v1798 = vadd.f32 0.0, %v1797
        %v1799 = vpop.f32.mrf.mxu0
        %v1800 = vadd.f32 0.0, %v1799
        %1801 = vmatmul.bf16.gmra.mxu0 %v1286
        %v1802 = vpop.f32.mrf.mxu0
        %v1803 = vadd.f32 0.0, %v1802
        %v1804 = vpop.f32.mrf.mxu0
        %v1805 = vadd.f32 0.0, %v1804
        %1806 = vmatmul.bf16.gmra.mxu0 %v1289
        %v1807 = vpop.f32.mrf.mxu0
        %v1808 = vadd.f32 0.0, %v1807
        %v1809 = vpop.f32.mrf.mxu0
        %v1810 = vadd.f32 0.0, %v1809
        %1811 = vmatmul.bf16.gmra.mxu0 %v1292
        %v1812 = vpop.f32.mrf.mxu0
        %v1813 = vadd.f32 0.0, %v1812
        %v1814 = vpop.f32.mrf.mxu0
        %v1815 = vadd.f32 0.0, %v1814
        %1816 = vmatmul.bf16.gmra.mxu0 %v1295
        %v1817 = vpop.f32.mrf.mxu0
        %v1818 = vadd.f32 0.0, %v1817
        %v1819 = vpop.f32.mrf.mxu0
        %v1820 = vadd.f32 0.0, %v1819
        %1821 = vdwg.mxu0
        %1822 = vmatpush.bf16.msra.mxu0 %v1604
        %1823 = vmatpush.bf16.msra.mxu0 %v1603
        %1824 = vmatpush.bf16.msra.mxu0 %v1602
        %1825 = vmatpush.bf16.msra.mxu0 %v1601
        %1826 = vmatpush.bf16.msra.mxu0 %v1600
        %1827 = vmatpush.bf16.msra.mxu0 %v1599
        %1828 = vmatpush.bf16.msra.mxu0 %v1598
        %1829 = vmatpush.bf16.msra.mxu0 %v1597
        %1830 = vmatmul.bf16.gmra.mxu0 %v1254
        %v1831 = vpop.f32.mrf.mxu0
        %v1832 = vadd.f32 %v1743, %v1831
        %v1833 = vpop.f32.mrf.mxu0
        %v1834 = vadd.f32 %v1745, %v1833
        %1835 = vmatmul.bf16.gmra.mxu0 %v1257
        %v1836 = vpop.f32.mrf.mxu0
        %v1837 = vadd.f32 %v1748, %v1836
        %v1838 = vpop.f32.mrf.mxu0
        %v1839 = vadd.f32 %v1750, %v1838
        %1840 = vmatmul.bf16.gmra.mxu0 %v1254
        %v1841 = vpop.f32.mrf.mxu0
        %v1842 = vadd.f32 %v1753, %v1841
        %v1843 = vpop.f32.mrf.mxu0
        %v1844 = vadd.f32 %v1755, %v1843
        %1845 = vmatmul.bf16.gmra.mxu0 %v1260
        %v1846 = vpop.f32.mrf.mxu0
        %v1847 = vadd.f32 %v1758, %v1846
        %v1848 = vpop.f32.mrf.mxu0
        %v1849 = vadd.f32 %v1760, %v1848
        %1850 = vmatmul.bf16.gmra.mxu0 %v1263
        %v1851 = vpop.f32.mrf.mxu0
        %v1852 = vadd.f32 %v1763, %v1851
        %v1853 = vpop.f32.mrf.mxu0
        %v1854 = vadd.f32 %v1765, %v1853
        %1855 = vmatmul.bf16.gmra.mxu0 %v1266
        %v1856 = vpop.f32.mrf.mxu0
        %v1857 = vadd.f32 %v1768, %v1856
        %v1858 = vpop.f32.mrf.mxu0
        %v1859 = vadd.f32 %v1770, %v1858
        %1860 = vmatmul.bf16.gmra.mxu0 %v1269
        %v1861 = vpop.f32.mrf.mxu0
        %v1862 = vadd.f32 %v1773, %v1861
        %v1863 = vpop.f32.mrf.mxu0
        %v1864 = vadd.f32 %v1775, %v1863
        %1865 = vmatmul.bf16.gmra.mxu0 %v1272
        %v1866 = vpop.f32.mrf.mxu0
        %v1867 = vadd.f32 %v1778, %v1866
        %v1868 = vpop.f32.mrf.mxu0
        %v1869 = vadd.f32 %v1780, %v1868
        %1870 = vmatmul.bf16.gmra.mxu0 %v1275
        %v1871 = vpop.f32.mrf.mxu0
        %v1872 = vadd.f32 %v1783, %v1871
        %v1873 = vpop.f32.mrf.mxu0
        %v1874 = vadd.f32 %v1785, %v1873
        %1875 = vmatmul.bf16.gmra.mxu0 %v1278
        %v1876 = vpop.f32.mrf.mxu0
        %v1877 = vadd.f32 %v1788, %v1876
        %v1878 = vpop.f32.mrf.mxu0
        %v1879 = vadd.f32 %v1790, %v1878
        %1880 = vmatmul.bf16.gmra.mxu0 %v1281
        %v1881 = vpop.f32.mrf.mxu0
        %v1882 = vadd.f32 %v1793, %v1881
        %v1883 = vpop.f32.mrf.mxu0
        %v1884 = vadd.f32 %v1795, %v1883
        %1885 = vmatmul.bf16.gmra.mxu0 %v1284
        %v1886 = vpop.f32.mrf.mxu0
        %v1887 = vadd.f32 %v1798, %v1886
        %v1888 = vpop.f32.mrf.mxu0
        %v1889 = vadd.f32 %v1800, %v1888
        %1890 = vmatmul.bf16.gmra.mxu0 %v1287
        %v1891 = vpop.f32.mrf.mxu0
        %v1892 = vadd.f32 %v1803, %v1891
        %v1893 = vpop.f32.mrf.mxu0
        %v1894 = vadd.f32 %v1805, %v1893
        %1895 = vmatmul.bf16.gmra.mxu0 %v1290
        %v1896 = vpop.f32.mrf.mxu0
        %v1897 = vadd.f32 %v1808, %v1896
        %v1898 = vpop.f32.mrf.mxu0
        %v1899 = vadd.f32 %v1810, %v1898
        %1900 = vmatmul.bf16.gmra.mxu0 %v1293
        %v1901 = vpop.f32.mrf.mxu0
        %v1902 = vadd.f32 %v1813, %v1901
        %v1903 = vpop.f32.mrf.mxu0
        %v1904 = vadd.f32 %v1815, %v1903
        %1905 = vmatmul.bf16.gmra.mxu0 %v1296
        %v1906 = vpop.f32.mrf.mxu0
        %v1907 = vadd.f32 %v1818, %v1906
        %v1908 = vpop.f32.mrf.mxu0
        %v1909 = vadd.f32 %v1820, %v1908
        %1910 = vdwg.mxu0
        %1911 = vmatpush.bf16.msra.mxu0 %v1612
        %1912 = vmatpush.bf16.msra.mxu0 %v1611
        %1913 = vmatpush.bf16.msra.mxu0 %v1610
        %1914 = vmatpush.bf16.msra.mxu0 %v1609
        %1915 = vmatpush.bf16.msra.mxu0 %v1608
        %1916 = vmatpush.bf16.msra.mxu0 %v1607
        %1917 = vmatpush.bf16.msra.mxu0 %v1606
        %1918 = vmatpush.bf16.msra.mxu0 %v1605
        %1919 = vmatmul.bf16.gmra.mxu0 %v1255
        %v1920 = vpop.f32.mrf.mxu0
        %v1921 = vadd.f32 %v1832, %v1920
        %v1922 = vpop.f32.mrf.mxu0
        %v1923 = vadd.f32 %v1834, %v1922
        %1924 = vmatmul.bf16.gmra.mxu0 %v1258
        %v1925 = vpop.f32.mrf.mxu0
        %v1926 = vadd.f32 %v1837, %v1925
        %v1927 = vpop.f32.mrf.mxu0
        %v1928 = vadd.f32 %v1839, %v1927
        %1929 = vmatmul.bf16.gmra.mxu0 %v1255
        %v1930 = vpop.f32.mrf.mxu0
        %v1931 = vadd.f32 %v1842, %v1930
        %v1932 = vpop.f32.mrf.mxu0
        %v1933 = vadd.f32 %v1844, %v1932
        %1934 = vmatmul.bf16.gmra.mxu0 %v1261
        %v1935 = vpop.f32.mrf.mxu0
        %v1936 = vadd.f32 %v1847, %v1935
        %v1937 = vpop.f32.mrf.mxu0
        %v1938 = vadd.f32 %v1849, %v1937
        %1939 = vmatmul.bf16.gmra.mxu0 %v1264
        %v1940 = vpop.f32.mrf.mxu0
        %v1941 = vadd.f32 %v1852, %v1940
        %v1942 = vpop.f32.mrf.mxu0
        %v1943 = vadd.f32 %v1854, %v1942
        %1944 = vmatmul.bf16.gmra.mxu0 %v1267
        %v1945 = vpop.f32.mrf.mxu0
        %v1946 = vadd.f32 %v1857, %v1945
        %v1947 = vpop.f32.mrf.mxu0
        %v1948 = vadd.f32 %v1859, %v1947
        %1949 = vmatmul.bf16.gmra.mxu0 %v1270
        %v1950 = vpop.f32.mrf.mxu0
        %v1951 = vadd.f32 %v1862, %v1950
        %v1952 = vpop.f32.mrf.mxu0
        %v1953 = vadd.f32 %v1864, %v1952
        %1954 = vmatmul.bf16.gmra.mxu0 %v1273
        %v1955 = vpop.f32.mrf.mxu0
        %v1956 = vadd.f32 %v1867, %v1955
        %v1957 = vpop.f32.mrf.mxu0
        %v1958 = vadd.f32 %v1869, %v1957
        %1959 = vmatmul.bf16.gmra.mxu0 %v1276
        %v1960 = vpop.f32.mrf.mxu0
        %v1961 = vadd.f32 %v1872, %v1960
        %v1962 = vpop.f32.mrf.mxu0
        %v1963 = vadd.f32 %v1874, %v1962
        %1964 = vmatmul.bf16.gmra.mxu0 %v1279
        %v1965 = vpop.f32.mrf.mxu0
        %v1966 = vadd.f32 %v1877, %v1965
        %v1967 = vpop.f32.mrf.mxu0
        %v1968 = vadd.f32 %v1879, %v1967
        %1969 = vmatmul.bf16.gmra.mxu0 %v1282
        %v1970 = vpop.f32.mrf.mxu0
        %v1971 = vadd.f32 %v1882, %v1970
        %v1972 = vpop.f32.mrf.mxu0
        %v1973 = vadd.f32 %v1884, %v1972
        %1974 = vmatmul.bf16.gmra.mxu0 %v1285
        %v1975 = vpop.f32.mrf.mxu0
        %v1976 = vadd.f32 %v1887, %v1975
        %v1977 = vpop.f32.mrf.mxu0
        %v1978 = vadd.f32 %v1889, %v1977
        %1979 = vmatmul.bf16.gmra.mxu0 %v1288
        %v1980 = vpop.f32.mrf.mxu0
        %v1981 = vadd.f32 %v1892, %v1980
        %v1982 = vpop.f32.mrf.mxu0
        %v1983 = vadd.f32 %v1894, %v1982
        %1984 = vmatmul.bf16.gmra.mxu0 %v1291
        %v1985 = vpop.f32.mrf.mxu0
        %v1986 = vadd.f32 %v1897, %v1985
        %v1987 = vpop.f32.mrf.mxu0
        %v1988 = vadd.f32 %v1899, %v1987
        %1989 = vmatmul.bf16.gmra.mxu0 %v1294
        %v1990 = vpop.f32.mrf.mxu0
        %v1991 = vadd.f32 %v1902, %v1990
        %v1992 = vpop.f32.mrf.mxu0
        %v1993 = vadd.f32 %v1904, %v1992
        %1994 = vmatmul.bf16.gmra.mxu0 %v1297
        %v1995 = vpop.f32.mrf.mxu0
        %v1996 = vadd.f32 %v1907, %v1995
        %v1997 = vpop.f32.mrf.mxu0
        %v1998 = vadd.f32 %v1909, %v1997
        %1999 = vdwg.mxu0
        %2000 = vmatpush.bf16.msra.mxu0 %v1620
        %2001 = vmatpush.bf16.msra.mxu0 %v1619
        %2002 = vmatpush.bf16.msra.mxu0 %v1618
        %2003 = vmatpush.bf16.msra.mxu0 %v1617
        %2004 = vmatpush.bf16.msra.mxu0 %v1616
        %2005 = vmatpush.bf16.msra.mxu0 %v1615
        %2006 = vmatpush.bf16.msra.mxu0 %v1614
        %2007 = vmatpush.bf16.msra.mxu0 %v1613
        %2008 = vmatmul.bf16.gmra.mxu0 %v1256
        %v2009 = vpop.f32.mrf.mxu0
        %v2010 = vadd.f32 %v1921, %v2009
        %v2011 = vpop.f32.mrf.mxu0
        %v2012 = vadd.f32 %v1923, %v2011
        %2013 = vmatmul.bf16.gmra.mxu0 %v1253
        %v2014 = vpop.f32.mrf.mxu0
        %v2015 = vadd.f32 %v1926, %v2014
        %v2016 = vpop.f32.mrf.mxu0
        %v2017 = vadd.f32 %v1928, %v2016
        %2018 = vmatmul.bf16.gmra.mxu0 %v1259
        %v2019 = vpop.f32.mrf.mxu0
        %v2020 = vadd.f32 %v1931, %v2019
        %v2021 = vpop.f32.mrf.mxu0
        %v2022 = vadd.f32 %v1933, %v2021
        %2023 = vmatmul.bf16.gmra.mxu0 %v1262
        %v2024 = vpop.f32.mrf.mxu0
        %v2025 = vadd.f32 %v1936, %v2024
        %v2026 = vpop.f32.mrf.mxu0
        %v2027 = vadd.f32 %v1938, %v2026
        %2028 = vmatmul.bf16.gmra.mxu0 %v1265
        %v2029 = vpop.f32.mrf.mxu0
        %v2030 = vadd.f32 %v1941, %v2029
        %v2031 = vpop.f32.mrf.mxu0
        %v2032 = vadd.f32 %v1943, %v2031
        %2033 = vmatmul.bf16.gmra.mxu0 %v1268
        %v2034 = vpop.f32.mrf.mxu0
        %v2035 = vadd.f32 %v1946, %v2034
        %v2036 = vpop.f32.mrf.mxu0
        %v2037 = vadd.f32 %v1948, %v2036
        %2038 = vmatmul.bf16.gmra.mxu0 %v1271
        %v2039 = vpop.f32.mrf.mxu0
        %v2040 = vadd.f32 %v1951, %v2039
        %v2041 = vpop.f32.mrf.mxu0
        %v2042 = vadd.f32 %v1953, %v2041
        %2043 = vmatmul.bf16.gmra.mxu0 %v1274
        %v2044 = vpop.f32.mrf.mxu0
        %v2045 = vadd.f32 %v1956, %v2044
        %v2046 = vpop.f32.mrf.mxu0
        %v2047 = vadd.f32 %v1958, %v2046
        %2048 = vmatmul.bf16.gmra.mxu0 %v1277
        %v2049 = vpop.f32.mrf.mxu0
        %v2050 = vadd.f32 %v1961, %v2049
        %v2051 = vpop.f32.mrf.mxu0
        %v2052 = vadd.f32 %v1963, %v2051
        %2053 = vmatmul.bf16.gmra.mxu0 %v1280
        %v2054 = vpop.f32.mrf.mxu0
        %v2055 = vadd.f32 %v1966, %v2054
        %v2056 = vpop.f32.mrf.mxu0
        %v2057 = vadd.f32 %v1968, %v2056
        %2058 = vmatmul.bf16.gmra.mxu0 %v1283
        %v2059 = vpop.f32.mrf.mxu0
        %v2060 = vadd.f32 %v1971, %v2059
        %v2061 = vpop.f32.mrf.mxu0
        %v2062 = vadd.f32 %v1973, %v2061
        %2063 = vmatmul.bf16.gmra.mxu0 %v1286
        %v2064 = vpop.f32.mrf.mxu0
        %v2065 = vadd.f32 %v1976, %v2064
        %v2066 = vpop.f32.mrf.mxu0
        %v2067 = vadd.f32 %v1978, %v2066
        %2068 = vmatmul.bf16.gmra.mxu0 %v1289
        %v2069 = vpop.f32.mrf.mxu0
        %v2070 = vadd.f32 %v1981, %v2069
        %v2071 = vpop.f32.mrf.mxu0
        %v2072 = vadd.f32 %v1983, %v2071
        %2073 = vmatmul.bf16.gmra.mxu0 %v1292
        %v2074 = vpop.f32.mrf.mxu0
        %v2075 = vadd.f32 %v1986, %v2074
        %v2076 = vpop.f32.mrf.mxu0
        %v2077 = vadd.f32 %v1988, %v2076
        %2078 = vmatmul.bf16.gmra.mxu0 %v1295
        %v2079 = vpop.f32.mrf.mxu0
        %v2080 = vadd.f32 %v1991, %v2079
        %v2081 = vpop.f32.mrf.mxu0
        %v2082 = vadd.f32 %v1993, %v2081
        %2083 = vmatmul.bf16.gmra.mxu0 %v1298
        %v2084 = vpop.f32.mrf.mxu0
        %v2085 = vadd.f32 %v1996, %v2084
        %v2086 = vpop.f32.mrf.mxu0
        %v2087 = vadd.f32 %v1998, %v2086
        %2088 = vdwg.mxu0
        %2089 = vmatpush.bf16.msra.mxu0 %v1628
        %2090 = vmatpush.bf16.msra.mxu0 %v1627
        %2091 = vmatpush.bf16.msra.mxu0 %v1626
        %2092 = vmatpush.bf16.msra.mxu0 %v1625
        %2093 = vmatpush.bf16.msra.mxu0 %v1624
        %2094 = vmatpush.bf16.msra.mxu0 %v1623
        %2095 = vmatpush.bf16.msra.mxu0 %v1622
        %2096 = vmatpush.bf16.msra.mxu0 %v1621
        %2097 = vmatmul.bf16.gmra.mxu0 %v1257
        %v2098 = vpop.f32.mrf.mxu0
        %v2099 = vadd.f32 %v2010, %v2098
        %v2100 = vpop.f32.mrf.mxu0
        %v2101 = vadd.f32 %v2012, %v2100
        %2102 = vmatmul.bf16.gmra.mxu0 %v1254
        %v2103 = vpop.f32.mrf.mxu0
        %v2104 = vadd.f32 %v2015, %v2103
        %v2105 = vpop.f32.mrf.mxu0
        %v2106 = vadd.f32 %v2017, %v2105
        %2107 = vmatmul.bf16.gmra.mxu0 %v1260
        %v2108 = vpop.f32.mrf.mxu0
        %v2109 = vadd.f32 %v2020, %v2108
        %v2110 = vpop.f32.mrf.mxu0
        %v2111 = vadd.f32 %v2022, %v2110
        %2112 = vmatmul.bf16.gmra.mxu0 %v1263
        %v2113 = vpop.f32.mrf.mxu0
        %v2114 = vadd.f32 %v2025, %v2113
        %v2115 = vpop.f32.mrf.mxu0
        %v2116 = vadd.f32 %v2027, %v2115
        %2117 = vmatmul.bf16.gmra.mxu0 %v1266
        %v2118 = vpop.f32.mrf.mxu0
        %v2119 = vadd.f32 %v2030, %v2118
        %v2120 = vpop.f32.mrf.mxu0
        %v2121 = vadd.f32 %v2032, %v2120
        %2122 = vmatmul.bf16.gmra.mxu0 %v1269
        %v2123 = vpop.f32.mrf.mxu0
        %v2124 = vadd.f32 %v2035, %v2123
        %v2125 = vpop.f32.mrf.mxu0
        %v2126 = vadd.f32 %v2037, %v2125
        %2127 = vmatmul.bf16.gmra.mxu0 %v1272
        %v2128 = vpop.f32.mrf.mxu0
        %v2129 = vadd.f32 %v2040, %v2128
        %v2130 = vpop.f32.mrf.mxu0
        %v2131 = vadd.f32 %v2042, %v2130
        %2132 = vmatmul.bf16.gmra.mxu0 %v1275
        %v2133 = vpop.f32.mrf.mxu0
        %v2134 = vadd.f32 %v2045, %v2133
        %v2135 = vpop.f32.mrf.mxu0
        %v2136 = vadd.f32 %v2047, %v2135
        %2137 = vmatmul.bf16.gmra.mxu0 %v1278
        %v2138 = vpop.f32.mrf.mxu0
        %v2139 = vadd.f32 %v2050, %v2138
        %v2140 = vpop.f32.mrf.mxu0
        %v2141 = vadd.f32 %v2052, %v2140
        %2142 = vmatmul.bf16.gmra.mxu0 %v1281
        %v2143 = vpop.f32.mrf.mxu0
        %v2144 = vadd.f32 %v2055, %v2143
        %v2145 = vpop.f32.mrf.mxu0
        %v2146 = vadd.f32 %v2057, %v2145
        %2147 = vmatmul.bf16.gmra.mxu0 %v1284
        %v2148 = vpop.f32.mrf.mxu0
        %v2149 = vadd.f32 %v2060, %v2148
        %v2150 = vpop.f32.mrf.mxu0
        %v2151 = vadd.f32 %v2062, %v2150
        %2152 = vmatmul.bf16.gmra.mxu0 %v1287
        %v2153 = vpop.f32.mrf.mxu0
        %v2154 = vadd.f32 %v2065, %v2153
        %v2155 = vpop.f32.mrf.mxu0
        %v2156 = vadd.f32 %v2067, %v2155
        %2157 = vmatmul.bf16.gmra.mxu0 %v1290
        %v2158 = vpop.f32.mrf.mxu0
        %v2159 = vadd.f32 %v2070, %v2158
        %v2160 = vpop.f32.mrf.mxu0
        %v2161 = vadd.f32 %v2072, %v2160
        %2162 = vmatmul.bf16.gmra.mxu0 %v1293
        %v2163 = vpop.f32.mrf.mxu0
        %v2164 = vadd.f32 %v2075, %v2163
        %v2165 = vpop.f32.mrf.mxu0
        %v2166 = vadd.f32 %v2077, %v2165
        %2167 = vmatmul.bf16.gmra.mxu0 %v1296
        %v2168 = vpop.f32.mrf.mxu0
        %v2169 = vadd.f32 %v2080, %v2168
        %v2170 = vpop.f32.mrf.mxu0
        %v2171 = vadd.f32 %v2082, %v2170
        %2172 = vmatmul.bf16.gmra.mxu0 %v1299
        %v2173 = vpop.f32.mrf.mxu0
        %v2174 = vadd.f32 %v2085, %v2173
        %v2175 = vpop.f32.mrf.mxu0
        %v2176 = vadd.f32 %v2087, %v2175
        %2177 = vdwg.mxu0
        %2178 = vmatpush.bf16.msra.mxu0 %v1636
        %2179 = vmatpush.bf16.msra.mxu0 %v1635
        %2180 = vmatpush.bf16.msra.mxu0 %v1634
        %2181 = vmatpush.bf16.msra.mxu0 %v1633
        %2182 = vmatpush.bf16.msra.mxu0 %v1632
        %2183 = vmatpush.bf16.msra.mxu0 %v1631
        %2184 = vmatpush.bf16.msra.mxu0 %v1630
        %2185 = vmatpush.bf16.msra.mxu0 %v1629
        %2186 = vmatmul.bf16.gmra.mxu0 %v1258
        %v2187 = vpop.f32.mrf.mxu0
        %v2188 = vadd.f32 %v2099, %v2187
        %v2189 = vpop.f32.mrf.mxu0
        %v2190 = vadd.f32 %v2101, %v2189
        %2191 = vmatmul.bf16.gmra.mxu0 %v1255
        %v2192 = vpop.f32.mrf.mxu0
        %v2193 = vadd.f32 %v2104, %v2192
        %v2194 = vpop.f32.mrf.mxu0
        %v2195 = vadd.f32 %v2106, %v2194
        %2196 = vmatmul.bf16.gmra.mxu0 %v1261
        %v2197 = vpop.f32.mrf.mxu0
        %v2198 = vadd.f32 %v2109, %v2197
        %v2199 = vpop.f32.mrf.mxu0
        %v2200 = vadd.f32 %v2111, %v2199
        %2201 = vmatmul.bf16.gmra.mxu0 %v1264
        %v2202 = vpop.f32.mrf.mxu0
        %v2203 = vadd.f32 %v2114, %v2202
        %v2204 = vpop.f32.mrf.mxu0
        %v2205 = vadd.f32 %v2116, %v2204
        %2206 = vmatmul.bf16.gmra.mxu0 %v1267
        %v2207 = vpop.f32.mrf.mxu0
        %v2208 = vadd.f32 %v2119, %v2207
        %v2209 = vpop.f32.mrf.mxu0
        %v2210 = vadd.f32 %v2121, %v2209
        %2211 = vmatmul.bf16.gmra.mxu0 %v1270
        %v2212 = vpop.f32.mrf.mxu0
        %v2213 = vadd.f32 %v2124, %v2212
        %v2214 = vpop.f32.mrf.mxu0
        %v2215 = vadd.f32 %v2126, %v2214
        %2216 = vmatmul.bf16.gmra.mxu0 %v1273
        %v2217 = vpop.f32.mrf.mxu0
        %v2218 = vadd.f32 %v2129, %v2217
        %v2219 = vpop.f32.mrf.mxu0
        %v2220 = vadd.f32 %v2131, %v2219
        %2221 = vmatmul.bf16.gmra.mxu0 %v1276
        %v2222 = vpop.f32.mrf.mxu0
        %v2223 = vadd.f32 %v2134, %v2222
        %v2224 = vpop.f32.mrf.mxu0
        %v2225 = vadd.f32 %v2136, %v2224
        %2226 = vmatmul.bf16.gmra.mxu0 %v1279
        %v2227 = vpop.f32.mrf.mxu0
        %v2228 = vadd.f32 %v2139, %v2227
        %v2229 = vpop.f32.mrf.mxu0
        %v2230 = vadd.f32 %v2141, %v2229
        %2231 = vmatmul.bf16.gmra.mxu0 %v1282
        %v2232 = vpop.f32.mrf.mxu0
        %v2233 = vadd.f32 %v2144, %v2232
        %v2234 = vpop.f32.mrf.mxu0
        %v2235 = vadd.f32 %v2146, %v2234
        %2236 = vmatmul.bf16.gmra.mxu0 %v1285
        %v2237 = vpop.f32.mrf.mxu0
        %v2238 = vadd.f32 %v2149, %v2237
        %v2239 = vpop.f32.mrf.mxu0
        %v2240 = vadd.f32 %v2151, %v2239
        %2241 = vmatmul.bf16.gmra.mxu0 %v1288
        %v2242 = vpop.f32.mrf.mxu0
        %v2243 = vadd.f32 %v2154, %v2242
        %v2244 = vpop.f32.mrf.mxu0
        %v2245 = vadd.f32 %v2156, %v2244
        %2246 = vmatmul.bf16.gmra.mxu0 %v1291
        %v2247 = vpop.f32.mrf.mxu0
        %v2248 = vadd.f32 %v2159, %v2247
        %v2249 = vpop.f32.mrf.mxu0
        %v2250 = vadd.f32 %v2161, %v2249
        %2251 = vmatmul.bf16.gmra.mxu0 %v1294
        %v2252 = vpop.f32.mrf.mxu0
        %v2253 = vadd.f32 %v2164, %v2252
        %v2254 = vpop.f32.mrf.mxu0
        %v2255 = vadd.f32 %v2166, %v2254
        %2256 = vmatmul.bf16.gmra.mxu0 %v1297
        %v2257 = vpop.f32.mrf.mxu0
        %v2258 = vadd.f32 %v2169, %v2257
        %v2259 = vpop.f32.mrf.mxu0
        %v2260 = vadd.f32 %v2171, %v2259
        %2261 = vmatmul.bf16.gmra.mxu0 %v1300
        %v2262 = vpop.f32.mrf.mxu0
        %v2263 = vadd.f32 %v2174, %v2262
        %v2264 = vpop.f32.mrf.mxu0
        %v2265 = vadd.f32 %v2176, %v2264
        %2266 = vdwg.mxu0
        %2267 = vmatpush.bf16.msra.mxu0 %v1644
        %2268 = vmatpush.bf16.msra.mxu0 %v1643
        %2269 = vmatpush.bf16.msra.mxu0 %v1642
        %2270 = vmatpush.bf16.msra.mxu0 %v1641
        %2271 = vmatpush.bf16.msra.mxu0 %v1640
        %2272 = vmatpush.bf16.msra.mxu0 %v1639
        %2273 = vmatpush.bf16.msra.mxu0 %v1638
        %2274 = vmatpush.bf16.msra.mxu0 %v1637
        %2275 = vmatmul.bf16.gmra.mxu0 %v1253
        %v2276 = vpop.f32.mrf.mxu0
        %v2277 = vadd.f32 %v2188, %v2276
        %v2278 = vpop.f32.mrf.mxu0
        %v2279 = vadd.f32 %v2190, %v2278
        %2280 = vmatmul.bf16.gmra.mxu0 %v1259
        %v2281 = vpop.f32.mrf.mxu0
        %v2282 = vadd.f32 %v2193, %v2281
        %v2283 = vpop.f32.mrf.mxu0
        %v2284 = vadd.f32 %v2195, %v2283
        %2285 = vmatmul.bf16.gmra.mxu0 %v1262
        %v2286 = vpop.f32.mrf.mxu0
        %v2287 = vadd.f32 %v2198, %v2286
        %v2288 = vpop.f32.mrf.mxu0
        %v2289 = vadd.f32 %v2200, %v2288
        %2290 = vmatmul.bf16.gmra.mxu0 %v1265
        %v2291 = vpop.f32.mrf.mxu0
        %v2292 = vadd.f32 %v2203, %v2291
        %v2293 = vpop.f32.mrf.mxu0
        %v2294 = vadd.f32 %v2205, %v2293
        %2295 = vmatmul.bf16.gmra.mxu0 %v1268
        %v2296 = vpop.f32.mrf.mxu0
        %v2297 = vadd.f32 %v2208, %v2296
        %v2298 = vpop.f32.mrf.mxu0
        %v2299 = vadd.f32 %v2210, %v2298
        %2300 = vmatmul.bf16.gmra.mxu0 %v1271
        %v2301 = vpop.f32.mrf.mxu0
        %v2302 = vadd.f32 %v2213, %v2301
        %v2303 = vpop.f32.mrf.mxu0
        %v2304 = vadd.f32 %v2215, %v2303
        %2305 = vmatmul.bf16.gmra.mxu0 %v1274
        %v2306 = vpop.f32.mrf.mxu0
        %v2307 = vadd.f32 %v2218, %v2306
        %v2308 = vpop.f32.mrf.mxu0
        %v2309 = vadd.f32 %v2220, %v2308
        %2310 = vmatmul.bf16.gmra.mxu0 %v1277
        %v2311 = vpop.f32.mrf.mxu0
        %v2312 = vadd.f32 %v2223, %v2311
        %v2313 = vpop.f32.mrf.mxu0
        %v2314 = vadd.f32 %v2225, %v2313
        %2315 = vmatmul.bf16.gmra.mxu0 %v1280
        %v2316 = vpop.f32.mrf.mxu0
        %v2317 = vadd.f32 %v2228, %v2316
        %v2318 = vpop.f32.mrf.mxu0
        %v2319 = vadd.f32 %v2230, %v2318
        %2320 = vmatmul.bf16.gmra.mxu0 %v1283
        %v2321 = vpop.f32.mrf.mxu0
        %v2322 = vadd.f32 %v2233, %v2321
        %v2323 = vpop.f32.mrf.mxu0
        %v2324 = vadd.f32 %v2235, %v2323
        %2325 = vmatmul.bf16.gmra.mxu0 %v1286
        %v2326 = vpop.f32.mrf.mxu0
        %v2327 = vadd.f32 %v2238, %v2326
        %v2328 = vpop.f32.mrf.mxu0
        %v2329 = vadd.f32 %v2240, %v2328
        %2330 = vmatmul.bf16.gmra.mxu0 %v1289
        %v2331 = vpop.f32.mrf.mxu0
        %v2332 = vadd.f32 %v2243, %v2331
        %v2333 = vpop.f32.mrf.mxu0
        %v2334 = vadd.f32 %v2245, %v2333
        %2335 = vmatmul.bf16.gmra.mxu0 %v1292
        %v2336 = vpop.f32.mrf.mxu0
        %v2337 = vadd.f32 %v2248, %v2336
        %v2338 = vpop.f32.mrf.mxu0
        %v2339 = vadd.f32 %v2250, %v2338
        %2340 = vmatmul.bf16.gmra.mxu0 %v1295
        %v2341 = vpop.f32.mrf.mxu0
        %v2342 = vadd.f32 %v2253, %v2341
        %v2343 = vpop.f32.mrf.mxu0
        %v2344 = vadd.f32 %v2255, %v2343
        %2345 = vmatmul.bf16.gmra.mxu0 %v1298
        %v2346 = vpop.f32.mrf.mxu0
        %v2347 = vadd.f32 %v2258, %v2346
        %v2348 = vpop.f32.mrf.mxu0
        %v2349 = vadd.f32 %v2260, %v2348
        %2350 = vmatmul.bf16.gmra.mxu0 %v1295
        %v2351 = vpop.f32.mrf.mxu0
        %v2352 = vadd.f32 %v2263, %v2351
        %v2353 = vpop.f32.mrf.mxu0
        %v2354 = vadd.f32 %v2265, %v2353
        %2355 = vdwg.mxu0
        %2356 = vmatpush.bf16.msra.mxu0 %v1652
        %2357 = vmatpush.bf16.msra.mxu0 %v1651
        %2358 = vmatpush.bf16.msra.mxu0 %v1650
        %2359 = vmatpush.bf16.msra.mxu0 %v1649
        %2360 = vmatpush.bf16.msra.mxu0 %v1648
        %2361 = vmatpush.bf16.msra.mxu0 %v1647
        %2362 = vmatpush.bf16.msra.mxu0 %v1646
        %2363 = vmatpush.bf16.msra.mxu0 %v1645
        %2364 = vmatmul.bf16.gmra.mxu0 %v1254
        %v2365 = vpop.f32.mrf.mxu0
        %v2366 = vadd.f32 %v2277, %v2365
        %v2367 = vpop.f32.mrf.mxu0
        %v2368 = vadd.f32 %v2279, %v2367
        %2369 = vmatmul.bf16.gmra.mxu0 %v1260
        %v2370 = vpop.f32.mrf.mxu0
        %v2371 = vadd.f32 %v2282, %v2370
        %v2372 = vpop.f32.mrf.mxu0
        %v2373 = vadd.f32 %v2284, %v2372
        %2374 = vmatmul.bf16.gmra.mxu0 %v1263
        %v2375 = vpop.f32.mrf.mxu0
        %v2376 = vadd.f32 %v2287, %v2375
        %v2377 = vpop.f32.mrf.mxu0
        %v2378 = vadd.f32 %v2289, %v2377
        %2379 = vmatmul.bf16.gmra.mxu0 %v1266
        %v2380 = vpop.f32.mrf.mxu0
        %v2381 = vadd.f32 %v2292, %v2380
        %v2382 = vpop.f32.mrf.mxu0
        %v2383 = vadd.f32 %v2294, %v2382
        %2384 = vmatmul.bf16.gmra.mxu0 %v1269
        %v2385 = vpop.f32.mrf.mxu0
        %v2386 = vadd.f32 %v2297, %v2385
        %v2387 = vpop.f32.mrf.mxu0
        %v2388 = vadd.f32 %v2299, %v2387
        %2389 = vmatmul.bf16.gmra.mxu0 %v1272
        %v2390 = vpop.f32.mrf.mxu0
        %v2391 = vadd.f32 %v2302, %v2390
        %v2392 = vpop.f32.mrf.mxu0
        %v2393 = vadd.f32 %v2304, %v2392
        %2394 = vmatmul.bf16.gmra.mxu0 %v1275
        %v2395 = vpop.f32.mrf.mxu0
        %v2396 = vadd.f32 %v2307, %v2395
        %v2397 = vpop.f32.mrf.mxu0
        %v2398 = vadd.f32 %v2309, %v2397
        %2399 = vmatmul.bf16.gmra.mxu0 %v1278
        %v2400 = vpop.f32.mrf.mxu0
        %v2401 = vadd.f32 %v2312, %v2400
        %v2402 = vpop.f32.mrf.mxu0
        %v2403 = vadd.f32 %v2314, %v2402
        %2404 = vmatmul.bf16.gmra.mxu0 %v1281
        %v2405 = vpop.f32.mrf.mxu0
        %v2406 = vadd.f32 %v2317, %v2405
        %v2407 = vpop.f32.mrf.mxu0
        %v2408 = vadd.f32 %v2319, %v2407
        %2409 = vmatmul.bf16.gmra.mxu0 %v1284
        %v2410 = vpop.f32.mrf.mxu0
        %v2411 = vadd.f32 %v2322, %v2410
        %v2412 = vpop.f32.mrf.mxu0
        %v2413 = vadd.f32 %v2324, %v2412
        %2414 = vmatmul.bf16.gmra.mxu0 %v1287
        %v2415 = vpop.f32.mrf.mxu0
        %v2416 = vadd.f32 %v2327, %v2415
        %v2417 = vpop.f32.mrf.mxu0
        %v2418 = vadd.f32 %v2329, %v2417
        %2419 = vmatmul.bf16.gmra.mxu0 %v1290
        %v2420 = vpop.f32.mrf.mxu0
        %v2421 = vadd.f32 %v2332, %v2420
        %v2422 = vpop.f32.mrf.mxu0
        %v2423 = vadd.f32 %v2334, %v2422
        %2424 = vmatmul.bf16.gmra.mxu0 %v1293
        %v2425 = vpop.f32.mrf.mxu0
        %v2426 = vadd.f32 %v2337, %v2425
        %v2427 = vpop.f32.mrf.mxu0
        %v2428 = vadd.f32 %v2339, %v2427
        %2429 = vmatmul.bf16.gmra.mxu0 %v1296
        %v2430 = vpop.f32.mrf.mxu0
        %v2431 = vadd.f32 %v2342, %v2430
        %v2432 = vpop.f32.mrf.mxu0
        %v2433 = vadd.f32 %v2344, %v2432
        %2434 = vmatmul.bf16.gmra.mxu0 %v1299
        %v2435 = vpop.f32.mrf.mxu0
        %v2436 = vadd.f32 %v2347, %v2435
        %v2437 = vpop.f32.mrf.mxu0
        %v2438 = vadd.f32 %v2349, %v2437
        %2439 = vmatmul.bf16.gmra.mxu0 %v1296
        %v2440 = vpop.f32.mrf.mxu0
        %v2441 = vadd.f32 %v2352, %v2440
        %v2442 = vpop.f32.mrf.mxu0
        %v2443 = vadd.f32 %v2354, %v2442
        %2444 = vdwg.mxu0
        %2445 = vmatpush.bf16.msra.mxu0 %v1660
        %2446 = vmatpush.bf16.msra.mxu0 %v1659
        %2447 = vmatpush.bf16.msra.mxu0 %v1658
        %2448 = vmatpush.bf16.msra.mxu0 %v1657
        %2449 = vmatpush.bf16.msra.mxu0 %v1656
        %2450 = vmatpush.bf16.msra.mxu0 %v1655
        %2451 = vmatpush.bf16.msra.mxu0 %v1654
        %2452 = vmatpush.bf16.msra.mxu0 %v1653
        %2453 = vmatmul.bf16.gmra.mxu0 %v1255
        %v2454 = vpop.f32.mrf.mxu0
        %v2455 = vadd.f32 %v2366, %v2454
        %v2456 = vpop.f32.mrf.mxu0
        %v2457 = vadd.f32 %v2368, %v2456
        %2458 = vmatmul.bf16.gmra.mxu0 %v1261
        %v2459 = vpop.f32.mrf.mxu0
        %v2460 = vadd.f32 %v2371, %v2459
        %v2461 = vpop.f32.mrf.mxu0
        %v2462 = vadd.f32 %v2373, %v2461
        %2463 = vmatmul.bf16.gmra.mxu0 %v1264
        %v2464 = vpop.f32.mrf.mxu0
        %v2465 = vadd.f32 %v2376, %v2464
        %v2466 = vpop.f32.mrf.mxu0
        %v2467 = vadd.f32 %v2378, %v2466
        %2468 = vmatmul.bf16.gmra.mxu0 %v1267
        %v2469 = vpop.f32.mrf.mxu0
        %v2470 = vadd.f32 %v2381, %v2469
        %v2471 = vpop.f32.mrf.mxu0
        %v2472 = vadd.f32 %v2383, %v2471
        %2473 = vmatmul.bf16.gmra.mxu0 %v1270
        %v2474 = vpop.f32.mrf.mxu0
        %v2475 = vadd.f32 %v2386, %v2474
        %v2476 = vpop.f32.mrf.mxu0
        %v2477 = vadd.f32 %v2388, %v2476
        %2478 = vmatmul.bf16.gmra.mxu0 %v1273
        %v2479 = vpop.f32.mrf.mxu0
        %v2480 = vadd.f32 %v2391, %v2479
        %v2481 = vpop.f32.mrf.mxu0
        %v2482 = vadd.f32 %v2393, %v2481
        %2483 = vmatmul.bf16.gmra.mxu0 %v1276
        %v2484 = vpop.f32.mrf.mxu0
        %v2485 = vadd.f32 %v2396, %v2484
        %v2486 = vpop.f32.mrf.mxu0
        %v2487 = vadd.f32 %v2398, %v2486
        %2488 = vmatmul.bf16.gmra.mxu0 %v1279
        %v2489 = vpop.f32.mrf.mxu0
        %v2490 = vadd.f32 %v2401, %v2489
        %v2491 = vpop.f32.mrf.mxu0
        %v2492 = vadd.f32 %v2403, %v2491
        %2493 = vmatmul.bf16.gmra.mxu0 %v1282
        %v2494 = vpop.f32.mrf.mxu0
        %v2495 = vadd.f32 %v2406, %v2494
        %v2496 = vpop.f32.mrf.mxu0
        %v2497 = vadd.f32 %v2408, %v2496
        %2498 = vmatmul.bf16.gmra.mxu0 %v1285
        %v2499 = vpop.f32.mrf.mxu0
        %v2500 = vadd.f32 %v2411, %v2499
        %v2501 = vpop.f32.mrf.mxu0
        %v2502 = vadd.f32 %v2413, %v2501
        %2503 = vmatmul.bf16.gmra.mxu0 %v1288
        %v2504 = vpop.f32.mrf.mxu0
        %v2505 = vadd.f32 %v2416, %v2504
        %v2506 = vpop.f32.mrf.mxu0
        %v2507 = vadd.f32 %v2418, %v2506
        %2508 = vmatmul.bf16.gmra.mxu0 %v1291
        %v2509 = vpop.f32.mrf.mxu0
        %v2510 = vadd.f32 %v2421, %v2509
        %v2511 = vpop.f32.mrf.mxu0
        %v2512 = vadd.f32 %v2423, %v2511
        %2513 = vmatmul.bf16.gmra.mxu0 %v1294
        %v2514 = vpop.f32.mrf.mxu0
        %v2515 = vadd.f32 %v2426, %v2514
        %v2516 = vpop.f32.mrf.mxu0
        %v2517 = vadd.f32 %v2428, %v2516
        %2518 = vmatmul.bf16.gmra.mxu0 %v1297
        %v2519 = vpop.f32.mrf.mxu0
        %v2520 = vadd.f32 %v2431, %v2519
        %v2521 = vpop.f32.mrf.mxu0
        %v2522 = vadd.f32 %v2433, %v2521
        %2523 = vmatmul.bf16.gmra.mxu0 %v1300
        %v2524 = vpop.f32.mrf.mxu0
        %v2525 = vadd.f32 %v2436, %v2524
        %v2526 = vpop.f32.mrf.mxu0
        %v2527 = vadd.f32 %v2438, %v2526
        %2528 = vmatmul.bf16.gmra.mxu0 %v1297
        %v2529 = vpop.f32.mrf.mxu0
        %v2530 = vadd.f32 %v2441, %v2529
        %v2531 = vpop.f32.mrf.mxu0
        %v2532 = vadd.f32 %v2443, %v2531
        %2533 = vdwg.mxu0
        %v2535 = vperm.slane %v769, 0
        %v2537 = vadd.f32 %v2455, %v2535
        %v2538 = vadd.f32 %v2457, %v2535
        %v2539 = vadd.f32 %v2460, %v2535
        %v2540 = vadd.f32 %v2462, %v2535
        %v2541 = vadd.f32 %v2465, %v2535
        %v2542 = vadd.f32 %v2467, %v2535
        %v2543 = vadd.f32 %v2470, %v2535
        %v2544 = vadd.f32 %v2472, %v2535
        %v2545 = vadd.f32 %v2475, %v2535
        %v2546 = vadd.f32 %v2477, %v2535
        %v2547 = vadd.f32 %v2480, %v2535
        %v2548 = vadd.f32 %v2482, %v2535
        %v2549 = vadd.f32 %v2485, %v2535
        %v2550 = vadd.f32 %v2487, %v2535
        %v2551 = vadd.f32 %v2490, %v2535
        %v2552 = vadd.f32 %v2492, %v2535
        %v2553 = vadd.f32 %v2495, %v2535
        %v2554 = vadd.f32 %v2497, %v2535
        %v2555 = vadd.f32 %v2500, %v2535
        %v2556 = vadd.f32 %v2502, %v2535
        %v2557 = vadd.f32 %v2505, %v2535
        %v2558 = vadd.f32 %v2507, %v2535
        %v2559 = vadd.f32 %v2510, %v2535
        %v2560 = vadd.f32 %v2512, %v2535
        %v2561 = vadd.f32 %v2515, %v2535
        %v2562 = vadd.f32 %v2517, %v2535
        %v2563 = vadd.f32 %v2520, %v2535
        %v2564 = vadd.f32 %v2522, %v2535
        %v2565 = vadd.f32 %v2525, %v2535
        %v2566 = vadd.f32 %v2527, %v2535
        %v2567 = vadd.f32 %v2530, %v2535
        %v2568 = vadd.f32 %v2532, %v2535
        %vm2569 = vcmp.ge.f32.partialorder %v2537, 0.0
        %vm2570 = vcmp.ge.f32.partialorder %v2538, 0.0
        %vm2571 = vcmp.ge.f32.partialorder %v2539, 0.0
        %vm2572 = vcmp.ge.f32.partialorder %v2540, 0.0
        %vm2573 = vcmp.ge.f32.partialorder %v2541, 0.0
        %vm2574 = vcmp.ge.f32.partialorder %v2542, 0.0
        %vm2575 = vcmp.ge.f32.partialorder %v2543, 0.0
        %vm2576 = vcmp.ge.f32.partialorder %v2544, 0.0
        %vm2577 = vcmp.ge.f32.partialorder %v2545, 0.0
        %vm2578 = vcmp.ge.f32.partialorder %v2546, 0.0
        %vm2579 = vcmp.ge.f32.partialorder %v2547, 0.0
        %vm2580 = vcmp.ge.f32.partialorder %v2548, 0.0
        %vm2581 = vcmp.ge.f32.partialorder %v2549, 0.0
        %vm2582 = vcmp.ge.f32.partialorder %v2550, 0.0
        %vm2583 = vcmp.ge.f32.partialorder %v2551, 0.0
        %vm2584 = vcmp.ge.f32.partialorder %v2552, 0.0
        %vm2585 = vcmp.ge.f32.partialorder %v2553, 0.0
        %vm2586 = vcmp.ge.f32.partialorder %v2554, 0.0
        %vm2587 = vcmp.ge.f32.partialorder %v2555, 0.0
        %vm2588 = vcmp.ge.f32.partialorder %v2556, 0.0
        %vm2589 = vcmp.ge.f32.partialorder %v2557, 0.0
        %vm2590 = vcmp.ge.f32.partialorder %v2558, 0.0
        %vm2591 = vcmp.ge.f32.partialorder %v2559, 0.0
        %vm2592 = vcmp.ge.f32.partialorder %v2560, 0.0
        %vm2593 = vcmp.ge.f32.partialorder %v2561, 0.0
        %vm2594 = vcmp.ge.f32.partialorder %v2562, 0.0
        %vm2595 = vcmp.ge.f32.partialorder %v2563, 0.0
        %vm2596 = vcmp.ge.f32.partialorder %v2564, 0.0
        %vm2597 = vcmp.ge.f32.partialorder %v2565, 0.0
        %vm2598 = vcmp.ge.f32.partialorder %v2566, 0.0
        %vm2599 = vcmp.ge.f32.partialorder %v2567, 0.0
        %vm2600 = vcmp.ge.f32.partialorder %v2568, 0.0
        %v2601 = vmul.f32 %v2537, 0.2
        %v2602 = vmul.f32 %v2538, 0.2
        %v2603 = vmul.f32 %v2539, 0.2
        %v2604 = vmul.f32 %v2540, 0.2
        %v2605 = vmul.f32 %v2541, 0.2
        %v2606 = vmul.f32 %v2542, 0.2
        %v2607 = vmul.f32 %v2543, 0.2
        %v2608 = vmul.f32 %v2544, 0.2
        %v2609 = vmul.f32 %v2545, 0.2
        %v2610 = vmul.f32 %v2546, 0.2
        %v2611 = vmul.f32 %v2547, 0.2
        %v2612 = vmul.f32 %v2548, 0.2
        %v2613 = vmul.f32 %v2549, 0.2
        %v2614 = vmul.f32 %v2550, 0.2
        %v2615 = vmul.f32 %v2551, 0.2
        %v2616 = vmul.f32 %v2552, 0.2
        %v2617 = vmul.f32 %v2553, 0.2
        %v2618 = vmul.f32 %v2554, 0.2
        %v2619 = vmul.f32 %v2555, 0.2
        %v2620 = vmul.f32 %v2556, 0.2
        %v2621 = vmul.f32 %v2557, 0.2
        %v2622 = vmul.f32 %v2558, 0.2
        %v2623 = vmul.f32 %v2559, 0.2
        %v2624 = vmul.f32 %v2560, 0.2
        %v2625 = vmul.f32 %v2561, 0.2
        %v2626 = vmul.f32 %v2562, 0.2
        %v2627 = vmul.f32 %v2563, 0.2
        %v2628 = vmul.f32 %v2564, 0.2
        %v2629 = vmul.f32 %v2565, 0.2
        %v2630 = vmul.f32 %v2566, 0.2
        %v2631 = vmul.f32 %v2567, 0.2
        %v2632 = vmul.f32 %v2568, 0.2
        %v2633 = vsel %vm2569, %v2537, %v2601
        %v2634 = vsel %vm2570, %v2538, %v2602
        %v2635 = vsel %vm2571, %v2539, %v2603
        %v2636 = vsel %vm2572, %v2540, %v2604
        %v2637 = vsel %vm2573, %v2541, %v2605
        %v2638 = vsel %vm2574, %v2542, %v2606
        %v2639 = vsel %vm2575, %v2543, %v2607
        %v2640 = vsel %vm2576, %v2544, %v2608
        %v2641 = vsel %vm2577, %v2545, %v2609
        %v2642 = vsel %vm2578, %v2546, %v2610
        %v2643 = vsel %vm2579, %v2547, %v2611
        %v2644 = vsel %vm2580, %v2548, %v2612
        %v2645 = vsel %vm2581, %v2549, %v2613
        %v2646 = vsel %vm2582, %v2550, %v2614
        %v2647 = vsel %vm2583, %v2551, %v2615
        %v2648 = vsel %vm2584, %v2552, %v2616
        %v2649 = vsel %vm2585, %v2553, %v2617
        %v2650 = vsel %vm2586, %v2554, %v2618
        %v2651 = vsel %vm2587, %v2555, %v2619
        %v2652 = vsel %vm2588, %v2556, %v2620
        %v2653 = vsel %vm2589, %v2557, %v2621
        %v2654 = vsel %vm2590, %v2558, %v2622
        %v2655 = vsel %vm2591, %v2559, %v2623
        %v2656 = vsel %vm2592, %v2560, %v2624
        %v2657 = vsel %vm2593, %v2561, %v2625
        %v2658 = vsel %vm2594, %v2562, %v2626
        %v2659 = vsel %vm2595, %v2563, %v2627
        %v2660 = vsel %vm2596, %v2564, %v2628
        %v2661 = vsel %vm2597, %v2565, %v2629
        %v2662 = vsel %vm2598, %v2566, %v2630
        %v2663 = vsel %vm2599, %v2567, %v2631
        %v2664 = vsel %vm2600, %v2568, %v2632
        %v2665 = vld [vmem:[%s425] sm:$0xf]
        %v2666 = vld [vmem:[%s425 + $0x4] sm:$0xf]
        %v2667 = vld [vmem:[%s425 + $0x8] sm:$0xf]
        %v2668 = vld [vmem:[%s425 + $0xc] sm:$0xf]
        %v2669 = vld [vmem:[%s425 + $0x10] sm:$0xf]
        %v2670 = vld [vmem:[%s425 + $0x14] sm:$0xf]
        %v2671 = vld [vmem:[%s425 + $0x18] sm:$0xf]
        %v2672 = vld [vmem:[%s425 + $0x1c] sm:$0xf]
        %v2673 = vld [vmem:[%s425 + $0x20] sm:$0xf]
        %v2674 = vld [vmem:[%s425 + $0x24] sm:$0xf]
        %v2675 = vld [vmem:[%s425 + $0x28] sm:$0xf]
        %v2676 = vld [vmem:[%s425 + $0x2c] sm:$0xf]
        %v2677 = vld [vmem:[%s425 + $0x30] sm:$0xf]
        %v2678 = vld [vmem:[%s425 + $0x34] sm:$0xf]
        %v2679 = vld [vmem:[%s425 + $0x38] sm:$0xf]
        %v2680 = vld [vmem:[%s425 + $0x3c] sm:$0xf]
        %v2681 = vld [vmem:[%s425 + $0x40] sm:$0xf]
        %v2682 = vld [vmem:[%s425 + $0x44] sm:$0xf]
        %v2683 = vld [vmem:[%s425 + $0x48] sm:$0xf]
        %v2684 = vld [vmem:[%s425 + $0x4c] sm:$0xf]
        %v2685 = vld [vmem:[%s425 + $0x50] sm:$0xf]
        %v2686 = vld [vmem:[%s425 + $0x54] sm:$0xf]
        %v2687 = vld [vmem:[%s425 + $0x58] sm:$0xf]
        %v2688 = vld [vmem:[%s425 + $0x5c] sm:$0xf]
        %v2689 = vld [vmem:[%s425 + $0x60] sm:$0xf]
        %v2690 = vld [vmem:[%s425 + $0x64] sm:$0xf]
        %v2691 = vld [vmem:[%s425 + $0x68] sm:$0xf]
        %v2692 = vld [vmem:[%s425 + $0x6c] sm:$0xf]
        %v2693 = vld [vmem:[%s425 + $0x70] sm:$0xf]
        %v2694 = vld [vmem:[%s425 + $0x74] sm:$0xf]
        %v2695 = vld [vmem:[%s425 + $0x78] sm:$0xf]
        %v2696 = vld [vmem:[%s425 + $0x7c] sm:$0xf]
        %v2697 = vld [vmem:[%s425 + $0x80] sm:$0xf]
        %v2698 = vld [vmem:[%s425 + $0x84] sm:$0xf]
        %v2699 = vld [vmem:[%s425 + $0x88] sm:$0xf]
        %v2700 = vld [vmem:[%s425 + $0x8c] sm:$0xf]
        %v2701 = vld [vmem:[%s425 + $0x90] sm:$0xf]
        %v2702 = vld [vmem:[%s425 + $0x94] sm:$0xf]
        %v2703 = vld [vmem:[%s425 + $0x98] sm:$0xf]
        %v2704 = vld [vmem:[%s425 + $0x9c] sm:$0xf]
        %v2705 = vld [vmem:[%s425 + $0xa0] sm:$0xf]
        %v2706 = vld [vmem:[%s425 + $0xa4] sm:$0xf]
        %v2707 = vld [vmem:[%s425 + $0xa8] sm:$0xf]
        %v2708 = vld [vmem:[%s425 + $0xac] sm:$0xf]
        %v2709 = vld [vmem:[%s425 + $0xb0] sm:$0xf]
        %v2710 = vld [vmem:[%s425 + $0xb4] sm:$0xf]
        %v2711 = vld [vmem:[%s425 + $0xb8] sm:$0xf]
        %v2712 = vld [vmem:[%s425 + $0xbc] sm:$0xf]
        %v2713 = vld [vmem:[%s425 + $0xc0] sm:$0xf]
        %v2714 = vld [vmem:[%s425 + $0xc4] sm:$0xf]
        %v2715 = vld [vmem:[%s425 + $0xc8] sm:$0xf]
        %v2716 = vld [vmem:[%s425 + $0xcc] sm:$0xf]
        %v2717 = vld [vmem:[%s425 + $0xd0] sm:$0xf]
        %v2718 = vld [vmem:[%s425 + $0xd4] sm:$0xf]
        %v2719 = vld [vmem:[%s425 + $0xd8] sm:$0xf]
        %v2720 = vld [vmem:[%s425 + $0xdc] sm:$0xf]
        %v2721 = vld [vmem:[%s425 + $0xe0] sm:$0xf]
        %v2722 = vld [vmem:[%s425 + $0xe4] sm:$0xf]
        %v2723 = vld [vmem:[%s425 + $0xe8] sm:$0xf]
        %v2724 = vld [vmem:[%s425 + $0xec] sm:$0xf]
        %v2725 = vld [vmem:[%s425 + $0xf0] sm:$0xf]
        %v2726 = vld [vmem:[%s425 + $0xf4] sm:$0xf]
        %v2727 = vld [vmem:[%s425 + $0xf8] sm:$0xf]
        %v2728 = vld [vmem:[%s425 + $0xfc] sm:$0xf]
        %v2729 = vld [vmem:[%s425 + $0x100] sm:$0xf]
        %v2730 = vld [vmem:[%s425 + $0x104] sm:$0xf]
        %v2731 = vld [vmem:[%s425 + $0x108] sm:$0xf]
        %v2732 = vld [vmem:[%s425 + $0x10c] sm:$0xf]
        %v2733 = vld [vmem:[%s425 + $0x110] sm:$0xf]
        %v2734 = vld [vmem:[%s425 + $0x114] sm:$0xf]
        %v2735 = vld [vmem:[%s425 + $0x118] sm:$0xf]
        %v2736 = vld [vmem:[%s425 + $0x11c] sm:$0xf]
        %v2737 = vld [vmem:[%s425 + $0x120] sm:$0xf]
        %v2738 = vld [vmem:[%s425 + $0x124] sm:$0xf]
        %v2739 = vld [vmem:[%s425 + $0x128] sm:$0xf]
        %v2740 = vld [vmem:[%s425 + $0x12c] sm:$0xf]
        %v2741 = vld [vmem:[%s425 + $0x130] sm:$0xf]
        %v2742 = vld [vmem:[%s425 + $0x134] sm:$0xf]
        %v2743 = vld [vmem:[%s425 + $0x138] sm:$0xf]
        %v2744 = vld [vmem:[%s425 + $0x13c] sm:$0xf]
        %v2745 = vld [vmem:[%s425 + $0x140] sm:$0xf]
        %v2746 = vld [vmem:[%s425 + $0x144] sm:$0xf]
        %v2747 = vld [vmem:[%s425 + $0x148] sm:$0xf]
        %v2748 = vld [vmem:[%s425 + $0x14c] sm:$0xf]
        %v2749 = vld [vmem:[%s425 + $0x150] sm:$0xf]
        %v2750 = vld [vmem:[%s425 + $0x154] sm:$0xf]
        %v2751 = vld [vmem:[%s425 + $0x158] sm:$0xf]
        %v2752 = vld [vmem:[%s425 + $0x15c] sm:$0xf]
        %v2753 = vld [vmem:[%s425 + $0x160] sm:$0xf]
        %v2754 = vld [vmem:[%s425 + $0x164] sm:$0xf]
        %v2755 = vld [vmem:[%s425 + $0x168] sm:$0xf]
        %v2756 = vld [vmem:[%s425 + $0x16c] sm:$0xf]
        %v2757 = vld [vmem:[%s425 + $0x170] sm:$0xf]
        %v2758 = vld [vmem:[%s425 + $0x174] sm:$0xf]
        %v2759 = vld [vmem:[%s425 + $0x178] sm:$0xf]
        %v2760 = vld [vmem:[%s425 + $0x17c] sm:$0xf]
        %v2761 = vld [vmem:[%s425 + $0x180] sm:$0xf]
        %v2762 = vld [vmem:[%s425 + $0x184] sm:$0xf]
        %v2763 = vld [vmem:[%s425 + $0x188] sm:$0xf]
        %v2764 = vld [vmem:[%s425 + $0x18c] sm:$0xf]
        %v2765 = vld [vmem:[%s425 + $0x190] sm:$0xf]
        %v2766 = vld [vmem:[%s425 + $0x194] sm:$0xf]
        %v2767 = vld [vmem:[%s425 + $0x198] sm:$0xf]
        %v2768 = vld [vmem:[%s425 + $0x19c] sm:$0xf]
        %v2769 = vld [vmem:[%s425 + $0x1a0] sm:$0xf]
        %v2770 = vld [vmem:[%s425 + $0x1a4] sm:$0xf]
        %v2771 = vld [vmem:[%s425 + $0x1a8] sm:$0xf]
        %v2772 = vld [vmem:[%s425 + $0x1ac] sm:$0xf]
        %v2773 = vld [vmem:[%s425 + $0x1b0] sm:$0xf]
        %v2774 = vld [vmem:[%s425 + $0x1b4] sm:$0xf]
        %v2775 = vld [vmem:[%s425 + $0x1b8] sm:$0xf]
        %v2776 = vld [vmem:[%s425 + $0x1bc] sm:$0xf]
        %v2777 = vld [vmem:[%s425 + $0x1c0] sm:$0xf]
        %v2778 = vld [vmem:[%s425 + $0x1c4] sm:$0xf]
        %v2779 = vld [vmem:[%s425 + $0x1c8] sm:$0xf]
        %v2780 = vld [vmem:[%s425 + $0x1cc] sm:$0xf]
        %v2781 = vld [vmem:[%s425 + $0x1d0] sm:$0xf]
        %v2782 = vld [vmem:[%s425 + $0x1d4] sm:$0xf]
        %v2783 = vld [vmem:[%s425 + $0x1d8] sm:$0xf]
        %v2784 = vld [vmem:[%s425 + $0x1dc] sm:$0xf]
        %v2785 = vld [vmem:[%s425 + $0x1e0] sm:$0xf]
        %v2786 = vld [vmem:[%s425 + $0x1e4] sm:$0xf]
        %v2787 = vld [vmem:[%s425 + $0x1e8] sm:$0xf]
        %v2788 = vld [vmem:[%s425 + $0x1ec] sm:$0xf]
        %v2789 = vld [vmem:[%s425 + $0x1f0] sm:$0xf]
        %v2790 = vld [vmem:[%s425 + $0x1f4] sm:$0xf]
        %v2791 = vld [vmem:[%s425 + $0x1f8] sm:$0xf]
        %v2792 = vld [vmem:[%s425 + $0x1fc] sm:$0xf]
        %v2793 = vld [vmem:[%s425 + $0x200] sm:$0xf]
        %v2794 = vld [vmem:[%s425 + $0x204] sm:$0xf]
        %v2795 = vld [vmem:[%s425 + $0x208] sm:$0xf]
        %v2796 = vld [vmem:[%s425 + $0x20c] sm:$0xf]
        %v2797 = vld [vmem:[%s425 + $0x210] sm:$0xf]
        %v2798 = vld [vmem:[%s425 + $0x214] sm:$0xf]
        %v2799 = vld [vmem:[%s425 + $0x218] sm:$0xf]
        %v2800 = vld [vmem:[%s425 + $0x21c] sm:$0xf]
        %v2801 = vld [vmem:[%s425 + $0x220] sm:$0xf]
        %v2802 = vld [vmem:[%s425 + $0x224] sm:$0xf]
        %v2803 = vld [vmem:[%s425 + $0x228] sm:$0xf]
        %v2804 = vld [vmem:[%s425 + $0x22c] sm:$0xf]
        %v2805 = vld [vmem:[%s425 + $0x230] sm:$0xf]
        %v2806 = vld [vmem:[%s425 + $0x234] sm:$0xf]
        %v2807 = vld [vmem:[%s425 + $0x238] sm:$0xf]
        %v2808 = vld [vmem:[%s425 + $0x23c] sm:$0xf]
        %v2809 = vld [vmem:[%s503] sm:$0x1]
        %v2826 = vrot.slane %v2635, 1
        %v2827 = vrot.slane %v2633, 1
        %v2828 = vrot.slane %v2637, 1
        %v2829 = vrot.slane %v2639, 1
        %v2830 = vrot.slane %v2641, 1
        %v2831 = vrot.slane %v2643, 1
        %v2832 = vrot.slane %v2645, 1
        %v2833 = vrot.slane %v2647, 1
        %v2834 = vrot.slane %v2649, 1
        %v2835 = vrot.slane %v2651, 1
        %v2836 = vrot.slane %v2653, 1
        %v2837 = vrot.slane %v2655, 1
        %v2838 = vrot.slane %v2657, 1
        %v2839 = vrot.slane %v2659, 1
        %v2840 = vrot.slane %v2661, 1
        %v2841 = vrot.slane %v2663, 1
        %v2874 = vrot.slane %v2635, 7
        %v2875 = vrot.slane %v2636, 7
        %v2876 = vsel %vm834, %v2874, %v2875
        %v2877 = vrot.slane %v2633, 7
        %v2878 = vrot.slane %v2634, 7
        %v2879 = vsel %vm834, %v2877, %v2878
        %v2880 = vrot.slane %v2637, 7
        %v2881 = vrot.slane %v2638, 7
        %v2882 = vsel %vm834, %v2880, %v2881
        %v2883 = vrot.slane %v2639, 7
        %v2884 = vrot.slane %v2640, 7
        %v2885 = vsel %vm834, %v2883, %v2884
        %v2886 = vrot.slane %v2641, 7
        %v2887 = vrot.slane %v2642, 7
        %v2888 = vsel %vm834, %v2886, %v2887
        %v2889 = vrot.slane %v2643, 7
        %v2890 = vrot.slane %v2644, 7
        %v2891 = vsel %vm834, %v2889, %v2890
        %v2892 = vrot.slane %v2645, 7
        %v2893 = vrot.slane %v2646, 7
        %v2894 = vsel %vm834, %v2892, %v2893
        %v2895 = vrot.slane %v2647, 7
        %v2896 = vrot.slane %v2648, 7
        %v2897 = vsel %vm834, %v2895, %v2896
        %v2898 = vrot.slane %v2649, 7
        %v2899 = vrot.slane %v2650, 7
        %v2900 = vsel %vm834, %v2898, %v2899
        %v2901 = vrot.slane %v2651, 7
        %v2902 = vrot.slane %v2652, 7
        %v2903 = vsel %vm834, %v2901, %v2902
        %v2904 = vrot.slane %v2653, 7
        %v2905 = vrot.slane %v2654, 7
        %v2906 = vsel %vm834, %v2904, %v2905
        %v2907 = vrot.slane %v2655, 7
        %v2908 = vrot.slane %v2656, 7
        %v2909 = vsel %vm834, %v2907, %v2908
        %v2910 = vrot.slane %v2657, 7
        %v2911 = vrot.slane %v2658, 7
        %v2912 = vsel %vm834, %v2910, %v2911
        %v2913 = vrot.slane %v2659, 7
        %v2914 = vrot.slane %v2660, 7
        %v2915 = vsel %vm834, %v2913, %v2914
        %v2916 = vrot.slane %v2661, 7
        %v2917 = vrot.slane %v2662, 7
        %v2918 = vsel %vm834, %v2916, %v2917
        %v2919 = vrot.slane %v2663, 7
        %v2920 = vrot.slane %v2664, 7
        %v2921 = vsel %vm834, %v2919, %v2920
        %v2970 = vrot.slane %v2636, 5
        %v2971 = vrot.slane %v2634, 5
        %v2972 = vrot.slane %v2638, 5
        %v2973 = vrot.slane %v2640, 5
        %v2974 = vrot.slane %v2642, 5
        %v2975 = vrot.slane %v2644, 5
        %v2976 = vrot.slane %v2646, 5
        %v2977 = vrot.slane %v2648, 5
        %v2978 = vrot.slane %v2650, 5
        %v2979 = vrot.slane %v2652, 5
        %v2980 = vrot.slane %v2654, 5
        %v2981 = vrot.slane %v2656, 5
        %v2982 = vrot.slane %v2658, 5
        %v2983 = vrot.slane %v2660, 5
        %v2984 = vrot.slane %v2662, 5
        %v2985 = vrot.slane %v2664, 5
        %v3002 = vsel %vm834, %v2826, %v2874
        %v3003 = vsel %vm834, %v2827, %v2877
        %v3004 = vsel %vm834, %v2828, %v2880
        %v3005 = vsel %vm834, %v2829, %v2883
        %v3006 = vsel %vm834, %v2830, %v2886
        %v3007 = vsel %vm834, %v2831, %v2889
        %v3008 = vsel %vm834, %v2832, %v2892
        %v3009 = vsel %vm834, %v2833, %v2895
        %v3010 = vsel %vm834, %v2834, %v2898
        %v3011 = vsel %vm834, %v2835, %v2901
        %v3012 = vsel %vm834, %v2836, %v2904
        %v3013 = vsel %vm834, %v2837, %v2907
        %v3014 = vsel %vm834, %v2838, %v2910
        %v3015 = vsel %vm834, %v2839, %v2913
        %v3016 = vsel %vm834, %v2840, %v2916
        %v3017 = vsel %vm834, %v2841, %v2919
        %v3018 = vsel %vm834, %v2875, %v2970
        %v3019 = vsel %vm834, %v2878, %v2971
        %v3020 = vsel %vm834, %v2881, %v2972
        %v3021 = vsel %vm834, %v2884, %v2973
        %v3022 = vsel %vm834, %v2887, %v2974
        %v3023 = vsel %vm834, %v2890, %v2975
        %v3024 = vsel %vm834, %v2893, %v2976
        %v3025 = vsel %vm834, %v2896, %v2977
        %v3026 = vsel %vm834, %v2899, %v2978
        %v3027 = vsel %vm834, %v2902, %v2979
        %v3028 = vsel %vm834, %v2905, %v2980
        %v3029 = vsel %vm834, %v2908, %v2981
        %v3030 = vsel %vm834, %v2911, %v2982
        %v3031 = vsel %vm834, %v2914, %v2983
        %v3032 = vsel %vm834, %v2917, %v2984
        %v3033 = vsel %vm834, %v2920, %v2985
        %v3064 = vrot.slane %v3002, 1
        %v3065 = vrot.slane %v2876, 1
        %v3066 = vsel %vm1025, %v3064, %v3065
        %v3067 = vrot.slane %v3018, 1
        %v3068 = vsel %vm1025, %v3065, %v3067
        %v3069 = vrot.slane %v3003, 1
        %v3070 = vrot.slane %v2879, 1
        %v3071 = vsel %vm1025, %v3069, %v3070
        %v3072 = vrot.slane %v3019, 1
        %v3073 = vsel %vm1025, %v3070, %v3072
        %v3074 = vrot.slane %v3004, 1
        %v3075 = vrot.slane %v2882, 1
        %v3076 = vsel %vm1025, %v3074, %v3075
        %v3077 = vrot.slane %v3020, 1
        %v3078 = vsel %vm1025, %v3075, %v3077
        %v3079 = vrot.slane %v3005, 1
        %v3080 = vrot.slane %v2885, 1
        %v3081 = vsel %vm1025, %v3079, %v3080
        %v3082 = vrot.slane %v3021, 1
        %v3083 = vsel %vm1025, %v3080, %v3082
        %v3084 = vrot.slane %v3006, 1
        %v3085 = vrot.slane %v2888, 1
        %v3086 = vsel %vm1025, %v3084, %v3085
        %v3087 = vrot.slane %v3022, 1
        %v3088 = vsel %vm1025, %v3085, %v3087
        %v3089 = vrot.slane %v3007, 1
        %v3090 = vrot.slane %v2891, 1
        %v3091 = vsel %vm1025, %v3089, %v3090
        %v3092 = vrot.slane %v3023, 1
        %v3093 = vsel %vm1025, %v3090, %v3092
        %v3094 = vrot.slane %v3008, 1
        %v3095 = vrot.slane %v2894, 1
        %v3096 = vsel %vm1025, %v3094, %v3095
        %v3097 = vrot.slane %v3024, 1
        %v3098 = vsel %vm1025, %v3095, %v3097
        %v3099 = vrot.slane %v3009, 1
        %v3100 = vrot.slane %v2897, 1
        %v3101 = vsel %vm1025, %v3099, %v3100
        %v3102 = vrot.slane %v3025, 1
        %v3103 = vsel %vm1025, %v3100, %v3102
        %v3104 = vrot.slane %v3010, 1
        %v3105 = vrot.slane %v2900, 1
        %v3106 = vsel %vm1025, %v3104, %v3105
        %v3107 = vrot.slane %v3026, 1
        %v3108 = vsel %vm1025, %v3105, %v3107
        %v3109 = vrot.slane %v3011, 1
        %v3110 = vrot.slane %v2903, 1
        %v3111 = vsel %vm1025, %v3109, %v3110
        %v3112 = vrot.slane %v3027, 1
        %v3113 = vsel %vm1025, %v3110, %v3112
        %v3114 = vrot.slane %v3012, 1
        %v3115 = vrot.slane %v2906, 1
        %v3116 = vsel %vm1025, %v3114, %v3115
        %v3117 = vrot.slane %v3028, 1
        %v3118 = vsel %vm1025, %v3115, %v3117
        %v3119 = vrot.slane %v3013, 1
        %v3120 = vrot.slane %v2909, 1
        %v3121 = vsel %vm1025, %v3119, %v3120
        %v3122 = vrot.slane %v3029, 1
        %v3123 = vsel %vm1025, %v3120, %v3122
        %v3124 = vrot.slane %v3014, 1
        %v3125 = vrot.slane %v2912, 1
        %v3126 = vsel %vm1025, %v3124, %v3125
        %v3127 = vrot.slane %v3030, 1
        %v3128 = vsel %vm1025, %v3125, %v3127
        %v3129 = vrot.slane %v3015, 1
        %v3130 = vrot.slane %v2915, 1
        %v3131 = vsel %vm1025, %v3129, %v3130
        %v3132 = vrot.slane %v3031, 1
        %v3133 = vsel %vm1025, %v3130, %v3132
        %v3134 = vrot.slane %v3016, 1
        %v3135 = vrot.slane %v2918, 1
        %v3136 = vsel %vm1025, %v3134, %v3135
        %v3137 = vrot.slane %v3032, 1
        %v3138 = vsel %vm1025, %v3135, %v3137
        %v3169 = vrot.slane %v3002, 2
        %v3170 = vrot.slane %v2876, 2
        %v3171 = vsel %vm1131, %v3169, %v3170
        %v3172 = vrot.slane %v3018, 2
        %v3173 = vsel %vm1131, %v3170, %v3172
        %v3174 = vrot.slane %v3003, 2
        %v3175 = vrot.slane %v2879, 2
        %v3176 = vsel %vm1131, %v3174, %v3175
        %v3177 = vrot.slane %v3019, 2
        %v3178 = vsel %vm1131, %v3175, %v3177
        %v3179 = vrot.slane %v3004, 2
        %v3180 = vrot.slane %v2882, 2
        %v3181 = vsel %vm1131, %v3179, %v3180
        %v3182 = vrot.slane %v3020, 2
        %v3183 = vsel %vm1131, %v3180, %v3182
        %v3184 = vrot.slane %v3005, 2
        %v3185 = vrot.slane %v2885, 2
        %v3186 = vsel %vm1131, %v3184, %v3185
        %v3187 = vrot.slane %v3021, 2
        %v3188 = vsel %vm1131, %v3185, %v3187
        %v3189 = vrot.slane %v3006, 2
        %v3190 = vrot.slane %v2888, 2
        %v3191 = vsel %vm1131, %v3189, %v3190
        %v3192 = vrot.slane %v3022, 2
        %v3193 = vsel %vm1131, %v3190, %v3192
        %v3194 = vrot.slane %v3007, 2
        %v3195 = vrot.slane %v2891, 2
        %v3196 = vsel %vm1131, %v3194, %v3195
        %v3197 = vrot.slane %v3023, 2
        %v3198 = vsel %vm1131, %v3195, %v3197
        %v3199 = vrot.slane %v3008, 2
        %v3200 = vrot.slane %v2894, 2
        %v3201 = vsel %vm1131, %v3199, %v3200
        %v3202 = vrot.slane %v3024, 2
        %v3203 = vsel %vm1131, %v3200, %v3202
        %v3204 = vrot.slane %v3009, 2
        %v3205 = vrot.slane %v2897, 2
        %v3206 = vsel %vm1131, %v3204, %v3205
        %v3207 = vrot.slane %v3025, 2
        %v3208 = vsel %vm1131, %v3205, %v3207
        %v3209 = vrot.slane %v3010, 2
        %v3210 = vrot.slane %v2900, 2
        %v3211 = vsel %vm1131, %v3209, %v3210
        %v3212 = vrot.slane %v3026, 2
        %v3213 = vsel %vm1131, %v3210, %v3212
        %v3214 = vrot.slane %v3011, 2
        %v3215 = vrot.slane %v2903, 2
        %v3216 = vsel %vm1131, %v3214, %v3215
        %v3217 = vrot.slane %v3027, 2
        %v3218 = vsel %vm1131, %v3215, %v3217
        %v3219 = vrot.slane %v3012, 2
        %v3220 = vrot.slane %v2906, 2
        %v3221 = vsel %vm1131, %v3219, %v3220
        %v3222 = vrot.slane %v3028, 2
        %v3223 = vsel %vm1131, %v3220, %v3222
        %v3224 = vrot.slane %v3013, 2
        %v3225 = vrot.slane %v2909, 2
        %v3226 = vsel %vm1131, %v3224, %v3225
        %v3227 = vrot.slane %v3029, 2
        %v3228 = vsel %vm1131, %v3225, %v3227
        %v3229 = vrot.slane %v3014, 2
        %v3230 = vrot.slane %v2912, 2
        %v3231 = vsel %vm1131, %v3229, %v3230
        %v3232 = vrot.slane %v3030, 2
        %v3233 = vsel %vm1131, %v3230, %v3232
        %v3234 = vrot.slane %v3015, 2
        %v3235 = vrot.slane %v2915, 2
        %v3236 = vsel %vm1131, %v3234, %v3235
        %v3237 = vrot.slane %v3031, 2
        %v3238 = vsel %vm1131, %v3235, %v3237
        %v3239 = vrot.slane %v3016, 2
        %v3240 = vrot.slane %v2918, 2
        %v3241 = vsel %vm1131, %v3239, %v3240
        %v3242 = vrot.slane %v3032, 2
        %v3243 = vsel %vm1131, %v3240, %v3242
        %v3276 = vrot.slane %v3017, 1
        %v3277 = vrot.slane %v2921, 1
        %v3278 = vsel %vm1025, %v3276, %v3277
        %v3279 = vrot.slane %v3033, 1
        %v3280 = vsel %vm1025, %v3277, %v3279
        %v3283 = vrot.slane %v3017, 2
        %v3284 = vrot.slane %v2921, 2
        %v3285 = vsel %vm1131, %v3283, %v3284
        %v3286 = vrot.slane %v3033, 2
        %v3287 = vsel %vm1131, %v3284, %v3286
        %v3290 = vpack.c.bf16 %v2876, %v3002
        %v3291 = vpack.c.bf16 %v3068, %v3066
        %v3292 = vpack.c.bf16 %v3173, %v3171
        %v3293 = vpack.c.bf16 %v2879, %v3003
        %v3294 = vpack.c.bf16 %v3073, %v3071
        %v3295 = vpack.c.bf16 %v3178, %v3176
        %v3296 = vpack.c.bf16 %v2882, %v3004
        %v3297 = vpack.c.bf16 %v3078, %v3076
        %v3298 = vpack.c.bf16 %v3183, %v3181
        %v3299 = vpack.c.bf16 %v2885, %v3005
        %v3300 = vpack.c.bf16 %v3083, %v3081
        %v3301 = vpack.c.bf16 %v3188, %v3186
        %v3302 = vpack.c.bf16 %v2888, %v3006
        %v3303 = vpack.c.bf16 %v3088, %v3086
        %v3304 = vpack.c.bf16 %v3193, %v3191
        %v3305 = vpack.c.bf16 %v2891, %v3007
        %v3306 = vpack.c.bf16 %v3093, %v3091
        %v3307 = vpack.c.bf16 %v3198, %v3196
        %v3308 = vpack.c.bf16 %v2894, %v3008
        %v3309 = vpack.c.bf16 %v3098, %v3096
        %v3310 = vpack.c.bf16 %v3203, %v3201
        %v3311 = vpack.c.bf16 %v2897, %v3009
        %v3312 = vpack.c.bf16 %v3103, %v3101
        %v3313 = vpack.c.bf16 %v3208, %v3206
        %v3314 = vpack.c.bf16 %v2900, %v3010
        %v3315 = vpack.c.bf16 %v3108, %v3106
        %v3316 = vpack.c.bf16 %v3213, %v3211
        %v3317 = vpack.c.bf16 %v2903, %v3011
        %v3318 = vpack.c.bf16 %v3113, %v3111
        %v3319 = vpack.c.bf16 %v3218, %v3216
        %v3320 = vpack.c.bf16 %v2906, %v3012
        %v3321 = vpack.c.bf16 %v3118, %v3116
        %v3322 = vpack.c.bf16 %v3223, %v3221
        %v3323 = vpack.c.bf16 %v2909, %v3013
        %v3324 = vpack.c.bf16 %v3123, %v3121
        %v3325 = vpack.c.bf16 %v3228, %v3226
        %v3326 = vpack.c.bf16 %v2912, %v3014
        %v3327 = vpack.c.bf16 %v3128, %v3126
        %v3328 = vpack.c.bf16 %v3233, %v3231
        %v3329 = vpack.c.bf16 %v2915, %v3015
        %v3330 = vpack.c.bf16 %v3133, %v3131
        %v3331 = vpack.c.bf16 %v3238, %v3236
        %v3332 = vpack.c.bf16 %v2918, %v3016
        %v3333 = vpack.c.bf16 %v3138, %v3136
        %v3334 = vpack.c.bf16 %v3243, %v3241
        %v3335 = vpack.c.bf16 %v2921, %v3017
        %v3336 = vpack.c.bf16 %v3280, %v3278
        %v3337 = vpack.c.bf16 %v3287, %v3285
        %v3482 = vunpack.c.l.b16 %v2665
        %v3483 = vunpack.c.l.b16 %v2666
        %v3484 = vunpack.c.l.b16 %v2667
        %v3485 = vunpack.c.l.b16 %v2668
        %v3486 = vunpack.c.l.b16 %v2669
        %v3487 = vunpack.c.l.b16 %v2670
        %v3488 = vunpack.c.l.b16 %v2671
        %v3489 = vunpack.c.l.b16 %v2672
        %v3490 = vunpack.c.l.b16 %v2673
        %v3491 = vunpack.c.l.b16 %v2674
        %v3492 = vunpack.c.l.b16 %v2675
        %v3493 = vunpack.c.l.b16 %v2676
        %v3494 = vunpack.c.l.b16 %v2677
        %v3495 = vunpack.c.l.b16 %v2678
        %v3496 = vunpack.c.l.b16 %v2679
        %v3497 = vunpack.c.l.b16 %v2680
        %v3498 = vunpack.c.l.b16 %v2681
        %v3499 = vunpack.c.l.b16 %v2682
        %v3500 = vunpack.c.l.b16 %v2683
        %v3501 = vunpack.c.l.b16 %v2684
        %v3502 = vunpack.c.l.b16 %v2685
        %v3503 = vunpack.c.l.b16 %v2686
        %v3504 = vunpack.c.l.b16 %v2687
        %v3505 = vunpack.c.l.b16 %v2688
        %v3506 = vunpack.c.l.b16 %v2689
        %v3507 = vunpack.c.l.b16 %v2690
        %v3508 = vunpack.c.l.b16 %v2691
        %v3509 = vunpack.c.l.b16 %v2692
        %v3510 = vunpack.c.l.b16 %v2693
        %v3511 = vunpack.c.l.b16 %v2694
        %v3512 = vunpack.c.l.b16 %v2695
        %v3513 = vunpack.c.l.b16 %v2696
        %v3514 = vunpack.c.l.b16 %v2697
        %v3515 = vunpack.c.l.b16 %v2698
        %v3516 = vunpack.c.l.b16 %v2699
        %v3517 = vunpack.c.l.b16 %v2700
        %v3518 = vunpack.c.l.b16 %v2701
        %v3519 = vunpack.c.l.b16 %v2702
        %v3520 = vunpack.c.l.b16 %v2703
        %v3521 = vunpack.c.l.b16 %v2704
        %v3522 = vunpack.c.l.b16 %v2705
        %v3523 = vunpack.c.l.b16 %v2706
        %v3524 = vunpack.c.l.b16 %v2707
        %v3525 = vunpack.c.l.b16 %v2708
        %v3526 = vunpack.c.l.b16 %v2709
        %v3527 = vunpack.c.l.b16 %v2710
        %v3528 = vunpack.c.l.b16 %v2711
        %v3529 = vunpack.c.l.b16 %v2712
        %v3530 = vunpack.c.l.b16 %v2713
        %v3531 = vunpack.c.l.b16 %v2714
        %v3532 = vunpack.c.l.b16 %v2715
        %v3533 = vunpack.c.l.b16 %v2716
        %v3534 = vunpack.c.l.b16 %v2717
        %v3535 = vunpack.c.l.b16 %v2718
        %v3536 = vunpack.c.l.b16 %v2719
        %v3537 = vunpack.c.l.b16 %v2720
        %v3538 = vunpack.c.l.b16 %v2721
        %v3539 = vunpack.c.l.b16 %v2722
        %v3540 = vunpack.c.l.b16 %v2723
        %v3541 = vunpack.c.l.b16 %v2724
        %v3542 = vunpack.c.l.b16 %v2725
        %v3543 = vunpack.c.l.b16 %v2726
        %v3544 = vunpack.c.l.b16 %v2727
        %v3545 = vunpack.c.l.b16 %v2728
        %v3546 = vunpack.c.l.b16 %v2729
        %v3547 = vunpack.c.l.b16 %v2730
        %v3548 = vunpack.c.l.b16 %v2731
        %v3549 = vunpack.c.l.b16 %v2732
        %v3550 = vunpack.c.l.b16 %v2733
        %v3551 = vunpack.c.l.b16 %v2734
        %v3552 = vunpack.c.l.b16 %v2735
        %v3553 = vunpack.c.l.b16 %v2736
        %v3554 = vunpack.c.l.b16 %v2737
        %v3555 = vunpack.c.l.b16 %v2738
        %v3556 = vunpack.c.l.b16 %v2739
        %v3557 = vunpack.c.l.b16 %v2740
        %v3558 = vunpack.c.l.b16 %v2741
        %v3559 = vunpack.c.l.b16 %v2742
        %v3560 = vunpack.c.l.b16 %v2743
        %v3561 = vunpack.c.l.b16 %v2744
        %v3562 = vunpack.c.l.b16 %v2745
        %v3563 = vunpack.c.l.b16 %v2746
        %v3564 = vunpack.c.l.b16 %v2747
        %v3565 = vunpack.c.l.b16 %v2748
        %v3566 = vunpack.c.l.b16 %v2749
        %v3567 = vunpack.c.l.b16 %v2750
        %v3568 = vunpack.c.l.b16 %v2751
        %v3569 = vunpack.c.l.b16 %v2752
        %v3570 = vunpack.c.l.b16 %v2753
        %v3571 = vunpack.c.l.b16 %v2754
        %v3572 = vunpack.c.l.b16 %v2755
        %v3573 = vunpack.c.l.b16 %v2756
        %v3574 = vunpack.c.l.b16 %v2757
        %v3575 = vunpack.c.l.b16 %v2758
        %v3576 = vunpack.c.l.b16 %v2759
        %v3577 = vunpack.c.l.b16 %v2760
        %v3578 = vunpack.c.l.b16 %v2761
        %v3579 = vunpack.c.l.b16 %v2762
        %v3580 = vunpack.c.l.b16 %v2763
        %v3581 = vunpack.c.l.b16 %v2764
        %v3582 = vunpack.c.l.b16 %v2765
        %v3583 = vunpack.c.l.b16 %v2766
        %v3584 = vunpack.c.l.b16 %v2767
        %v3585 = vunpack.c.l.b16 %v2768
        %v3586 = vunpack.c.l.b16 %v2769
        %v3587 = vunpack.c.l.b16 %v2770
        %v3588 = vunpack.c.l.b16 %v2771
        %v3589 = vunpack.c.l.b16 %v2772
        %v3590 = vunpack.c.l.b16 %v2773
        %v3591 = vunpack.c.l.b16 %v2774
        %v3592 = vunpack.c.l.b16 %v2775
        %v3593 = vunpack.c.l.b16 %v2776
        %v3594 = vunpack.c.l.b16 %v2777
        %v3595 = vunpack.c.l.b16 %v2778
        %v3596 = vunpack.c.l.b16 %v2779
        %v3597 = vunpack.c.l.b16 %v2780
        %v3598 = vunpack.c.l.b16 %v2781
        %v3599 = vunpack.c.l.b16 %v2782
        %v3600 = vunpack.c.l.b16 %v2783
        %v3601 = vunpack.c.l.b16 %v2784
        %v3602 = vunpack.c.l.b16 %v2785
        %v3603 = vunpack.c.l.b16 %v2786
        %v3604 = vunpack.c.l.b16 %v2787
        %v3605 = vunpack.c.l.b16 %v2788
        %v3606 = vunpack.c.l.b16 %v2789
        %v3607 = vunpack.c.l.b16 %v2790
        %v3608 = vunpack.c.l.b16 %v2791
        %v3609 = vunpack.c.l.b16 %v2792
        %v3610 = vunpack.c.l.b16 %v2793
        %v3611 = vunpack.c.l.b16 %v2794
        %v3612 = vunpack.c.l.b16 %v2795
        %v3613 = vunpack.c.l.b16 %v2796
        %v3614 = vunpack.c.l.b16 %v2797
        %v3615 = vunpack.c.l.b16 %v2798
        %v3616 = vunpack.c.l.b16 %v2799
        %v3617 = vunpack.c.l.b16 %v2800
        %v3618 = vunpack.c.l.b16 %v2801
        %v3619 = vunpack.c.l.b16 %v2802
        %v3620 = vunpack.c.l.b16 %v2803
        %v3621 = vunpack.c.l.b16 %v2804
        %v3622 = vunpack.c.l.b16 %v2805
        %v3623 = vunpack.c.l.b16 %v2806
        %v3624 = vunpack.c.l.b16 %v2807
        %v3625 = vunpack.c.l.b16 %v2808
        %v3626 = vpack.c.b16 %v3483, %v3482
        %v3627 = vpack.c.b16 %v3485, %v3484
        %v3628 = vpack.c.b16 %v3487, %v3486
        %v3629 = vpack.c.b16 %v3489, %v3488
        %v3630 = vpack.c.b16 %v3491, %v3490
        %v3631 = vpack.c.b16 %v3493, %v3492
        %v3632 = vpack.c.b16 %v3495, %v3494
        %v3633 = vpack.c.b16 %v3497, %v3496
        %v3634 = vpack.c.b16 %v3499, %v3498
        %v3635 = vpack.c.b16 %v3501, %v3500
        %v3636 = vpack.c.b16 %v3503, %v3502
        %v3637 = vpack.c.b16 %v3505, %v3504
        %v3638 = vpack.c.b16 %v3507, %v3506
        %v3639 = vpack.c.b16 %v3509, %v3508
        %v3640 = vpack.c.b16 %v3511, %v3510
        %v3641 = vpack.c.b16 %v3513, %v3512
        %v3642 = vpack.c.b16 %v3515, %v3514
        %v3643 = vpack.c.b16 %v3517, %v3516
        %v3644 = vpack.c.b16 %v3519, %v3518
        %v3645 = vpack.c.b16 %v3521, %v3520
        %v3646 = vpack.c.b16 %v3523, %v3522
        %v3647 = vpack.c.b16 %v3525, %v3524
        %v3648 = vpack.c.b16 %v3527, %v3526
        %v3649 = vpack.c.b16 %v3529, %v3528
        %v3650 = vpack.c.b16 %v3531, %v3530
        %v3651 = vpack.c.b16 %v3533, %v3532
        %v3652 = vpack.c.b16 %v3535, %v3534
        %v3653 = vpack.c.b16 %v3537, %v3536
        %v3654 = vpack.c.b16 %v3539, %v3538
        %v3655 = vpack.c.b16 %v3541, %v3540
        %v3656 = vpack.c.b16 %v3543, %v3542
        %v3657 = vpack.c.b16 %v3545, %v3544
        %v3658 = vpack.c.b16 %v3547, %v3546
        %v3659 = vpack.c.b16 %v3549, %v3548
        %v3660 = vpack.c.b16 %v3551, %v3550
        %v3661 = vpack.c.b16 %v3553, %v3552
        %v3662 = vpack.c.b16 %v3555, %v3554
        %v3663 = vpack.c.b16 %v3557, %v3556
        %v3664 = vpack.c.b16 %v3559, %v3558
        %v3665 = vpack.c.b16 %v3561, %v3560
        %v3666 = vpack.c.b16 %v3563, %v3562
        %v3667 = vpack.c.b16 %v3565, %v3564
        %v3668 = vpack.c.b16 %v3567, %v3566
        %v3669 = vpack.c.b16 %v3569, %v3568
        %v3670 = vpack.c.b16 %v3571, %v3570
        %v3671 = vpack.c.b16 %v3573, %v3572
        %v3672 = vpack.c.b16 %v3575, %v3574
        %v3673 = vpack.c.b16 %v3577, %v3576
        %v3674 = vpack.c.b16 %v3579, %v3578
        %v3675 = vpack.c.b16 %v3581, %v3580
        %v3676 = vpack.c.b16 %v3583, %v3582
        %v3677 = vpack.c.b16 %v3585, %v3584
        %v3678 = vpack.c.b16 %v3587, %v3586
        %v3679 = vpack.c.b16 %v3589, %v3588
        %v3680 = vpack.c.b16 %v3591, %v3590
        %v3681 = vpack.c.b16 %v3593, %v3592
        %v3682 = vpack.c.b16 %v3595, %v3594
        %v3683 = vpack.c.b16 %v3597, %v3596
        %v3684 = vpack.c.b16 %v3599, %v3598
        %v3685 = vpack.c.b16 %v3601, %v3600
        %v3686 = vpack.c.b16 %v3603, %v3602
        %v3687 = vpack.c.b16 %v3605, %v3604
        %v3688 = vpack.c.b16 %v3607, %v3606
        %v3689 = vpack.c.b16 %v3609, %v3608
        %v3690 = vpack.c.b16 %v3611, %v3610
        %v3691 = vpack.c.b16 %v3613, %v3612
        %v3692 = vpack.c.b16 %v3615, %v3614
        %v3693 = vpack.c.b16 %v3617, %v3616
        %v3694 = vpack.c.b16 %v3619, %v3618
        %v3695 = vpack.c.b16 %v3621, %v3620
        %v3696 = vpack.c.b16 %v3623, %v3622
        %v3697 = vpack.c.b16 %v3625, %v3624
        %3770 = vmatpush.bf16.msra.mxu0 %v3633
        %3771 = vmatpush.bf16.msra.mxu0 %v3632
        %3772 = vmatpush.bf16.msra.mxu0 %v3631
        %3773 = vmatpush.bf16.msra.mxu0 %v3630
        %3774 = vmatpush.bf16.msra.mxu0 %v3629
        %3775 = vmatpush.bf16.msra.mxu0 %v3628
        %3776 = vmatpush.bf16.msra.mxu0 %v3627
        %3777 = vmatpush.bf16.msra.mxu0 %v3626
        %3778 = vmatmul.bf16.gmra.mxu0 %v3290
        %v3779 = vpop.f32.mrf.mxu0
        %v3780 = vadd.f32 0.0, %v3779
        %v3781 = vpop.f32.mrf.mxu0
        %v3782 = vadd.f32 0.0, %v3781
        %3783 = vmatmul.bf16.gmra.mxu0 %v3293
        %v3784 = vpop.f32.mrf.mxu0
        %v3785 = vadd.f32 0.0, %v3784
        %v3786 = vpop.f32.mrf.mxu0
        %v3787 = vadd.f32 0.0, %v3786
        %3788 = vmatmul.bf16.gmra.mxu0 %v3290
        %v3789 = vpop.f32.mrf.mxu0
        %v3790 = vadd.f32 0.0, %v3789
        %v3791 = vpop.f32.mrf.mxu0
        %v3792 = vadd.f32 0.0, %v3791
        %3793 = vmatmul.bf16.gmra.mxu0 %v3296
        %v3794 = vpop.f32.mrf.mxu0
        %v3795 = vadd.f32 0.0, %v3794
        %v3796 = vpop.f32.mrf.mxu0
        %v3797 = vadd.f32 0.0, %v3796
        %3798 = vmatmul.bf16.gmra.mxu0 %v3299
        %v3799 = vpop.f32.mrf.mxu0
        %v3800 = vadd.f32 0.0, %v3799
        %v3801 = vpop.f32.mrf.mxu0
        %v3802 = vadd.f32 0.0, %v3801
        %3803 = vmatmul.bf16.gmra.mxu0 %v3302
        %v3804 = vpop.f32.mrf.mxu0
        %v3805 = vadd.f32 0.0, %v3804
        %v3806 = vpop.f32.mrf.mxu0
        %v3807 = vadd.f32 0.0, %v3806
        %3808 = vmatmul.bf16.gmra.mxu0 %v3305
        %v3809 = vpop.f32.mrf.mxu0
        %v3810 = vadd.f32 0.0, %v3809
        %v3811 = vpop.f32.mrf.mxu0
        %v3812 = vadd.f32 0.0, %v3811
        %3813 = vmatmul.bf16.gmra.mxu0 %v3308
        %v3814 = vpop.f32.mrf.mxu0
        %v3815 = vadd.f32 0.0, %v3814
        %v3816 = vpop.f32.mrf.mxu0
        %v3817 = vadd.f32 0.0, %v3816
        %3818 = vmatmul.bf16.gmra.mxu0 %v3311
        %v3819 = vpop.f32.mrf.mxu0
        %v3820 = vadd.f32 0.0, %v3819
        %v3821 = vpop.f32.mrf.mxu0
        %v3822 = vadd.f32 0.0, %v3821
        %3823 = vmatmul.bf16.gmra.mxu0 %v3314
        %v3824 = vpop.f32.mrf.mxu0
        %v3825 = vadd.f32 0.0, %v3824
        %v3826 = vpop.f32.mrf.mxu0
        %v3827 = vadd.f32 0.0, %v3826
        %3828 = vmatmul.bf16.gmra.mxu0 %v3317
        %v3829 = vpop.f32.mrf.mxu0
        %v3830 = vadd.f32 0.0, %v3829
        %v3831 = vpop.f32.mrf.mxu0
        %v3832 = vadd.f32 0.0, %v3831
        %3833 = vmatmul.bf16.gmra.mxu0 %v3320
        %v3834 = vpop.f32.mrf.mxu0
        %v3835 = vadd.f32 0.0, %v3834
        %v3836 = vpop.f32.mrf.mxu0
        %v3837 = vadd.f32 0.0, %v3836
        %3838 = vmatmul.bf16.gmra.mxu0 %v3323
        %v3839 = vpop.f32.mrf.mxu0
        %v3840 = vadd.f32 0.0, %v3839
        %v3841 = vpop.f32.mrf.mxu0
        %v3842 = vadd.f32 0.0, %v3841
        %3843 = vmatmul.bf16.gmra.mxu0 %v3326
        %v3844 = vpop.f32.mrf.mxu0
        %v3845 = vadd.f32 0.0, %v3844
        %v3846 = vpop.f32.mrf.mxu0
        %v3847 = vadd.f32 0.0, %v3846
        %3848 = vmatmul.bf16.gmra.mxu0 %v3329
        %v3849 = vpop.f32.mrf.mxu0
        %v3850 = vadd.f32 0.0, %v3849
        %v3851 = vpop.f32.mrf.mxu0
        %v3852 = vadd.f32 0.0, %v3851
        %3853 = vmatmul.bf16.gmra.mxu0 %v3332
        %v3854 = vpop.f32.mrf.mxu0
        %v3855 = vadd.f32 0.0, %v3854
        %v3856 = vpop.f32.mrf.mxu0
        %v3857 = vadd.f32 0.0, %v3856
        %3858 = vdwg.mxu0
        %3859 = vmatpush.bf16.msra.mxu0 %v3641
        %3860 = vmatpush.bf16.msra.mxu0 %v3640
        %3861 = vmatpush.bf16.msra.mxu0 %v3639
        %3862 = vmatpush.bf16.msra.mxu0 %v3638
        %3863 = vmatpush.bf16.msra.mxu0 %v3637
        %3864 = vmatpush.bf16.msra.mxu0 %v3636
        %3865 = vmatpush.bf16.msra.mxu0 %v3635
        %3866 = vmatpush.bf16.msra.mxu0 %v3634
        %3867 = vmatmul.bf16.gmra.mxu0 %v3291
        %v3868 = vpop.f32.mrf.mxu0
        %v3869 = vadd.f32 %v3780, %v3868
        %v3870 = vpop.f32.mrf.mxu0
        %v3871 = vadd.f32 %v3782, %v3870
        %3872 = vmatmul.bf16.gmra.mxu0 %v3294
        %v3873 = vpop.f32.mrf.mxu0
        %v3874 = vadd.f32 %v3785, %v3873
        %v3875 = vpop.f32.mrf.mxu0
        %v3876 = vadd.f32 %v3787, %v3875
        %3877 = vmatmul.bf16.gmra.mxu0 %v3291
        %v3878 = vpop.f32.mrf.mxu0
        %v3879 = vadd.f32 %v3790, %v3878
        %v3880 = vpop.f32.mrf.mxu0
        %v3881 = vadd.f32 %v3792, %v3880
        %3882 = vmatmul.bf16.gmra.mxu0 %v3297
        %v3883 = vpop.f32.mrf.mxu0
        %v3884 = vadd.f32 %v3795, %v3883
        %v3885 = vpop.f32.mrf.mxu0
        %v3886 = vadd.f32 %v3797, %v3885
        %3887 = vmatmul.bf16.gmra.mxu0 %v3300
        %v3888 = vpop.f32.mrf.mxu0
        %v3889 = vadd.f32 %v3800, %v3888
        %v3890 = vpop.f32.mrf.mxu0
        %v3891 = vadd.f32 %v3802, %v3890
        %3892 = vmatmul.bf16.gmra.mxu0 %v3303
        %v3893 = vpop.f32.mrf.mxu0
        %v3894 = vadd.f32 %v3805, %v3893
        %v3895 = vpop.f32.mrf.mxu0
        %v3896 = vadd.f32 %v3807, %v3895
        %3897 = vmatmul.bf16.gmra.mxu0 %v3306
        %v3898 = vpop.f32.mrf.mxu0
        %v3899 = vadd.f32 %v3810, %v3898
        %v3900 = vpop.f32.mrf.mxu0
        %v3901 = vadd.f32 %v3812, %v3900
        %3902 = vmatmul.bf16.gmra.mxu0 %v3309
        %v3903 = vpop.f32.mrf.mxu0
        %v3904 = vadd.f32 %v3815, %v3903
        %v3905 = vpop.f32.mrf.mxu0
        %v3906 = vadd.f32 %v3817, %v3905
        %3907 = vmatmul.bf16.gmra.mxu0 %v3312
        %v3908 = vpop.f32.mrf.mxu0
        %v3909 = vadd.f32 %v3820, %v3908
        %v3910 = vpop.f32.mrf.mxu0
        %v3911 = vadd.f32 %v3822, %v3910
        %3912 = vmatmul.bf16.gmra.mxu0 %v3315
        %v3913 = vpop.f32.mrf.mxu0
        %v3914 = vadd.f32 %v3825, %v3913
        %v3915 = vpop.f32.mrf.mxu0
        %v3916 = vadd.f32 %v3827, %v3915
        %3917 = vmatmul.bf16.gmra.mxu0 %v3318
        %v3918 = vpop.f32.mrf.mxu0
        %v3919 = vadd.f32 %v3830, %v3918
        %v3920 = vpop.f32.mrf.mxu0
        %v3921 = vadd.f32 %v3832, %v3920
        %3922 = vmatmul.bf16.gmra.mxu0 %v3321
        %v3923 = vpop.f32.mrf.mxu0
        %v3924 = vadd.f32 %v3835, %v3923
        %v3925 = vpop.f32.mrf.mxu0
        %v3926 = vadd.f32 %v3837, %v3925
        %3927 = vmatmul.bf16.gmra.mxu0 %v3324
        %v3928 = vpop.f32.mrf.mxu0
        %v3929 = vadd.f32 %v3840, %v3928
        %v3930 = vpop.f32.mrf.mxu0
        %v3931 = vadd.f32 %v3842, %v3930
        %3932 = vmatmul.bf16.gmra.mxu0 %v3327
        %v3933 = vpop.f32.mrf.mxu0
        %v3934 = vadd.f32 %v3845, %v3933
        %v3935 = vpop.f32.mrf.mxu0
        %v3936 = vadd.f32 %v3847, %v3935
        %3937 = vmatmul.bf16.gmra.mxu0 %v3330
        %v3938 = vpop.f32.mrf.mxu0
        %v3939 = vadd.f32 %v3850, %v3938
        %v3940 = vpop.f32.mrf.mxu0
        %v3941 = vadd.f32 %v3852, %v3940
        %3942 = vmatmul.bf16.gmra.mxu0 %v3333
        %v3943 = vpop.f32.mrf.mxu0
        %v3944 = vadd.f32 %v3855, %v3943
        %v3945 = vpop.f32.mrf.mxu0
        %v3946 = vadd.f32 %v3857, %v3945
        %3947 = vdwg.mxu0
        %3948 = vmatpush.bf16.msra.mxu0 %v3649
        %3949 = vmatpush.bf16.msra.mxu0 %v3648
        %3950 = vmatpush.bf16.msra.mxu0 %v3647
        %3951 = vmatpush.bf16.msra.mxu0 %v3646
        %3952 = vmatpush.bf16.msra.mxu0 %v3645
        %3953 = vmatpush.bf16.msra.mxu0 %v3644
        %3954 = vmatpush.bf16.msra.mxu0 %v3643
        %3955 = vmatpush.bf16.msra.mxu0 %v3642
        %3956 = vmatmul.bf16.gmra.mxu0 %v3292
        %v3957 = vpop.f32.mrf.mxu0
        %v3958 = vadd.f32 %v3869, %v3957
        %v3959 = vpop.f32.mrf.mxu0
        %v3960 = vadd.f32 %v3871, %v3959
        %3961 = vmatmul.bf16.gmra.mxu0 %v3295
        %v3962 = vpop.f32.mrf.mxu0
        %v3963 = vadd.f32 %v3874, %v3962
        %v3964 = vpop.f32.mrf.mxu0
        %v3965 = vadd.f32 %v3876, %v3964
        %3966 = vmatmul.bf16.gmra.mxu0 %v3292
        %v3967 = vpop.f32.mrf.mxu0
        %v3968 = vadd.f32 %v3879, %v3967
        %v3969 = vpop.f32.mrf.mxu0
        %v3970 = vadd.f32 %v3881, %v3969
        %3971 = vmatmul.bf16.gmra.mxu0 %v3298
        %v3972 = vpop.f32.mrf.mxu0
        %v3973 = vadd.f32 %v3884, %v3972
        %v3974 = vpop.f32.mrf.mxu0
        %v3975 = vadd.f32 %v3886, %v3974
        %3976 = vmatmul.bf16.gmra.mxu0 %v3301
        %v3977 = vpop.f32.mrf.mxu0
        %v3978 = vadd.f32 %v3889, %v3977
        %v3979 = vpop.f32.mrf.mxu0
        %v3980 = vadd.f32 %v3891, %v3979
        %3981 = vmatmul.bf16.gmra.mxu0 %v3304
        %v3982 = vpop.f32.mrf.mxu0
        %v3983 = vadd.f32 %v3894, %v3982
        %v3984 = vpop.f32.mrf.mxu0
        %v3985 = vadd.f32 %v3896, %v3984
        %3986 = vmatmul.bf16.gmra.mxu0 %v3307
        %v3987 = vpop.f32.mrf.mxu0
        %v3988 = vadd.f32 %v3899, %v3987
        %v3989 = vpop.f32.mrf.mxu0
        %v3990 = vadd.f32 %v3901, %v3989
        %3991 = vmatmul.bf16.gmra.mxu0 %v3310
        %v3992 = vpop.f32.mrf.mxu0
        %v3993 = vadd.f32 %v3904, %v3992
        %v3994 = vpop.f32.mrf.mxu0
        %v3995 = vadd.f32 %v3906, %v3994
        %3996 = vmatmul.bf16.gmra.mxu0 %v3313
        %v3997 = vpop.f32.mrf.mxu0
        %v3998 = vadd.f32 %v3909, %v3997
        %v3999 = vpop.f32.mrf.mxu0
        %v4000 = vadd.f32 %v3911, %v3999
        %4001 = vmatmul.bf16.gmra.mxu0 %v3316
        %v4002 = vpop.f32.mrf.mxu0
        %v4003 = vadd.f32 %v3914, %v4002
        %v4004 = vpop.f32.mrf.mxu0
        %v4005 = vadd.f32 %v3916, %v4004
        %4006 = vmatmul.bf16.gmra.mxu0 %v3319
        %v4007 = vpop.f32.mrf.mxu0
        %v4008 = vadd.f32 %v3919, %v4007
        %v4009 = vpop.f32.mrf.mxu0
        %v4010 = vadd.f32 %v3921, %v4009
        %4011 = vmatmul.bf16.gmra.mxu0 %v3322
        %v4012 = vpop.f32.mrf.mxu0
        %v4013 = vadd.f32 %v3924, %v4012
        %v4014 = vpop.f32.mrf.mxu0
        %v4015 = vadd.f32 %v3926, %v4014
        %4016 = vmatmul.bf16.gmra.mxu0 %v3325
        %v4017 = vpop.f32.mrf.mxu0
        %v4018 = vadd.f32 %v3929, %v4017
        %v4019 = vpop.f32.mrf.mxu0
        %v4020 = vadd.f32 %v3931, %v4019
        %4021 = vmatmul.bf16.gmra.mxu0 %v3328
        %v4022 = vpop.f32.mrf.mxu0
        %v4023 = vadd.f32 %v3934, %v4022
        %v4024 = vpop.f32.mrf.mxu0
        %v4025 = vadd.f32 %v3936, %v4024
        %4026 = vmatmul.bf16.gmra.mxu0 %v3331
        %v4027 = vpop.f32.mrf.mxu0
        %v4028 = vadd.f32 %v3939, %v4027
        %v4029 = vpop.f32.mrf.mxu0
        %v4030 = vadd.f32 %v3941, %v4029
        %4031 = vmatmul.bf16.gmra.mxu0 %v3334
        %v4032 = vpop.f32.mrf.mxu0
        %v4033 = vadd.f32 %v3944, %v4032
        %v4034 = vpop.f32.mrf.mxu0
        %v4035 = vadd.f32 %v3946, %v4034
        %4036 = vdwg.mxu0
        %4037 = vmatpush.bf16.msra.mxu0 %v3657
        %4038 = vmatpush.bf16.msra.mxu0 %v3656
        %4039 = vmatpush.bf16.msra.mxu0 %v3655
        %4040 = vmatpush.bf16.msra.mxu0 %v3654
        %4041 = vmatpush.bf16.msra.mxu0 %v3653
        %4042 = vmatpush.bf16.msra.mxu0 %v3652
        %4043 = vmatpush.bf16.msra.mxu0 %v3651
        %4044 = vmatpush.bf16.msra.mxu0 %v3650
        %4045 = vmatmul.bf16.gmra.mxu0 %v3293
        %v4046 = vpop.f32.mrf.mxu0
        %v4047 = vadd.f32 %v3958, %v4046
        %v4048 = vpop.f32.mrf.mxu0
        %v4049 = vadd.f32 %v3960, %v4048
        %4050 = vmatmul.bf16.gmra.mxu0 %v3290
        %v4051 = vpop.f32.mrf.mxu0
        %v4052 = vadd.f32 %v3963, %v4051
        %v4053 = vpop.f32.mrf.mxu0
        %v4054 = vadd.f32 %v3965, %v4053
        %4055 = vmatmul.bf16.gmra.mxu0 %v3296
        %v4056 = vpop.f32.mrf.mxu0
        %v4057 = vadd.f32 %v3968, %v4056
        %v4058 = vpop.f32.mrf.mxu0
        %v4059 = vadd.f32 %v3970, %v4058
        %4060 = vmatmul.bf16.gmra.mxu0 %v3299
        %v4061 = vpop.f32.mrf.mxu0
        %v4062 = vadd.f32 %v3973, %v4061
        %v4063 = vpop.f32.mrf.mxu0
        %v4064 = vadd.f32 %v3975, %v4063
        %4065 = vmatmul.bf16.gmra.mxu0 %v3302
        %v4066 = vpop.f32.mrf.mxu0
        %v4067 = vadd.f32 %v3978, %v4066
        %v4068 = vpop.f32.mrf.mxu0
        %v4069 = vadd.f32 %v3980, %v4068
        %4070 = vmatmul.bf16.gmra.mxu0 %v3305
        %v4071 = vpop.f32.mrf.mxu0
        %v4072 = vadd.f32 %v3983, %v4071
        %v4073 = vpop.f32.mrf.mxu0
        %v4074 = vadd.f32 %v3985, %v4073
        %4075 = vmatmul.bf16.gmra.mxu0 %v3308
        %v4076 = vpop.f32.mrf.mxu0
        %v4077 = vadd.f32 %v3988, %v4076
        %v4078 = vpop.f32.mrf.mxu0
        %v4079 = vadd.f32 %v3990, %v4078
        %4080 = vmatmul.bf16.gmra.mxu0 %v3311
        %v4081 = vpop.f32.mrf.mxu0
        %v4082 = vadd.f32 %v3993, %v4081
        %v4083 = vpop.f32.mrf.mxu0
        %v4084 = vadd.f32 %v3995, %v4083
        %4085 = vmatmul.bf16.gmra.mxu0 %v3314
        %v4086 = vpop.f32.mrf.mxu0
        %v4087 = vadd.f32 %v3998, %v4086
        %v4088 = vpop.f32.mrf.mxu0
        %v4089 = vadd.f32 %v4000, %v4088
        %4090 = vmatmul.bf16.gmra.mxu0 %v3317
        %v4091 = vpop.f32.mrf.mxu0
        %v4092 = vadd.f32 %v4003, %v4091
        %v4093 = vpop.f32.mrf.mxu0
        %v4094 = vadd.f32 %v4005, %v4093
        %4095 = vmatmul.bf16.gmra.mxu0 %v3320
        %v4096 = vpop.f32.mrf.mxu0
        %v4097 = vadd.f32 %v4008, %v4096
        %v4098 = vpop.f32.mrf.mxu0
        %v4099 = vadd.f32 %v4010, %v4098
        %4100 = vmatmul.bf16.gmra.mxu0 %v3323
        %v4101 = vpop.f32.mrf.mxu0
        %v4102 = vadd.f32 %v4013, %v4101
        %v4103 = vpop.f32.mrf.mxu0
        %v4104 = vadd.f32 %v4015, %v4103
        %4105 = vmatmul.bf16.gmra.mxu0 %v3326
        %v4106 = vpop.f32.mrf.mxu0
        %v4107 = vadd.f32 %v4018, %v4106
        %v4108 = vpop.f32.mrf.mxu0
        %v4109 = vadd.f32 %v4020, %v4108
        %4110 = vmatmul.bf16.gmra.mxu0 %v3329
        %v4111 = vpop.f32.mrf.mxu0
        %v4112 = vadd.f32 %v4023, %v4111
        %v4113 = vpop.f32.mrf.mxu0
        %v4114 = vadd.f32 %v4025, %v4113
        %4115 = vmatmul.bf16.gmra.mxu0 %v3332
        %v4116 = vpop.f32.mrf.mxu0
        %v4117 = vadd.f32 %v4028, %v4116
        %v4118 = vpop.f32.mrf.mxu0
        %v4119 = vadd.f32 %v4030, %v4118
        %4120 = vmatmul.bf16.gmra.mxu0 %v3335
        %v4121 = vpop.f32.mrf.mxu0
        %v4122 = vadd.f32 %v4033, %v4121
        %v4123 = vpop.f32.mrf.mxu0
        %v4124 = vadd.f32 %v4035, %v4123
        %4125 = vdwg.mxu0
        %4126 = vmatpush.bf16.msra.mxu0 %v3665
        %4127 = vmatpush.bf16.msra.mxu0 %v3664
        %4128 = vmatpush.bf16.msra.mxu0 %v3663
        %4129 = vmatpush.bf16.msra.mxu0 %v3662
        %4130 = vmatpush.bf16.msra.mxu0 %v3661
        %4131 = vmatpush.bf16.msra.mxu0 %v3660
        %4132 = vmatpush.bf16.msra.mxu0 %v3659
        %4133 = vmatpush.bf16.msra.mxu0 %v3658
        %4134 = vmatmul.bf16.gmra.mxu0 %v3294
        %v4135 = vpop.f32.mrf.mxu0
        %v4136 = vadd.f32 %v4047, %v4135
        %v4137 = vpop.f32.mrf.mxu0
        %v4138 = vadd.f32 %v4049, %v4137
        %4139 = vmatmul.bf16.gmra.mxu0 %v3291
        %v4140 = vpop.f32.mrf.mxu0
        %v4141 = vadd.f32 %v4052, %v4140
        %v4142 = vpop.f32.mrf.mxu0
        %v4143 = vadd.f32 %v4054, %v4142
        %4144 = vmatmul.bf16.gmra.mxu0 %v3297
        %v4145 = vpop.f32.mrf.mxu0
        %v4146 = vadd.f32 %v4057, %v4145
        %v4147 = vpop.f32.mrf.mxu0
        %v4148 = vadd.f32 %v4059, %v4147
        %4149 = vmatmul.bf16.gmra.mxu0 %v3300
        %v4150 = vpop.f32.mrf.mxu0
        %v4151 = vadd.f32 %v4062, %v4150
        %v4152 = vpop.f32.mrf.mxu0
        %v4153 = vadd.f32 %v4064, %v4152
        %4154 = vmatmul.bf16.gmra.mxu0 %v3303
        %v4155 = vpop.f32.mrf.mxu0
        %v4156 = vadd.f32 %v4067, %v4155
        %v4157 = vpop.f32.mrf.mxu0
        %v4158 = vadd.f32 %v4069, %v4157
        %4159 = vmatmul.bf16.gmra.mxu0 %v3306
        %v4160 = vpop.f32.mrf.mxu0
        %v4161 = vadd.f32 %v4072, %v4160
        %v4162 = vpop.f32.mrf.mxu0
        %v4163 = vadd.f32 %v4074, %v4162
        %4164 = vmatmul.bf16.gmra.mxu0 %v3309
        %v4165 = vpop.f32.mrf.mxu0
        %v4166 = vadd.f32 %v4077, %v4165
        %v4167 = vpop.f32.mrf.mxu0
        %v4168 = vadd.f32 %v4079, %v4167
        %4169 = vmatmul.bf16.gmra.mxu0 %v3312
        %v4170 = vpop.f32.mrf.mxu0
        %v4171 = vadd.f32 %v4082, %v4170
        %v4172 = vpop.f32.mrf.mxu0
        %v4173 = vadd.f32 %v4084, %v4172
        %4174 = vmatmul.bf16.gmra.mxu0 %v3315
        %v4175 = vpop.f32.mrf.mxu0
        %v4176 = vadd.f32 %v4087, %v4175
        %v4177 = vpop.f32.mrf.mxu0
        %v4178 = vadd.f32 %v4089, %v4177
        %4179 = vmatmul.bf16.gmra.mxu0 %v3318
        %v4180 = vpop.f32.mrf.mxu0
        %v4181 = vadd.f32 %v4092, %v4180
        %v4182 = vpop.f32.mrf.mxu0
        %v4183 = vadd.f32 %v4094, %v4182
        %4184 = vmatmul.bf16.gmra.mxu0 %v3321
        %v4185 = vpop.f32.mrf.mxu0
        %v4186 = vadd.f32 %v4097, %v4185
        %v4187 = vpop.f32.mrf.mxu0
        %v4188 = vadd.f32 %v4099, %v4187
        %4189 = vmatmul.bf16.gmra.mxu0 %v3324
        %v4190 = vpop.f32.mrf.mxu0
        %v4191 = vadd.f32 %v4102, %v4190
        %v4192 = vpop.f32.mrf.mxu0
        %v4193 = vadd.f32 %v4104, %v4192
        %4194 = vmatmul.bf16.gmra.mxu0 %v3327
        %v4195 = vpop.f32.mrf.mxu0
        %v4196 = vadd.f32 %v4107, %v4195
        %v4197 = vpop.f32.mrf.mxu0
        %v4198 = vadd.f32 %v4109, %v4197
        %4199 = vmatmul.bf16.gmra.mxu0 %v3330
        %v4200 = vpop.f32.mrf.mxu0
        %v4201 = vadd.f32 %v4112, %v4200
        %v4202 = vpop.f32.mrf.mxu0
        %v4203 = vadd.f32 %v4114, %v4202
        %4204 = vmatmul.bf16.gmra.mxu0 %v3333
        %v4205 = vpop.f32.mrf.mxu0
        %v4206 = vadd.f32 %v4117, %v4205
        %v4207 = vpop.f32.mrf.mxu0
        %v4208 = vadd.f32 %v4119, %v4207
        %4209 = vmatmul.bf16.gmra.mxu0 %v3336
        %v4210 = vpop.f32.mrf.mxu0
        %v4211 = vadd.f32 %v4122, %v4210
        %v4212 = vpop.f32.mrf.mxu0
        %v4213 = vadd.f32 %v4124, %v4212
        %4214 = vdwg.mxu0
        %4215 = vmatpush.bf16.msra.mxu0 %v3673
        %4216 = vmatpush.bf16.msra.mxu0 %v3672
        %4217 = vmatpush.bf16.msra.mxu0 %v3671
        %4218 = vmatpush.bf16.msra.mxu0 %v3670
        %4219 = vmatpush.bf16.msra.mxu0 %v3669
        %4220 = vmatpush.bf16.msra.mxu0 %v3668
        %4221 = vmatpush.bf16.msra.mxu0 %v3667
        %4222 = vmatpush.bf16.msra.mxu0 %v3666
        %4223 = vmatmul.bf16.gmra.mxu0 %v3295
        %v4224 = vpop.f32.mrf.mxu0
        %v4225 = vadd.f32 %v4136, %v4224
        %v4226 = vpop.f32.mrf.mxu0
        %v4227 = vadd.f32 %v4138, %v4226
        %4228 = vmatmul.bf16.gmra.mxu0 %v3292
        %v4229 = vpop.f32.mrf.mxu0
        %v4230 = vadd.f32 %v4141, %v4229
        %v4231 = vpop.f32.mrf.mxu0
        %v4232 = vadd.f32 %v4143, %v4231
        %4233 = vmatmul.bf16.gmra.mxu0 %v3298
        %v4234 = vpop.f32.mrf.mxu0
        %v4235 = vadd.f32 %v4146, %v4234
        %v4236 = vpop.f32.mrf.mxu0
        %v4237 = vadd.f32 %v4148, %v4236
        %4238 = vmatmul.bf16.gmra.mxu0 %v3301
        %v4239 = vpop.f32.mrf.mxu0
        %v4240 = vadd.f32 %v4151, %v4239
        %v4241 = vpop.f32.mrf.mxu0
        %v4242 = vadd.f32 %v4153, %v4241
        %4243 = vmatmul.bf16.gmra.mxu0 %v3304
        %v4244 = vpop.f32.mrf.mxu0
        %v4245 = vadd.f32 %v4156, %v4244
        %v4246 = vpop.f32.mrf.mxu0
        %v4247 = vadd.f32 %v4158, %v4246
        %4248 = vmatmul.bf16.gmra.mxu0 %v3307
        %v4249 = vpop.f32.mrf.mxu0
        %v4250 = vadd.f32 %v4161, %v4249
        %v4251 = vpop.f32.mrf.mxu0
        %v4252 = vadd.f32 %v4163, %v4251
        %4253 = vmatmul.bf16.gmra.mxu0 %v3310
        %v4254 = vpop.f32.mrf.mxu0
        %v4255 = vadd.f32 %v4166, %v4254
        %v4256 = vpop.f32.mrf.mxu0
        %v4257 = vadd.f32 %v4168, %v4256
        %4258 = vmatmul.bf16.gmra.mxu0 %v3313
        %v4259 = vpop.f32.mrf.mxu0
        %v4260 = vadd.f32 %v4171, %v4259
        %v4261 = vpop.f32.mrf.mxu0
        %v4262 = vadd.f32 %v4173, %v4261
        %4263 = vmatmul.bf16.gmra.mxu0 %v3316
        %v4264 = vpop.f32.mrf.mxu0
        %v4265 = vadd.f32 %v4176, %v4264
        %v4266 = vpop.f32.mrf.mxu0
        %v4267 = vadd.f32 %v4178, %v4266
        %4268 = vmatmul.bf16.gmra.mxu0 %v3319
        %v4269 = vpop.f32.mrf.mxu0
        %v4270 = vadd.f32 %v4181, %v4269
        %v4271 = vpop.f32.mrf.mxu0
        %v4272 = vadd.f32 %v4183, %v4271
        %4273 = vmatmul.bf16.gmra.mxu0 %v3322
        %v4274 = vpop.f32.mrf.mxu0
        %v4275 = vadd.f32 %v4186, %v4274
        %v4276 = vpop.f32.mrf.mxu0
        %v4277 = vadd.f32 %v4188, %v4276
        %4278 = vmatmul.bf16.gmra.mxu0 %v3325
        %v4279 = vpop.f32.mrf.mxu0
        %v4280 = vadd.f32 %v4191, %v4279
        %v4281 = vpop.f32.mrf.mxu0
        %v4282 = vadd.f32 %v4193, %v4281
        %4283 = vmatmul.bf16.gmra.mxu0 %v3328
        %v4284 = vpop.f32.mrf.mxu0
        %v4285 = vadd.f32 %v4196, %v4284
        %v4286 = vpop.f32.mrf.mxu0
        %v4287 = vadd.f32 %v4198, %v4286
        %4288 = vmatmul.bf16.gmra.mxu0 %v3331
        %v4289 = vpop.f32.mrf.mxu0
        %v4290 = vadd.f32 %v4201, %v4289
        %v4291 = vpop.f32.mrf.mxu0
        %v4292 = vadd.f32 %v4203, %v4291
        %4293 = vmatmul.bf16.gmra.mxu0 %v3334
        %v4294 = vpop.f32.mrf.mxu0
        %v4295 = vadd.f32 %v4206, %v4294
        %v4296 = vpop.f32.mrf.mxu0
        %v4297 = vadd.f32 %v4208, %v4296
        %4298 = vmatmul.bf16.gmra.mxu0 %v3337
        %v4299 = vpop.f32.mrf.mxu0
        %v4300 = vadd.f32 %v4211, %v4299
        %v4301 = vpop.f32.mrf.mxu0
        %v4302 = vadd.f32 %v4213, %v4301
        %4303 = vdwg.mxu0
        %4304 = vmatpush.bf16.msra.mxu0 %v3681
        %4305 = vmatpush.bf16.msra.mxu0 %v3680
        %4306 = vmatpush.bf16.msra.mxu0 %v3679
        %4307 = vmatpush.bf16.msra.mxu0 %v3678
        %4308 = vmatpush.bf16.msra.mxu0 %v3677
        %4309 = vmatpush.bf16.msra.mxu0 %v3676
        %4310 = vmatpush.bf16.msra.mxu0 %v3675
        %4311 = vmatpush.bf16.msra.mxu0 %v3674
        %4312 = vmatmul.bf16.gmra.mxu0 %v3290
        %v4313 = vpop.f32.mrf.mxu0
        %v4314 = vadd.f32 %v4225, %v4313
        %v4315 = vpop.f32.mrf.mxu0
        %v4316 = vadd.f32 %v4227, %v4315
        %4317 = vmatmul.bf16.gmra.mxu0 %v3296
        %v4318 = vpop.f32.mrf.mxu0
        %v4319 = vadd.f32 %v4230, %v4318
        %v4320 = vpop.f32.mrf.mxu0
        %v4321 = vadd.f32 %v4232, %v4320
        %4322 = vmatmul.bf16.gmra.mxu0 %v3299
        %v4323 = vpop.f32.mrf.mxu0
        %v4324 = vadd.f32 %v4235, %v4323
        %v4325 = vpop.f32.mrf.mxu0
        %v4326 = vadd.f32 %v4237, %v4325
        %4327 = vmatmul.bf16.gmra.mxu0 %v3302
        %v4328 = vpop.f32.mrf.mxu0
        %v4329 = vadd.f32 %v4240, %v4328
        %v4330 = vpop.f32.mrf.mxu0
        %v4331 = vadd.f32 %v4242, %v4330
        %4332 = vmatmul.bf16.gmra.mxu0 %v3305
        %v4333 = vpop.f32.mrf.mxu0
        %v4334 = vadd.f32 %v4245, %v4333
        %v4335 = vpop.f32.mrf.mxu0
        %v4336 = vadd.f32 %v4247, %v4335
        %4337 = vmatmul.bf16.gmra.mxu0 %v3308
        %v4338 = vpop.f32.mrf.mxu0
        %v4339 = vadd.f32 %v4250, %v4338
        %v4340 = vpop.f32.mrf.mxu0
        %v4341 = vadd.f32 %v4252, %v4340
        %4342 = vmatmul.bf16.gmra.mxu0 %v3311
        %v4343 = vpop.f32.mrf.mxu0
        %v4344 = vadd.f32 %v4255, %v4343
        %v4345 = vpop.f32.mrf.mxu0
        %v4346 = vadd.f32 %v4257, %v4345
        %4347 = vmatmul.bf16.gmra.mxu0 %v3314
        %v4348 = vpop.f32.mrf.mxu0
        %v4349 = vadd.f32 %v4260, %v4348
        %v4350 = vpop.f32.mrf.mxu0
        %v4351 = vadd.f32 %v4262, %v4350
        %4352 = vmatmul.bf16.gmra.mxu0 %v3317
        %v4353 = vpop.f32.mrf.mxu0
        %v4354 = vadd.f32 %v4265, %v4353
        %v4355 = vpop.f32.mrf.mxu0
        %v4356 = vadd.f32 %v4267, %v4355
        %4357 = vmatmul.bf16.gmra.mxu0 %v3320
        %v4358 = vpop.f32.mrf.mxu0
        %v4359 = vadd.f32 %v4270, %v4358
        %v4360 = vpop.f32.mrf.mxu0
        %v4361 = vadd.f32 %v4272, %v4360
        %4362 = vmatmul.bf16.gmra.mxu0 %v3323
        %v4363 = vpop.f32.mrf.mxu0
        %v4364 = vadd.f32 %v4275, %v4363
        %v4365 = vpop.f32.mrf.mxu0
        %v4366 = vadd.f32 %v4277, %v4365
        %4367 = vmatmul.bf16.gmra.mxu0 %v3326
        %v4368 = vpop.f32.mrf.mxu0
        %v4369 = vadd.f32 %v4280, %v4368
        %v4370 = vpop.f32.mrf.mxu0
        %v4371 = vadd.f32 %v4282, %v4370
        %4372 = vmatmul.bf16.gmra.mxu0 %v3329
        %v4373 = vpop.f32.mrf.mxu0
        %v4374 = vadd.f32 %v4285, %v4373
        %v4375 = vpop.f32.mrf.mxu0
        %v4376 = vadd.f32 %v4287, %v4375
        %4377 = vmatmul.bf16.gmra.mxu0 %v3332
        %v4378 = vpop.f32.mrf.mxu0
        %v4379 = vadd.f32 %v4290, %v4378
        %v4380 = vpop.f32.mrf.mxu0
        %v4381 = vadd.f32 %v4292, %v4380
        %4382 = vmatmul.bf16.gmra.mxu0 %v3335
        %v4383 = vpop.f32.mrf.mxu0
        %v4384 = vadd.f32 %v4295, %v4383
        %v4385 = vpop.f32.mrf.mxu0
        %v4386 = vadd.f32 %v4297, %v4385
        %4387 = vmatmul.bf16.gmra.mxu0 %v3332
        %v4388 = vpop.f32.mrf.mxu0
        %v4389 = vadd.f32 %v4300, %v4388
        %v4390 = vpop.f32.mrf.mxu0
        %v4391 = vadd.f32 %v4302, %v4390
        %4392 = vdwg.mxu0
        %4393 = vmatpush.bf16.msra.mxu0 %v3689
        %4394 = vmatpush.bf16.msra.mxu0 %v3688
        %4395 = vmatpush.bf16.msra.mxu0 %v3687
        %4396 = vmatpush.bf16.msra.mxu0 %v3686
        %4397 = vmatpush.bf16.msra.mxu0 %v3685
        %4398 = vmatpush.bf16.msra.mxu0 %v3684
        %4399 = vmatpush.bf16.msra.mxu0 %v3683
        %4400 = vmatpush.bf16.msra.mxu0 %v3682
        %4401 = vmatmul.bf16.gmra.mxu0 %v3291
        %v4402 = vpop.f32.mrf.mxu0
        %v4403 = vadd.f32 %v4314, %v4402
        %v4404 = vpop.f32.mrf.mxu0
        %v4405 = vadd.f32 %v4316, %v4404
        %4406 = vmatmul.bf16.gmra.mxu0 %v3297
        %v4407 = vpop.f32.mrf.mxu0
        %v4408 = vadd.f32 %v4319, %v4407
        %v4409 = vpop.f32.mrf.mxu0
        %v4410 = vadd.f32 %v4321, %v4409
        %4411 = vmatmul.bf16.gmra.mxu0 %v3300
        %v4412 = vpop.f32.mrf.mxu0
        %v4413 = vadd.f32 %v4324, %v4412
        %v4414 = vpop.f32.mrf.mxu0
        %v4415 = vadd.f32 %v4326, %v4414
        %4416 = vmatmul.bf16.gmra.mxu0 %v3303
        %v4417 = vpop.f32.mrf.mxu0
        %v4418 = vadd.f32 %v4329, %v4417
        %v4419 = vpop.f32.mrf.mxu0
        %v4420 = vadd.f32 %v4331, %v4419
        %4421 = vmatmul.bf16.gmra.mxu0 %v3306
        %v4422 = vpop.f32.mrf.mxu0
        %v4423 = vadd.f32 %v4334, %v4422
        %v4424 = vpop.f32.mrf.mxu0
        %v4425 = vadd.f32 %v4336, %v4424
        %4426 = vmatmul.bf16.gmra.mxu0 %v3309
        %v4427 = vpop.f32.mrf.mxu0
        %v4428 = vadd.f32 %v4339, %v4427
        %v4429 = vpop.f32.mrf.mxu0
        %v4430 = vadd.f32 %v4341, %v4429
        %4431 = vmatmul.bf16.gmra.mxu0 %v3312
        %v4432 = vpop.f32.mrf.mxu0
        %v4433 = vadd.f32 %v4344, %v4432
        %v4434 = vpop.f32.mrf.mxu0
        %v4435 = vadd.f32 %v4346, %v4434
        %4436 = vmatmul.bf16.gmra.mxu0 %v3315
        %v4437 = vpop.f32.mrf.mxu0
        %v4438 = vadd.f32 %v4349, %v4437
        %v4439 = vpop.f32.mrf.mxu0
        %v4440 = vadd.f32 %v4351, %v4439
        %4441 = vmatmul.bf16.gmra.mxu0 %v3318
        %v4442 = vpop.f32.mrf.mxu0
        %v4443 = vadd.f32 %v4354, %v4442
        %v4444 = vpop.f32.mrf.mxu0
        %v4445 = vadd.f32 %v4356, %v4444
        %4446 = vmatmul.bf16.gmra.mxu0 %v3321
        %v4447 = vpop.f32.mrf.mxu0
        %v4448 = vadd.f32 %v4359, %v4447
        %v4449 = vpop.f32.mrf.mxu0
        %v4450 = vadd.f32 %v4361, %v4449
        %4451 = vmatmul.bf16.gmra.mxu0 %v3324
        %v4452 = vpop.f32.mrf.mxu0
        %v4453 = vadd.f32 %v4364, %v4452
        %v4454 = vpop.f32.mrf.mxu0
        %v4455 = vadd.f32 %v4366, %v4454
        %4456 = vmatmul.bf16.gmra.mxu0 %v3327
        %v4457 = vpop.f32.mrf.mxu0
        %v4458 = vadd.f32 %v4369, %v4457
        %v4459 = vpop.f32.mrf.mxu0
        %v4460 = vadd.f32 %v4371, %v4459
        %4461 = vmatmul.bf16.gmra.mxu0 %v3330
        %v4462 = vpop.f32.mrf.mxu0
        %v4463 = vadd.f32 %v4374, %v4462
        %v4464 = vpop.f32.mrf.mxu0
        %v4465 = vadd.f32 %v4376, %v4464
        %4466 = vmatmul.bf16.gmra.mxu0 %v3333
        %v4467 = vpop.f32.mrf.mxu0
        %v4468 = vadd.f32 %v4379, %v4467
        %v4469 = vpop.f32.mrf.mxu0
        %v4470 = vadd.f32 %v4381, %v4469
        %4471 = vmatmul.bf16.gmra.mxu0 %v3336
        %v4472 = vpop.f32.mrf.mxu0
        %v4473 = vadd.f32 %v4384, %v4472
        %v4474 = vpop.f32.mrf.mxu0
        %v4475 = vadd.f32 %v4386, %v4474
        %4476 = vmatmul.bf16.gmra.mxu0 %v3333
        %v4477 = vpop.f32.mrf.mxu0
        %v4478 = vadd.f32 %v4389, %v4477
        %v4479 = vpop.f32.mrf.mxu0
        %v4480 = vadd.f32 %v4391, %v4479
        %4481 = vdwg.mxu0
        %4482 = vmatpush.bf16.msra.mxu0 %v3697
        %4483 = vmatpush.bf16.msra.mxu0 %v3696
        %4484 = vmatpush.bf16.msra.mxu0 %v3695
        %4485 = vmatpush.bf16.msra.mxu0 %v3694
        %4486 = vmatpush.bf16.msra.mxu0 %v3693
        %4487 = vmatpush.bf16.msra.mxu0 %v3692
        %4488 = vmatpush.bf16.msra.mxu0 %v3691
        %4489 = vmatpush.bf16.msra.mxu0 %v3690
        %4490 = vmatmul.bf16.gmra.mxu0 %v3292
        %v4491 = vpop.f32.mrf.mxu0
        %v4492 = vadd.f32 %v4403, %v4491
        %v4493 = vpop.f32.mrf.mxu0
        %v4494 = vadd.f32 %v4405, %v4493
        %4495 = vmatmul.bf16.gmra.mxu0 %v3298
        %v4496 = vpop.f32.mrf.mxu0
        %v4497 = vadd.f32 %v4408, %v4496
        %v4498 = vpop.f32.mrf.mxu0
        %v4499 = vadd.f32 %v4410, %v4498
        %4500 = vmatmul.bf16.gmra.mxu0 %v3301
        %v4501 = vpop.f32.mrf.mxu0
        %v4502 = vadd.f32 %v4413, %v4501
        %v4503 = vpop.f32.mrf.mxu0
        %v4504 = vadd.f32 %v4415, %v4503
        %4505 = vmatmul.bf16.gmra.mxu0 %v3304
        %v4506 = vpop.f32.mrf.mxu0
        %v4507 = vadd.f32 %v4418, %v4506
        %v4508 = vpop.f32.mrf.mxu0
        %v4509 = vadd.f32 %v4420, %v4508
        %4510 = vmatmul.bf16.gmra.mxu0 %v3307
        %v4511 = vpop.f32.mrf.mxu0
        %v4512 = vadd.f32 %v4423, %v4511
        %v4513 = vpop.f32.mrf.mxu0
        %v4514 = vadd.f32 %v4425, %v4513
        %4515 = vmatmul.bf16.gmra.mxu0 %v3310
        %v4516 = vpop.f32.mrf.mxu0
        %v4517 = vadd.f32 %v4428, %v4516
        %v4518 = vpop.f32.mrf.mxu0
        %v4519 = vadd.f32 %v4430, %v4518
        %4520 = vmatmul.bf16.gmra.mxu0 %v3313
        %v4521 = vpop.f32.mrf.mxu0
        %v4522 = vadd.f32 %v4433, %v4521
        %v4523 = vpop.f32.mrf.mxu0
        %v4524 = vadd.f32 %v4435, %v4523
        %4525 = vmatmul.bf16.gmra.mxu0 %v3316
        %v4526 = vpop.f32.mrf.mxu0
        %v4527 = vadd.f32 %v4438, %v4526
        %v4528 = vpop.f32.mrf.mxu0
        %v4529 = vadd.f32 %v4440, %v4528
        %4530 = vmatmul.bf16.gmra.mxu0 %v3319
        %v4531 = vpop.f32.mrf.mxu0
        %v4532 = vadd.f32 %v4443, %v4531
        %v4533 = vpop.f32.mrf.mxu0
        %v4534 = vadd.f32 %v4445, %v4533
        %4535 = vmatmul.bf16.gmra.mxu0 %v3322
        %v4536 = vpop.f32.mrf.mxu0
        %v4537 = vadd.f32 %v4448, %v4536
        %v4538 = vpop.f32.mrf.mxu0
        %v4539 = vadd.f32 %v4450, %v4538
        %4540 = vmatmul.bf16.gmra.mxu0 %v3325
        %v4541 = vpop.f32.mrf.mxu0
        %v4542 = vadd.f32 %v4453, %v4541
        %v4543 = vpop.f32.mrf.mxu0
        %v4544 = vadd.f32 %v4455, %v4543
        %4545 = vmatmul.bf16.gmra.mxu0 %v3328
        %v4546 = vpop.f32.mrf.mxu0
        %v4547 = vadd.f32 %v4458, %v4546
        %v4548 = vpop.f32.mrf.mxu0
        %v4549 = vadd.f32 %v4460, %v4548
        %4550 = vmatmul.bf16.gmra.mxu0 %v3331
        %v4551 = vpop.f32.mrf.mxu0
        %v4552 = vadd.f32 %v4463, %v4551
        %v4553 = vpop.f32.mrf.mxu0
        %v4554 = vadd.f32 %v4465, %v4553
        %4555 = vmatmul.bf16.gmra.mxu0 %v3334
        %v4556 = vpop.f32.mrf.mxu0
        %v4557 = vadd.f32 %v4468, %v4556
        %v4558 = vpop.f32.mrf.mxu0
        %v4559 = vadd.f32 %v4470, %v4558
        %4560 = vmatmul.bf16.gmra.mxu0 %v3337
        %v4561 = vpop.f32.mrf.mxu0
        %v4562 = vadd.f32 %v4473, %v4561
        %v4563 = vpop.f32.mrf.mxu0
        %v4564 = vadd.f32 %v4475, %v4563
        %4565 = vmatmul.bf16.gmra.mxu0 %v3334
        %v4566 = vpop.f32.mrf.mxu0
        %v4567 = vadd.f32 %v4478, %v4566
        %v4568 = vpop.f32.mrf.mxu0
        %v4569 = vadd.f32 %v4480, %v4568
        %4570 = vdwg.mxu0
        %v4572 = vperm.slane %v2809, 0
        %v4574 = vadd.f32 %v4492, %v4572
        %v4575 = vadd.f32 %v4494, %v4572
        %v4576 = vadd.f32 %v4497, %v4572
        %v4577 = vadd.f32 %v4499, %v4572
        %v4578 = vadd.f32 %v4502, %v4572
        %v4579 = vadd.f32 %v4504, %v4572
        %v4580 = vadd.f32 %v4507, %v4572
        %v4581 = vadd.f32 %v4509, %v4572
        %v4582 = vadd.f32 %v4512, %v4572
        %v4583 = vadd.f32 %v4514, %v4572
        %v4584 = vadd.f32 %v4517, %v4572
        %v4585 = vadd.f32 %v4519, %v4572
        %v4586 = vadd.f32 %v4522, %v4572
        %v4587 = vadd.f32 %v4524, %v4572
        %v4588 = vadd.f32 %v4527, %v4572
        %v4589 = vadd.f32 %v4529, %v4572
        %v4590 = vadd.f32 %v4532, %v4572
        %v4591 = vadd.f32 %v4534, %v4572
        %v4592 = vadd.f32 %v4537, %v4572
        %v4593 = vadd.f32 %v4539, %v4572
        %v4594 = vadd.f32 %v4542, %v4572
        %v4595 = vadd.f32 %v4544, %v4572
        %v4596 = vadd.f32 %v4547, %v4572
        %v4597 = vadd.f32 %v4549, %v4572
        %v4598 = vadd.f32 %v4552, %v4572
        %v4599 = vadd.f32 %v4554, %v4572
        %v4600 = vadd.f32 %v4557, %v4572
        %v4601 = vadd.f32 %v4559, %v4572
        %v4602 = vadd.f32 %v4562, %v4572
        %v4603 = vadd.f32 %v4564, %v4572
        %v4604 = vadd.f32 %v4567, %v4572
        %v4605 = vadd.f32 %v4569, %v4572
        %v4606 = vadd.f32 %v4574, %v4575
        %v4607 = vadd.f32 %v4606, %v4576
        %v4608 = vadd.f32 %v4607, %v4577
        %v4609 = vadd.f32 %v4608, %v4578
        %v4610 = vadd.f32 %v4609, %v4579
        %v4611 = vadd.f32 %v4610, %v4580
        %v4612 = vadd.f32 %v4611, %v4581
        %v4613 = vadd.f32 %v4612, %v4582
        %v4614 = vadd.f32 %v4613, %v4583
        %v4615 = vadd.f32 %v4614, %v4584
        %v4616 = vadd.f32 %v4615, %v4585
        %v4617 = vadd.f32 %v4616, %v4586
        %v4618 = vadd.f32 %v4617, %v4587
        %v4619 = vadd.f32 %v4618, %v4588
        %v4620 = vadd.f32 %v4619, %v4589
        %v4621 = vadd.f32 %v4620, %v4590
        %v4622 = vadd.f32 %v4621, %v4591
        %v4623 = vadd.f32 %v4622, %v4592
        %v4624 = vadd.f32 %v4623, %v4593
        %v4625 = vadd.f32 %v4624, %v4594
        %v4626 = vadd.f32 %v4625, %v4595
        %v4627 = vadd.f32 %v4626, %v4596
        %v4628 = vadd.f32 %v4627, %v4597
        %v4629 = vadd.f32 %v4628, %v4598
        %v4630 = vadd.f32 %v4629, %v4599
        %v4631 = vadd.f32 %v4630, %v4600
        %v4632 = vadd.f32 %v4631, %v4601
        %v4633 = vadd.f32 %v4632, %v4602
        %v4634 = vadd.f32 %v4633, %v4603
        %v4635 = vadd.f32 %v4634, %v4604
        %v4636 = vadd.f32 %v4635, %v4605
        %v4637 = vrot.slane %v4636, 4
        %v4638 = vadd.f32 %v4636, %v4637
        %v4639 = vrot.slane %v4638, 2
        %v4640 = vadd.f32 %v4638, %v4639
        %v4641 = vrot.slane %v4640, 1
        %v4642 = vadd.f32 %v4640, %v4641
        %v4643 = vmul.f32 %v4642, 0.00390625
        %v4644 = vld [vmem:[%s508] sm:$0xff]
        %v4645 = vld [vmem:[%s508 + $0x8] sm:$0xff]
        %v4646 = vld [vmem:[%s508 + $0x10] sm:$0xff]
        %v4647 = vld [vmem:[%s508 + $0x18] sm:$0xff]
        %v4648 = vld [vmem:[%s508 + $0x20] sm:$0xff]
        %v4649 = vld [vmem:[%s508 + $0x28] sm:$0xff]
        %v4650 = vld [vmem:[%s508 + $0x30] sm:$0xff]
        %v4651 = vld [vmem:[%s508 + $0x38] sm:$0xff]
        %v4652 = vld [vmem:[%s508 + $0x40] sm:$0xff]
        %v4653 = vld [vmem:[%s508 + $0x48] sm:$0xff]
        %v4654 = vld [vmem:[%s508 + $0x50] sm:$0xff]
        %v4655 = vld [vmem:[%s508 + $0x58] sm:$0xff]
        %v4656 = vld [vmem:[%s508 + $0x60] sm:$0xff]
        %v4657 = vld [vmem:[%s508 + $0x68] sm:$0xff]
        %v4658 = vld [vmem:[%s508 + $0x70] sm:$0xff]
        %v4659 = vld [vmem:[%s508 + $0x78] sm:$0xff]
        %v4660 = vld [vmem:[%s511] sm:$0x1]
        %4661 = vmatpush.msra.mxu0 %v4659
        %4662 = vmatpush.msra.mxu0 %v4658
        %4663 = vmatpush.msra.mxu0 %v4657
        %4664 = vmatpush.msra.mxu0 %v4656
        %4665 = vmatpush.msra.mxu0 %v4655
        %4666 = vmatpush.msra.mxu0 %v4654
        %4667 = vmatpush.msra.mxu0 %v4653
        %4668 = vmatpush.msra.mxu0 %v4652
        %4669 = vmatpush.msra.mxu0 %v4651
        %4670 = vmatpush.msra.mxu0 %v4650
        %4671 = vmatpush.msra.mxu0 %v4649
        %4672 = vmatpush.msra.mxu0 %v4648
        %4673 = vmatpush.msra.mxu0 %v4647
        %4674 = vmatpush.msra.mxu0 %v4646
        %4675 = vmatpush.msra.mxu0 %v4645
        %4676 = vmatpush.msra.mxu0 %v4644
        %4677 = vmatmul.f32.gmra.mxu0 %v4643
        %v4678 = vpop.f32.mrf.mxu0
        %v4679 = vadd.f32 %v4660, %v4678
        %4680 = vdwg.mxu0
        %vm4681 = vcmp.ge.f32.partialorder %v4679, 0.0
        %v4682 = vmul.f32 %v4679, 0.2
        %v4683 = vsel %vm4681, %v4679, %v4682
        %v4684 = vld [vmem:[%s516] sm:$0xff]
        %v4685 = vld [vmem:[%s516 + $0x8] sm:$0xff]
        %v4686 = vld [vmem:[%s516 + $0x10] sm:$0xff]
        %v4687 = vld [vmem:[%s516 + $0x18] sm:$0xff]
        %v4688 = vld [vmem:[%s519] sm:$0x1]
        %vm4689 = vcmask 261120
        %v4691 = vsel %vm4689, %v4683, 0
        %4693 = vmatpush.msra.mxu0 0.0
        %4694 = vmatpush.msra.mxu0 0.0
        %4695 = vmatpush.msra.mxu0 0.0
        %4696 = vmatpush.msra.mxu0 0.0
        %4697 = vmatpush.msra.mxu0 0.0
        %4698 = vmatpush.msra.mxu0 0.0
        %4699 = vmatpush.msra.mxu0 0.0
        %4700 = vmatpush.msra.mxu0 0.0
        %4701 = vmatpush.msra.mxu0 0.0
        %4702 = vmatpush.msra.mxu0 0.0
        %4703 = vmatpush.msra.mxu0 0.0
        %4704 = vmatpush.msra.mxu0 0.0
        %4705 = vmatpush.msra.mxu0 %v4687
        %4706 = vmatpush.msra.mxu0 %v4686
        %4707 = vmatpush.msra.mxu0 %v4685
        %4708 = vmatpush.msra.mxu0 %v4684
        %4709 = vmatmul.f32.gmra.mxu0 %v4691
        %v4710 = vpop.f32.mrf.mxu0
        %v4711 = vadd.f32 %v4688, %v4710
        %4712 = vdwg.mxu0
        %v4713 = vxor.u32 %v4711, 2147483648
        %v4714 = vmul.f32 %v4713, 1.442695
        %v4715 = vpow.pop %v4714
        %v4716 = vadd.f32 %v4715, 1.0
        %v4717 = vrcp.pop %v4716
        %v4718 = vmul.f32 %v4716, %v4717
        %v4719 = vsub.f32 1.0, %v4718
        %v4720 = vmul.f32 %v4717, %v4719
        %v4721 = vadd.f32 %v4717, %v4720
        %vm4722 = vweird.f32 %v4716
        %vm4723 = vweird.f32 %v4717
        %vm4724 = vmor %vm4722, %vm4723
        %v4725 = vsel %vm4724, %v4717, %v4721
        %v4726 = vand.u32 2147483647, %v4716
        %vm4727 = vcmp.eq.f32.partialorder %v4726, 8.507059e+37
        %v4728 = vand.u32 %v4716, 2147483648
        %v4729 = vor.u32 1.1754944e-38, %v4728
        %v4730 = vsel %vm4727, %v4729, %v4725
        %v4731 = vmul.f32 1.0, %v4730
        %v4732 = vperm.slane %v4731, 0
        %v4733 = vmul.f32 %v4574, %v4732
        %v4734 = vmul.f32 %v4575, %v4732
        %v4735 = vmul.f32 %v4576, %v4732
        %v4736 = vmul.f32 %v4577, %v4732
        %v4737 = vmul.f32 %v4578, %v4732
        %v4738 = vmul.f32 %v4579, %v4732
        %v4739 = vmul.f32 %v4580, %v4732
        %v4740 = vmul.f32 %v4581, %v4732
        %v4741 = vmul.f32 %v4582, %v4732
        %v4742 = vmul.f32 %v4583, %v4732
        %v4743 = vmul.f32 %v4584, %v4732
        %v4744 = vmul.f32 %v4585, %v4732
        %v4745 = vmul.f32 %v4586, %v4732
        %v4746 = vmul.f32 %v4587, %v4732
        %v4747 = vmul.f32 %v4588, %v4732
        %v4748 = vmul.f32 %v4589, %v4732
        %v4749 = vmul.f32 %v4590, %v4732
        %v4750 = vmul.f32 %v4591, %v4732
        %v4751 = vmul.f32 %v4592, %v4732
        %v4752 = vmul.f32 %v4593, %v4732
        %v4753 = vmul.f32 %v4594, %v4732
        %v4754 = vmul.f32 %v4595, %v4732
        %v4755 = vmul.f32 %v4596, %v4732
        %v4756 = vmul.f32 %v4597, %v4732
        %v4757 = vmul.f32 %v4598, %v4732
        %v4758 = vmul.f32 %v4599, %v4732
        %v4759 = vmul.f32 %v4600, %v4732
        %v4760 = vmul.f32 %v4601, %v4732
        %v4761 = vmul.f32 %v4602, %v4732
        %v4762 = vmul.f32 %v4603, %v4732
        %v4763 = vmul.f32 %v4604, %v4732
        %v4764 = vmul.f32 %v4605, %v4732
        %v4765 = vadd.f32 %v4733, %v593
        %v4766 = vadd.f32 %v4734, %v594
        %v4767 = vadd.f32 %v4735, %v595
        %v4768 = vadd.f32 %v4736, %v596
        %v4769 = vadd.f32 %v4737, %v597
        %v4770 = vadd.f32 %v4738, %v598
        %v4771 = vadd.f32 %v4739, %v599
        %v4772 = vadd.f32 %v4740, %v600
        %v4773 = vadd.f32 %v4741, %v601
        %v4774 = vadd.f32 %v4742, %v602
        %v4775 = vadd.f32 %v4743, %v603
        %v4776 = vadd.f32 %v4744, %v604
        %v4777 = vadd.f32 %v4745, %v605
        %v4778 = vadd.f32 %v4746, %v606
        %v4779 = vadd.f32 %v4747, %v607
        %v4780 = vadd.f32 %v4748, %v608
        %v4781 = vadd.f32 %v4749, %v609
        %v4782 = vadd.f32 %v4750, %v610
        %v4783 = vadd.f32 %v4751, %v611
        %v4784 = vadd.f32 %v4752, %v612
        %v4785 = vadd.f32 %v4753, %v613
        %v4786 = vadd.f32 %v4754, %v614
        %v4787 = vadd.f32 %v4755, %v615
        %v4788 = vadd.f32 %v4756, %v616
        %v4789 = vadd.f32 %v4757, %v617
        %v4790 = vadd.f32 %v4758, %v618
        %v4791 = vadd.f32 %v4759, %v619
        %v4792 = vadd.f32 %v4760, %v620
        %v4793 = vadd.f32 %v4761, %v621
        %v4794 = vadd.f32 %v4762, %v622
        %v4795 = vadd.f32 %v4763, %v623
        %v4796 = vadd.f32 %v4764, %v624
        %vm4797 = vcmp.ge.f32.partialorder %v4765, 0.0
        %vm4798 = vcmp.ge.f32.partialorder %v4766, 0.0
        %vm4799 = vcmp.ge.f32.partialorder %v4767, 0.0
        %vm4800 = vcmp.ge.f32.partialorder %v4768, 0.0
        %vm4801 = vcmp.ge.f32.partialorder %v4769, 0.0
        %vm4802 = vcmp.ge.f32.partialorder %v4770, 0.0
        %vm4803 = vcmp.ge.f32.partialorder %v4771, 0.0
        %vm4804 = vcmp.ge.f32.partialorder %v4772, 0.0
        %vm4805 = vcmp.ge.f32.partialorder %v4773, 0.0
        %vm4806 = vcmp.ge.f32.partialorder %v4774, 0.0
        %vm4807 = vcmp.ge.f32.partialorder %v4775, 0.0
        %vm4808 = vcmp.ge.f32.partialorder %v4776, 0.0
        %vm4809 = vcmp.ge.f32.partialorder %v4777, 0.0
        %vm4810 = vcmp.ge.f32.partialorder %v4778, 0.0
        %vm4811 = vcmp.ge.f32.partialorder %v4779, 0.0
        %vm4812 = vcmp.ge.f32.partialorder %v4780, 0.0
        %vm4813 = vcmp.ge.f32.partialorder %v4781, 0.0
        %vm4814 = vcmp.ge.f32.partialorder %v4782, 0.0
        %vm4815 = vcmp.ge.f32.partialorder %v4783, 0.0
        %vm4816 = vcmp.ge.f32.partialorder %v4784, 0.0
        %vm4817 = vcmp.ge.f32.partialorder %v4785, 0.0
        %vm4818 = vcmp.ge.f32.partialorder %v4786, 0.0
        %vm4819 = vcmp.ge.f32.partialorder %v4787, 0.0
        %vm4820 = vcmp.ge.f32.partialorder %v4788, 0.0
        %vm4821 = vcmp.ge.f32.partialorder %v4789, 0.0
        %vm4822 = vcmp.ge.f32.partialorder %v4790, 0.0
        %vm4823 = vcmp.ge.f32.partialorder %v4791, 0.0
        %vm4824 = vcmp.ge.f32.partialorder %v4792, 0.0
        %vm4825 = vcmp.ge.f32.partialorder %v4793, 0.0
        %vm4826 = vcmp.ge.f32.partialorder %v4794, 0.0
        %vm4827 = vcmp.ge.f32.partialorder %v4795, 0.0
        %vm4828 = vcmp.ge.f32.partialorder %v4796, 0.0
        %v4829 = vmul.f32 %v4765, 0.2
        %v4830 = vmul.f32 %v4766, 0.2
        %v4831 = vmul.f32 %v4767, 0.2
        %v4832 = vmul.f32 %v4768, 0.2
        %v4833 = vmul.f32 %v4769, 0.2
        %v4834 = vmul.f32 %v4770, 0.2
        %v4835 = vmul.f32 %v4771, 0.2
        %v4836 = vmul.f32 %v4772, 0.2
        %v4837 = vmul.f32 %v4773, 0.2
        %v4838 = vmul.f32 %v4774, 0.2
        %v4839 = vmul.f32 %v4775, 0.2
        %v4840 = vmul.f32 %v4776, 0.2
        %v4841 = vmul.f32 %v4777, 0.2
        %v4842 = vmul.f32 %v4778, 0.2
        %v4843 = vmul.f32 %v4779, 0.2
        %v4844 = vmul.f32 %v4780, 0.2
        %v4845 = vmul.f32 %v4781, 0.2
        %v4846 = vmul.f32 %v4782, 0.2
        %v4847 = vmul.f32 %v4783, 0.2
        %v4848 = vmul.f32 %v4784, 0.2
        %v4849 = vmul.f32 %v4785, 0.2
        %v4850 = vmul.f32 %v4786, 0.2
        %v4851 = vmul.f32 %v4787, 0.2
        %v4852 = vmul.f32 %v4788, 0.2
        %v4853 = vmul.f32 %v4789, 0.2
        %v4854 = vmul.f32 %v4790, 0.2
        %v4855 = vmul.f32 %v4791, 0.2
        %v4856 = vmul.f32 %v4792, 0.2
        %v4857 = vmul.f32 %v4793, 0.2
        %v4858 = vmul.f32 %v4794, 0.2
        %v4859 = vmul.f32 %v4795, 0.2
        %v4860 = vmul.f32 %v4796, 0.2
        %v4861 = vsel %vm4797, %v4765, %v4829
        %v4862 = vsel %vm4798, %v4766, %v4830
        %v4863 = vsel %vm4799, %v4767, %v4831
        %v4864 = vsel %vm4800, %v4768, %v4832
        %v4865 = vsel %vm4801, %v4769, %v4833
        %v4866 = vsel %vm4802, %v4770, %v4834
        %v4867 = vsel %vm4803, %v4771, %v4835
        %v4868 = vsel %vm4804, %v4772, %v4836
        %v4869 = vsel %vm4805, %v4773, %v4837
        %v4870 = vsel %vm4806, %v4774, %v4838
        %v4871 = vsel %vm4807, %v4775, %v4839
        %v4872 = vsel %vm4808, %v4776, %v4840
        %v4873 = vsel %vm4809, %v4777, %v4841
        %v4874 = vsel %vm4810, %v4778, %v4842
        %v4875 = vsel %vm4811, %v4779, %v4843
        %v4876 = vsel %vm4812, %v4780, %v4844
        %v4877 = vsel %vm4813, %v4781, %v4845
        %v4878 = vsel %vm4814, %v4782, %v4846
        %v4879 = vsel %vm4815, %v4783, %v4847
        %v4880 = vsel %vm4816, %v4784, %v4848
        %v4881 = vsel %vm4817, %v4785, %v4849
        %v4882 = vsel %vm4818, %v4786, %v4850
        %v4883 = vsel %vm4819, %v4787, %v4851
        %v4884 = vsel %vm4820, %v4788, %v4852
        %v4885 = vsel %vm4821, %v4789, %v4853
        %v4886 = vsel %vm4822, %v4790, %v4854
        %v4887 = vsel %vm4823, %v4791, %v4855
        %v4888 = vsel %vm4824, %v4792, %v4856
        %v4889 = vsel %vm4825, %v4793, %v4857
        %v4890 = vsel %vm4826, %v4794, %v4858
        %v4891 = vsel %vm4827, %v4795, %v4859
        %v4892 = vsel %vm4828, %v4796, %v4860
        %4893 = vst [vmem:[#allocation2] sm:$0xff] %v4861
        %4894 = vst [vmem:[#allocation2 + $0x8] sm:$0xff] %v4862
        %4895 = vst [vmem:[#allocation2 + $0x10] sm:$0xff] %v4863
        %4896 = vst [vmem:[#allocation2 + $0x18] sm:$0xff] %v4864
        %4897 = vst [vmem:[#allocation2 + $0x20] sm:$0xff] %v4865
        %4898 = vst [vmem:[#allocation2 + $0x28] sm:$0xff] %v4866
        %4899 = vst [vmem:[#allocation2 + $0x30] sm:$0xff] %v4867
        %4900 = vst [vmem:[#allocation2 + $0x38] sm:$0xff] %v4868
        %4901 = vst [vmem:[#allocation2 + $0x40] sm:$0xff] %v4869
        %4902 = vst [vmem:[#allocation2 + $0x48] sm:$0xff] %v4870
        %4903 = vst [vmem:[#allocation2 + $0x50] sm:$0xff] %v4871
        %4904 = vst [vmem:[#allocation2 + $0x58] sm:$0xff] %v4872
        %4905 = vst [vmem:[#allocation2 + $0x60] sm:$0xff] %v4873
        %4906 = vst [vmem:[#allocation2 + $0x68] sm:$0xff] %v4874
        %4907 = vst [vmem:[#allocation2 + $0x70] sm:$0xff] %v4875
        %4908 = vst [vmem:[#allocation2 + $0x78] sm:$0xff] %v4876
        %4909 = vst [vmem:[#allocation2 + $0x80] sm:$0xff] %v4877
        %4910 = vst [vmem:[#allocation2 + $0x88] sm:$0xff] %v4878
        %4911 = vst [vmem:[#allocation2 + $0x90] sm:$0xff] %v4879
        %4912 = vst [vmem:[#allocation2 + $0x98] sm:$0xff] %v4880
        %4913 = vst [vmem:[#allocation2 + $0xa0] sm:$0xff] %v4881
        %4914 = vst [vmem:[#allocation2 + $0xa8] sm:$0xff] %v4882
        %4915 = vst [vmem:[#allocation2 + $0xb0] sm:$0xff] %v4883
        %4916 = vst [vmem:[#allocation2 + $0xb8] sm:$0xff] %v4884
        %4917 = vst [vmem:[#allocation2 + $0xc0] sm:$0xff] %v4885
        %4918 = vst [vmem:[#allocation2 + $0xc8] sm:$0xff] %v4886
        %4919 = vst [vmem:[#allocation2 + $0xd0] sm:$0xff] %v4887
        %4920 = vst [vmem:[#allocation2 + $0xd8] sm:$0xff] %v4888
        %4921 = vst [vmem:[#allocation2 + $0xe0] sm:$0xff] %v4889
        %4922 = vst [vmem:[#allocation2 + $0xe8] sm:$0xff] %v4890
        %4923 = vst [vmem:[#allocation2 + $0xf0] sm:$0xff] %v4891
        %4924 = vst [vmem:[#allocation2 + $0xf8] sm:$0xff] %v4892
        %p4925 = scmp.eq.s32.totalorder %s31, 1
        // Predicated region
        $region69: #{rbse_layer.1} parent=55 // pred_check
          %p4926 = pneg %p4925
        $region70: #{rbse_layer.1} parent=55 // pred_check_branch
          %4928 = sbr.rel (%p4926) target = $region72
        $region71: #{rbse_layer.1} parent=55 // pred_region
          %4929 = vst [vmem:[%s524] sm:$0xff] %v4861
          %4930 = vst [vmem:[%s524 + $0x8] sm:$0xff] %v4862
          %4931 = vst [vmem:[%s524 + $0x10] sm:$0xff] %v4863
          %4932 = vst [vmem:[%s524 + $0x18] sm:$0xff] %v4864
          %4933 = vst [vmem:[%s524 + $0x20] sm:$0xff] %v4865
          %4934 = vst [vmem:[%s524 + $0x28] sm:$0xff] %v4866
          %4935 = vst [vmem:[%s524 + $0x30] sm:$0xff] %v4867
          %4936 = vst [vmem:[%s524 + $0x38] sm:$0xff] %v4868
          %4937 = vst [vmem:[%s524 + $0x40] sm:$0xff] %v4869
          %4938 = vst [vmem:[%s524 + $0x48] sm:$0xff] %v4870
          %4939 = vst [vmem:[%s524 + $0x50] sm:$0xff] %v4871
          %4940 = vst [vmem:[%s524 + $0x58] sm:$0xff] %v4872
          %4941 = vst [vmem:[%s524 + $0x60] sm:$0xff] %v4873
          %4942 = vst [vmem:[%s524 + $0x68] sm:$0xff] %v4874
          %4943 = vst [vmem:[%s524 + $0x70] sm:$0xff] %v4875
          %4944 = vst [vmem:[%s524 + $0x78] sm:$0xff] %v4876
          %4945 = vst [vmem:[%s524 + $0x80] sm:$0xff] %v4877
          %4946 = vst [vmem:[%s524 + $0x88] sm:$0xff] %v4878
          %4947 = vst [vmem:[%s524 + $0x90] sm:$0xff] %v4879
          %4948 = vst [vmem:[%s524 + $0x98] sm:$0xff] %v4880
          %4949 = vst [vmem:[%s524 + $0xa0] sm:$0xff] %v4881
          %4950 = vst [vmem:[%s524 + $0xa8] sm:$0xff] %v4882
          %4951 = vst [vmem:[%s524 + $0xb0] sm:$0xff] %v4883
          %4952 = vst [vmem:[%s524 + $0xb8] sm:$0xff] %v4884
          %4953 = vst [vmem:[%s524 + $0xc0] sm:$0xff] %v4885
          %4954 = vst [vmem:[%s524 + $0xc8] sm:$0xff] %v4886
          %4955 = vst [vmem:[%s524 + $0xd0] sm:$0xff] %v4887
          %4956 = vst [vmem:[%s524 + $0xd8] sm:$0xff] %v4888
          %4957 = vst [vmem:[%s524 + $0xe0] sm:$0xff] %v4889
          %4958 = vst [vmem:[%s524 + $0xe8] sm:$0xff] %v4890
          %4959 = vst [vmem:[%s524 + $0xf0] sm:$0xff] %v4891
          %4960 = vst [vmem:[%s524 + $0xf8] sm:$0xff] %v4892
        $region72: #{rbse_layer.1} parent=55 // pred_fallthru
          _
        %p4961 = scmp.lt.s32.totalorder %s30, 1
        %s4962 = scalar_select %p4961, %s30, 1
        %s4963 = smul.addr %s4962, 32
        %s4964 = smul.addr %s4963, 8
        %s4965 = scalar_lea.vmem %s9, %s4964
        // Predicated region
        $region73: #{rbse_layer.1} parent=55 // pred_check
          %p4966 = pneg %p290
        $region74: #{rbse_layer.1} parent=55 // pred_check_branch
          %4968 = sbr.rel (%p4966) target = $region76
        $region75: #{rbse_layer.1} parent=55 // pred_region
          _
        $region76: #{rbse_layer.1} parent=55 // pred_fallthru
          _
      $region56: #{rbse_layer.1} parent=5 // pred_fallthru
        _
      %p4969 = scmp.le.s32.totalorder 2, %s21
      // Predicated region
      $region77: #{rbse_layer.1} parent=5 // pred_check
        %p4970 = pneg %p4969
      $region78: #{rbse_layer.1} parent=5 // pred_check_branch
        %4972 = sbr.rel (%p4970) target = $region80
      $region79: #{rbse_layer.1} parent=5 // pred_region
        %s4973 = ssub.s32 %s21, 2
        // Predicated region
        $region81: #{rbse_layer.1} parent=79 // pred_check
          %p4974 = pneg %p296
        $region82: #{rbse_layer.1} parent=79 // pred_check_branch
          %4976 = sbr.rel (%p4974) target = $region84
        $region83: #{rbse_layer.1} parent=79 // pred_region
          %p4977 = scmp.lt.s32.totalorder %s32, 1
          %s4978 = scalar_select %p4977, %s32, 1
          %s4979 = smul.addr %s4978, 32
          %s4980 = smul.addr %s4979, 8
          %s4981 = scalar_lea.vmem %s9, %s4980
        $region84: #{rbse_layer.1} parent=79 // pred_fallthru
          _
      $region80: #{rbse_layer.1} parent=5 // pred_fallthru
        _
    $region6: #{rbse_layer.1} parent=1 // loop_footer
      %s25 = sadd.s32 1, %s21
    $region7: #{rbse_layer.1} parent=1 // loop_footer_branch
      %20 = sbr.rel target = $region3
    $region8: #{rbse_layer.1} parent=1 // loop_exit
      _
    %4982 = vsyncpa [#allocation4], 1
    %s4983 = scalar_lea.sflag [#allocation4], 1
    %4984 = vsyncpa %s4983, 1
    %4985 = vsyncpa [#allocation6], 1
    %s4986 = scalar_lea.sflag [#allocation6], 1
    %4987 = vsyncpa %s4986, 1

</llo_original>
